<compile_context>
chip_gen: v5e
topology: v5e:2x2
jax: 0.10.0
libtpu: 0.0.40
codegen_flags: <defaults>
</compile_context>

<pallas_src>
import jax
import jax.numpy as jnp
import numpy as np
from jax.experimental import pallas as pl
from jax.experimental.pallas import tpu as pltpu

EPS = 1e-5
LANE = 128  # head output dims are zero-padded up to the TPU lane width


def _vmem():
    # whole-array-in-VMEM spec (gridless; every tensor here is tiny)
    return pl.BlockSpec(memory_space=pltpu.MemorySpace.VMEM)


# ---------------------------------------------------------------- kernel -----

def _make_fused_kernel(T, Bp, nL, HL, nG, HG):
    """Fused eval-mode forward.  Ref order:
       x2d, wih0, whh0, b0,             (LSTM layer 0: hoisted x-path)
       [wx, wh, b] * (nL-1),            (upper LSTM layers, per-step)
       [wx, wh, b] * nG,                (GRU layers, [r|z|n_x|n_h] layout)
       w1, b1, w2, b2, out
    """
    GL, GG = 4 * HL, 4 * HG
    f32 = jnp.float32

    def kernel(*refs):
        idx = 0
        x_ref = refs[idx]; idx += 1
        wih0_ref, whh0_ref, b0_ref = refs[idx:idx + 3]; idx += 3
        lhi = [refs[idx + 3 * i: idx + 3 * i + 3] for i in range(nL - 1)]
        idx += 3 * (nL - 1)
        gru = [refs[idx + 3 * i: idx + 3 * i + 3] for i in range(nG)]
        idx += 3 * nG
        w1_ref, b1_ref, w2_ref, b2_ref = refs[idx:idx + 4]; idx += 4
        o_ref = refs[idx]

        def dot(a, b):
            return jnp.dot(a, b, preferred_element_type=f32)

        def sg(v):
            # sigmoid via tanh: EUP slot, no divide, no exp overflow
            return 0.5 * jnp.tanh(0.5 * v) + 0.5

        # Hoisted LSTM-layer-0 x-path over ALL timesteps
        # (input_bn + b_ih + b_hh already folded into wih0/b0).
        gx0 = dot(x_ref[...], wih0_ref[...]) + b0_ref[...]        # [T*Bp, 4*HL]

        # Hoist bias broadcasts out of the unrolled recurrence (no CSE otherwise).
        bl = [jnp.broadcast_to(r[2][...], (Bp, GL)) for r in lhi]
        bg = [jnp.broadcast_to(r[2][...], (Bp, GG)) for r in gru]

        hL = [jnp.zeros((Bp, HL), f32) for _ in range(nL)]
        cL = [jnp.zeros((Bp, HL), f32) for _ in range(nL)]
        hG = [jnp.zeros((Bp, HG), f32) for _ in range(nG)]

        def lstm_update(g, h, c):
            # whole-vreg nonlinearities over the full [Bp, 4*HL] gate block
            s = sg(g)
            th = jnp.tanh(g)
            i_g = s[:, 0 * HL:1 * HL]
            f_g = s[:, 1 * HL:2 * HL]
            c_g = th[:, 2 * HL:3 * HL]
            o_g = s[:, 3 * HL:4 * HL]
            c = f_g * c + i_g * c_g
            h = o_g * jnp.tanh(c)
            return h, c

        def gru_update(pre, h):
            # pre blocks: [r | z | n_x | n_h]; b_hn lives only in the n_h block,
            # so r * pre_nh reproduces PyTorch's r*(W_hn h + b_hn) exactly.
            s = sg(pre)
            r = s[:, 0 * HG:1 * HG]
            z = s[:, 1 * HG:2 * HG]
            n = jnp.tanh(pre[:, 2 * HG:3 * HG] + r * pre[:, 3 * HG:4 * HG])
            return (1.0 - z) * n + z * h

        # Static unroll over time, layers chained per step.  No stores/reloads
        # between layers, so the dependency DAG is a wavefront (critical path
        # ~T + nL + nG - 1 small matmuls instead of T*(nL+nG)) that the
        # scheduler can overlap across layers.
        for t in range(T):
            # LSTM layer 0: hoisted x-path row + per-step h-path matmul
            g = gx0[t * Bp:(t + 1) * Bp, :] + dot(hL[0], whh0_ref[...])
            hL[0], cL[0] = lstm_update(g, hL[0], cL[0])
            below = hL[0]

            # upper LSTM layers: two independent K=HL matmuls per step
            for l in range(1, nL):
                wx_r, wh_r, _ = lhi[l - 1]
                g = dot(below, wx_r[...]) + dot(hL[l], wh_r[...]) + bl[l - 1]
                hL[l], cL[l] = lstm_update(g, hL[l], cL[l])
                below = hL[l]

            # GRU layers (mid_bn folded into layer 0's x-path at prepare time)
            for l in range(nG):
                wx_r, wh_r, _ = gru[l]
                pre = dot(below, wx_r[...]) + dot(hG[l], wh_r[...]) + bg[l]
                hG[l] = gru_update(pre, hG[l])
                below = hG[l]
            # TODO(synk): inter-layer / mid dropout (p=0.2) is identity in eval mode.

        # Head: bn_final folded into fc1; fc1/fc2 outputs zero-padded to 128
        # lanes so the matmuls and the final store are whole-vreg / unmasked.
        h1 = jnp.maximum(dot(hG[nG - 1], w1_ref[...]) + b1_ref[...], 0.0)
        o_ref[...] = (dot(h1, w2_ref[...]) + b2_ref[...]).astype(o_ref.dtype)

    return kernel


# --------------------------------------------------------- param folding -----

def prepare_params(params, eps=EPS):
    """Fold eval-mode BatchNorms into adjacent matmuls, pre-transpose and
    lane-pad weights, pre-combine biases."""

    def bn_affine(bn):
        s = bn['gamma'] * jax.lax.rsqrt(bn['var'] + eps)
        t = bn['beta'] - bn['mean'] * s
        return s, t

    s_in, t_in = bn_affine(params['input_bn'])
    s_mid, t_mid = bn_affine(params['mid_bn'])
    s_fin, t_fin = bn_affine(params['bn_final'])

    # ---- LSTM layer 0 (hoistable x-path; input_bn folded in) ----------------
    p0 = params['lstm'][0]
    wih0 = jnp.transpose(p0['w_ih'])                       # [F, 4H]
    b0 = p0['b_ih'] + p0['b_hh'] + t_in @ wih0
    wih0 = s_in[:, None] * wih0
    whh0 = jnp.transpose(p0['w_hh'])                       # [H, 4H]

    # ---- upper LSTM layers (per-step x- and h-path, biases pre-combined) ----
    lstm_hi = []
    for p in params['lstm'][1:]:
        lstm_hi.append(dict(wx=jnp.transpose(p['w_ih']),   # [H, 4H]
                            wh=jnp.transpose(p['w_hh']),   # [H, 4H]
                            b=(p['b_ih'] + p['b_hh']).reshape(1, -1)))

    # ---- GRU layers: lane-padded 4-block layout [r | z | n_x | n_h] ----------
    gru = []
    for l, p in enumerate(params['gru']):
        w_ir, w_iz, w_in = jnp.split(p['w_ih'], 3, axis=0)      # [H, Din] each
        w_hr, w_hz, w_hn = jnp.split(p['w_hh'], 3, axis=0)      # [H, H] each
        b_ir, b_iz, b_in = jnp.split(p['b_ih'], 3)
        b_hr, b_hz, b_hn = jnp.split(p['b_hh'], 3)
        # x-path weight: [W_ir^T | W_iz^T | W_in^T | 0]            -> [Din, 4H]
        wx = jnp.concatenate(
            [w_ir.T, w_iz.T, w_in.T, jnp.zeros_like(w_in.T)], axis=1)
        # h-path weight: [W_hr^T | W_hz^T | 0 | W_hn^T]            -> [H, 4H]
        wh = jnp.concatenate(
            [w_hr.T, w_hz.T, jnp.zeros_like(w_hn.T), w_hn.T], axis=1)
        # r/z hidden biases folded into the single per-step bias; b_hn stays in
        # the n_h block (it must be multiplied by r).
        b = jnp.concatenate([b_ir + b_hr, b_iz + b_hz, b_in, b_hn])
        if l == 0:                                  # fold mid_bn into the x-path
            b = b + t_mid @ wx
            wx = s_mid[:, None] * wx
        gru.append(dict(wx=wx, wh=wh, b=b.reshape(1, -1)))

    # ---- head: fold bn_final into fc1, zero-pad output lanes to 128 ----------
    w1 = jnp.transpose(params['fc1_w'])                    # [HG, Hmid]
    b1 = params['fc1_b'] + t_fin @ w1
    w1 = s_fin[:, None] * w1
    HGd, Hmid = w1.shape
    O = params['fc2_w'].shape[0]
    w1p = jnp.zeros((HGd, LANE), jnp.float32).at[:, :Hmid].set(w1)
    b1p = jnp.zeros((1, LANE), jnp.float32).at[0, :Hmid].set(b1)
    w2 = jnp.transpose(params['fc2_w'])                    # [Hmid, O]
    w2p = jnp.zeros((LANE, LANE), jnp.float32).at[:Hmid, :O].set(w2)
    b2p = jnp.zeros((1, LANE), jnp.float32).at[0, :O].set(params['fc2_b'])

    return dict(wih0=wih0, whh0=whh0, b0=b0.reshape(1, -1),
                lstm_hi=lstm_hi, gru=gru,
                w1=w1p, b1=b1p, w2=w2p, b2=b2p, out_dim=O)


# --------------------------------------------------------------- wrapper -----

def hybrid_forward_pallas(x, prep):
    # x: [B, T, F]  (PyTorch batch_first convention)
    B, T, F = x.shape
    HL = prep['whh0'].shape[0]
    HG = prep['gru'][0]['wh'].shape[0]
    nL = 1 + len(prep['lstm_hi'])
    nG = len(prep['gru'])
    OP = prep['w2'].shape[1]
    Bp = ((B + 7) // 8) * 8                          # pad batch to sublane tile
    # TODO(synk): for large batches, tile Bp over a ("parallel",) grid axis to
    # use both v7x TensorCores and fill the MXU M dimension.

    xt = jnp.transpose(x, (1, 0, 2))                 # time-major [T, B, F]
    xt = jnp.pad(xt, ((0, 0), (0, Bp - B), (0, 0)))
    x2d = xt.reshape(T * Bp, F)

    inputs = [x2d, prep['wih0'], prep['whh0'], prep['b0']]
    for p in prep['lstm_hi']:
        inputs += [p['wx'], p['wh'], p['b']]
    for p in prep['gru']:
        inputs += [p['wx'], p['wh'], p['b']]
    inputs += [prep['w1'], prep['b1'], prep['w2'], prep['b2']]

    out = pl.pallas_call(
        _make_fused_kernel(T, Bp, nL, HL, nG, HG),
        out_shape=jax.ShapeDtypeStruct((Bp, OP), jnp.float32),
        in_specs=[_vmem()] * len(inputs),
        out_specs=_vmem(),
    )(*inputs)
    return out[:B, :prep['out_dim']]


# ----------------------------------------------------- pure-JAX reference ----

def _sigmoid(x):
    return 1.0 / (1.0 + jnp.exp(-x))


def _bn_ref(x, bn):
    return (x - bn['mean']) * jax.lax.rsqrt(bn['var'] + EPS) * bn['gamma'] + bn['beta']


def _lstm_ref(x_tbd, p):
    H = p['w_hh'].shape[1]
    B = x_tbd.shape[1]

    def step(carry, xt):
        h, c = carry
        gates = xt @ p['w_ih'].T + h @ p['w_hh'].T + p['b_ih'] + p['b_hh']
        i, f, g, o = jnp.split(gates, 4, axis=-1)
        i, f, g, o = _sigmoid(i), _sigmoid(f), jnp.tanh(g), _sigmoid(o)
        c = f * c + i * g
        h = o * jnp.tanh(c)
        return (h, c), h

    init = (jnp.zeros((B, H)), jnp.zeros((B, H)))
    _, ys = jax.lax.scan(step, init, x_tbd)
    return ys


def _gru_ref(x_tbd, p):
    H = p['w_hh'].shape[1]
    B = x_tbd.shape[1]

    def step(h, xt):
        gi = xt @ p['w_ih'].T + p['b_ih']
        gh = h @ p['w_hh'].T + p['b_hh']
        r = _sigmoid(gi[:, :H] + gh[:, :H])
        z = _sigmoid(gi[:, H:2 * H] + gh[:, H:2 * H])
        n = jnp.tanh(gi[:, 2 * H:] + r * gh[:, 2 * H:])
        h = (1.0 - z) * n + z * h
        return h, h

    _, ys = jax.lax.scan(step, jnp.zeros((B, H)), x_tbd)
    return ys


def hybrid_forward_ref(x, params):
    B, T, F = x.shape
    x = _bn_ref(x.reshape(B * T, F), params['input_bn']).reshape(B, T, F)
    h = jnp.transpose(x, (1, 0, 2))
    for p in params['lstm']:
        h = _lstm_ref(h, p)
    lstm_out = jnp.transpose(h, (1, 0, 2))
    HL = lstm_out.shape[-1]
    lstm_out = _bn_ref(lstm_out.reshape(B * T, HL), params['mid_bn']).reshape(B, T, HL)
    g = jnp.transpose(lstm_out, (1, 0, 2))
    for p in params['gru']:
        g = _gru_ref(g, p)
    gru_out = jnp.transpose(g, (1, 0, 2))
    final = _bn_ref(gru_out[:, -1, :], params['bn_final'])
    h1 = jnp.maximum(final @ params['fc1_w'].T + params['fc1_b'], 0.0)
    return h1 @ params['fc2_w'].T + params['fc2_b']


# ---------------------------------------------------------------- params -----

def init_params(key, F, HL, HG, num_layers, O):
    keys = iter(jax.random.split(key, 64))

    def unif(shape, k):
        return jax.random.uniform(next(keys), shape, jnp.float32, -k, k)

    def bn(C):
        return dict(gamma=jax.random.uniform(next(keys), (C,), jnp.float32, 0.5, 1.5),
                    beta=unif((C,), 0.5),
                    mean=unif((C,), 0.5),
                    var=jax.random.uniform(next(keys), (C,), jnp.float32, 0.5, 1.5))

    params = {'input_bn': bn(F), 'mid_bn': bn(HL), 'bn_final': bn(HG)}

    lstm = []
    kL = 1.0 / np.sqrt(HL)
    for l in range(num_layers):
        din = F if l == 0 else HL
        lstm.append(dict(w_ih=unif((4 * HL, din), kL), w_hh=unif((4 * HL, HL), kL),
                         b_ih=unif((4 * HL,), kL), b_hh=unif((4 * HL,), kL)))
    params['lstm'] = lstm

    gru = []
    kG = 1.0 / np.sqrt(HG)
    for l in range(num_layers):
        din = HL if l == 0 else HG
        gru.append(dict(w_ih=unif((3 * HG, din), kG), w_hh=unif((3 * HG, HG), kG),
                        b_ih=unif((3 * HG,), kG), b_hh=unif((3 * HG,), kG)))
    params['gru'] = gru

    k1 = 1.0 / np.sqrt(HG)
    params['fc1_w'] = unif((HG // 2, HG), k1)
    params['fc1_b'] = unif((HG // 2,), k1)
    k2 = 1.0 / np.sqrt(HG // 2)
    params['fc2_w'] = unif((O, HG // 2), k2)
    params['fc2_b'] = unif((O,), k2)
    return params


# ------------------------------------------------------------------ main -----

if __name__ == "__main__":
    B, T, F = 2, 8, 8            # batch, seq_len, input_size
    HL, HG = 32, 32              # hidden_size_lstm, hidden_size_gru
    NUM_LAYERS, O = 2, 1         # num_layers, output_size

    key = jax.random.PRNGKey(0)
    kx, kp = jax.random.split(key)
    x = jax.random.normal(kx, (B, T, F), jnp.float32)
    params = init_params(kp, F, HL, HG, NUM_LAYERS, O)

    prep = prepare_params(params)                     # fold BN / pad lanes once

    out = jax.jit(lambda xx: hybrid_forward_pallas(xx, prep))(x)
    out = jax.block_until_ready(out)

    ref = hybrid_forward_ref(x, params)
    assert out.shape == (B, O), out.shape
    np.testing.assert_allclose(np.asarray(out), np.asarray(ref), rtol=1e-2, atol=1e-2)

    print("KERNEL_OK")
</pallas_src>

<mosaic_0001>
module attributes {stable_mosaic.version = 11 : i64} {
  func.func @kernel(%arg0: memref<64x8xf32, #tpu.memory_space<vmem>>, %arg1: memref<8x128xf32, #tpu.memory_space<vmem>>, %arg2: memref<32x128xf32, #tpu.memory_space<vmem>>, %arg3: memref<1x128xf32, #tpu.memory_space<vmem>>, %arg4: memref<32x128xf32, #tpu.memory_space<vmem>>, %arg5: memref<32x128xf32, #tpu.memory_space<vmem>>, %arg6: memref<1x128xf32, #tpu.memory_space<vmem>>, %arg7: memref<32x128xf32, #tpu.memory_space<vmem>>, %arg8: memref<32x128xf32, #tpu.memory_space<vmem>>, %arg9: memref<1x128xf32, #tpu.memory_space<vmem>>, %arg10: memref<32x128xf32, #tpu.memory_space<vmem>>, %arg11: memref<32x128xf32, #tpu.memory_space<vmem>>, %arg12: memref<1x128xf32, #tpu.memory_space<vmem>>, %arg13: memref<32x128xf32, #tpu.memory_space<vmem>>, %arg14: memref<1x128xf32, #tpu.memory_space<vmem>>, %arg15: memref<128x128xf32, #tpu.memory_space<vmem>>, %arg16: memref<1x128xf32, #tpu.memory_space<vmem>>, %arg17: memref<8x128xf32, #tpu.memory_space<vmem>>) attributes {dimension_semantics = [], scalar_prefetch = 0 : i64, scratch_operands = 0 : i64, tpu.core_type = #tpu.core_type<tc>} {
    %c0 = arith.constant 0 : index
    %c0_0 = arith.constant 0 : index
    %0 = vector.load %arg0[%c0, %c0_0] : memref<64x8xf32, #tpu.memory_space<vmem>>, vector<64x8xf32>
    %c0_1 = arith.constant 0 : index
    %c0_2 = arith.constant 0 : index
    %1 = vector.load %arg1[%c0_1, %c0_2] : memref<8x128xf32, #tpu.memory_space<vmem>>, vector<8x128xf32>
    %cst = arith.constant dense<0.000000e+00> : vector<64x128xf32>
    %2 = tpu.matmul %0, %1, %cst {dimension_numbers = #tpu.dot_dimension_numbers<[1], [0], [0], [1], [0, 0, 1, 1], [], []>} : vector<64x8xf32>, vector<8x128xf32>, vector<64x128xf32> -> vector<64x128xf32>
    %c0_3 = arith.constant 0 : index
    %c0_4 = arith.constant 0 : index
    %3 = vector.load %arg3[%c0_3, %c0_4] : memref<1x128xf32, #tpu.memory_space<vmem>>, vector<1x128xf32>
    %4 = vector.broadcast %3 : vector<1x128xf32> to vector<64x128xf32>
    %5 = arith.addf %2, %4 : vector<64x128xf32>
    %c0_5 = arith.constant 0 : index
    %c0_6 = arith.constant 0 : index
    %6 = vector.load %arg6[%c0_5, %c0_6] : memref<1x128xf32, #tpu.memory_space<vmem>>, vector<1x128xf32>
    %7 = vector.shape_cast %6 : vector<1x128xf32> to vector<1x128xf32>
    %8 = vector.broadcast %7 : vector<1x128xf32> to vector<8x128xf32>
    %c0_7 = arith.constant 0 : index
    %c0_8 = arith.constant 0 : index
    %9 = vector.load %arg9[%c0_7, %c0_8] : memref<1x128xf32, #tpu.memory_space<vmem>>, vector<1x128xf32>
    %10 = vector.shape_cast %9 : vector<1x128xf32> to vector<1x128xf32>
    %11 = vector.broadcast %10 : vector<1x128xf32> to vector<8x128xf32>
    %c0_9 = arith.constant 0 : index
    %c0_10 = arith.constant 0 : index
    %12 = vector.load %arg12[%c0_9, %c0_10] : memref<1x128xf32, #tpu.memory_space<vmem>>, vector<1x128xf32>
    %13 = vector.shape_cast %12 : vector<1x128xf32> to vector<1x128xf32>
    %14 = vector.broadcast %13 : vector<1x128xf32> to vector<8x128xf32>
    %cst_11 = arith.constant 0.000000e+00 : f32
    %15 = vector.broadcast %cst_11 : f32 to vector<8x32xf32>
    %cst_12 = arith.constant 0.000000e+00 : f32
    %16 = vector.broadcast %cst_12 : f32 to vector<8x32xf32>
    %cst_13 = arith.constant 0.000000e+00 : f32
    %17 = vector.broadcast %cst_13 : f32 to vector<8x32xf32>
    %cst_14 = arith.constant 0.000000e+00 : f32
    %18 = vector.broadcast %cst_14 : f32 to vector<8x32xf32>
    %cst_15 = arith.constant 0.000000e+00 : f32
    %19 = vector.broadcast %cst_15 : f32 to vector<8x32xf32>
    %cst_16 = arith.constant 0.000000e+00 : f32
    %20 = vector.broadcast %cst_16 : f32 to vector<8x32xf32>
    %21 = vector.extract_strided_slice %5 {offsets = [0, 0], sizes = [8, 128], strides = [1, 1]} : vector<64x128xf32> to vector<8x128xf32>
    %c0_17 = arith.constant 0 : index
    %c0_18 = arith.constant 0 : index
    %22 = vector.load %arg2[%c0_17, %c0_18] : memref<32x128xf32, #tpu.memory_space<vmem>>, vector<32x128xf32>
    %cst_19 = arith.constant dense<0.000000e+00> : vector<8x128xf32>
    %23 = tpu.matmul %15, %22, %cst_19 {dimension_numbers = #tpu.dot_dimension_numbers<[1], [0], [0], [1], [0, 0, 1, 1], [], []>} : vector<8x32xf32>, vector<32x128xf32>, vector<8x128xf32> -> vector<8x128xf32>
    %24 = arith.addf %21, %23 : vector<8x128xf32>
    %cst_20 = arith.constant 5.000000e-01 : f32
    %25 = vector.broadcast %cst_20 : f32 to vector<8x128xf32>
    %26 = arith.mulf %25, %24 : vector<8x128xf32>
    %27 = math.tanh %26 : vector<8x128xf32>
    %cst_21 = arith.constant 5.000000e-01 : f32
    %28 = vector.broadcast %cst_21 : f32 to vector<8x128xf32>
    %29 = arith.mulf %28, %27 : vector<8x128xf32>
    %cst_22 = arith.constant 5.000000e-01 : f32
    %30 = vector.broadcast %cst_22 : f32 to vector<8x128xf32>
    %31 = arith.addf %29, %30 : vector<8x128xf32>
    %32 = math.tanh %24 : vector<8x128xf32>
    %33 = vector.extract_strided_slice %31 {offsets = [0, 0], sizes = [8, 32], strides = [1, 1]} : vector<8x128xf32> to vector<8x32xf32>
    %34 = vector.extract_strided_slice %31 {offsets = [0, 32], sizes = [8, 32], strides = [1, 1]} : vector<8x128xf32> to vector<8x32xf32>
    %35 = vector.extract_strided_slice %32 {offsets = [0, 64], sizes = [8, 32], strides = [1, 1]} : vector<8x128xf32> to vector<8x32xf32>
    %36 = vector.extract_strided_slice %31 {offsets = [0, 96], sizes = [8, 32], strides = [1, 1]} : vector<8x128xf32> to vector<8x32xf32>
    %37 = arith.mulf %34, %17 : vector<8x32xf32>
    %38 = arith.mulf %33, %35 : vector<8x32xf32>
    %39 = arith.addf %37, %38 : vector<8x32xf32>
    %40 = math.tanh %39 : vector<8x32xf32>
    %41 = arith.mulf %36, %40 : vector<8x32xf32>
    %c0_23 = arith.constant 0 : index
    %c0_24 = arith.constant 0 : index
    %42 = vector.load %arg4[%c0_23, %c0_24] : memref<32x128xf32, #tpu.memory_space<vmem>>, vector<32x128xf32>
    %cst_25 = arith.constant dense<0.000000e+00> : vector<8x128xf32>
    %43 = tpu.matmul %41, %42, %cst_25 {dimension_numbers = #tpu.dot_dimension_numbers<[1], [0], [0], [1], [0, 0, 1, 1], [], []>} : vector<8x32xf32>, vector<32x128xf32>, vector<8x128xf32> -> vector<8x128xf32>
    %c0_26 = arith.constant 0 : index
    %c0_27 = arith.constant 0 : index
    %44 = vector.load %arg5[%c0_26, %c0_27] : memref<32x128xf32, #tpu.memory_space<vmem>>, vector<32x128xf32>
    %cst_28 = arith.constant dense<0.000000e+00> : vector<8x128xf32>
    %45 = tpu.matmul %16, %44, %cst_28 {dimension_numbers = #tpu.dot_dimension_numbers<[1], [0], [0], [1], [0, 0, 1, 1], [], []>} : vector<8x32xf32>, vector<32x128xf32>, vector<8x128xf32> -> vector<8x128xf32>
    %46 = arith.addf %43, %45 : vector<8x128xf32>
    %47 = arith.addf %46, %8 : vector<8x128xf32>
    %cst_29 = arith.constant 5.000000e-01 : f32
    %48 = vector.broadcast %cst_29 : f32 to vector<8x128xf32>
    %49 = arith.mulf %48, %47 : vector<8x128xf32>
    %50 = math.tanh %49 : vector<8x128xf32>
    %cst_30 = arith.constant 5.000000e-01 : f32
    %51 = vector.broadcast %cst_30 : f32 to vector<8x128xf32>
    %52 = arith.mulf %51, %50 : vector<8x128xf32>
    %cst_31 = arith.constant 5.000000e-01 : f32
    %53 = vector.broadcast %cst_31 : f32 to vector<8x128xf32>
    %54 = arith.addf %52, %53 : vector<8x128xf32>
    %55 = math.tanh %47 : vector<8x128xf32>
    %56 = vector.extract_strided_slice %54 {offsets = [0, 0], sizes = [8, 32], strides = [1, 1]} : vector<8x128xf32> to vector<8x32xf32>
    %57 = vector.extract_strided_slice %54 {offsets = [0, 32], sizes = [8, 32], strides = [1, 1]} : vector<8x128xf32> to vector<8x32xf32>
    %58 = vector.extract_strided_slice %55 {offsets = [0, 64], sizes = [8, 32], strides = [1, 1]} : vector<8x128xf32> to vector<8x32xf32>
    %59 = vector.extract_strided_slice %54 {offsets = [0, 96], sizes = [8, 32], strides = [1, 1]} : vector<8x128xf32> to vector<8x32xf32>
    %60 = arith.mulf %57, %18 : vector<8x32xf32>
    %61 = arith.mulf %56, %58 : vector<8x32xf32>
    %62 = arith.addf %60, %61 : vector<8x32xf32>
    %63 = math.tanh %62 : vector<8x32xf32>
    %64 = arith.mulf %59, %63 : vector<8x32xf32>
    %c0_32 = arith.constant 0 : index
    %c0_33 = arith.constant 0 : index
    %65 = vector.load %arg7[%c0_32, %c0_33] : memref<32x128xf32, #tpu.memory_space<vmem>>, vector<32x128xf32>
    %cst_34 = arith.constant dense<0.000000e+00> : vector<8x128xf32>
    %66 = tpu.matmul %64, %65, %cst_34 {dimension_numbers = #tpu.dot_dimension_numbers<[1], [0], [0], [1], [0, 0, 1, 1], [], []>} : vector<8x32xf32>, vector<32x128xf32>, vector<8x128xf32> -> vector<8x128xf32>
    %c0_35 = arith.constant 0 : index
    %c0_36 = arith.constant 0 : index
    %67 = vector.load %arg8[%c0_35, %c0_36] : memref<32x128xf32, #tpu.memory_space<vmem>>, vector<32x128xf32>
    %cst_37 = arith.constant dense<0.000000e+00> : vector<8x128xf32>
    %68 = tpu.matmul %19, %67, %cst_37 {dimension_numbers = #tpu.dot_dimension_numbers<[1], [0], [0], [1], [0, 0, 1, 1], [], []>} : vector<8x32xf32>, vector<32x128xf32>, vector<8x128xf32> -> vector<8x128xf32>
    %69 = arith.addf %66, %68 : vector<8x128xf32>
    %70 = arith.addf %69, %11 : vector<8x128xf32>
    %cst_38 = arith.constant 5.000000e-01 : f32
    %71 = vector.broadcast %cst_38 : f32 to vector<8x128xf32>
    %72 = arith.mulf %71, %70 : vector<8x128xf32>
    %73 = math.tanh %72 : vector<8x128xf32>
    %cst_39 = arith.constant 5.000000e-01 : f32
    %74 = vector.broadcast %cst_39 : f32 to vector<8x128xf32>
    %75 = arith.mulf %74, %73 : vector<8x128xf32>
    %cst_40 = arith.constant 5.000000e-01 : f32
    %76 = vector.broadcast %cst_40 : f32 to vector<8x128xf32>
    %77 = arith.addf %75, %76 : vector<8x128xf32>
    %78 = vector.extract_strided_slice %77 {offsets = [0, 0], sizes = [8, 32], strides = [1, 1]} : vector<8x128xf32> to vector<8x32xf32>
    %79 = vector.extract_strided_slice %77 {offsets = [0, 32], sizes = [8, 32], strides = [1, 1]} : vector<8x128xf32> to vector<8x32xf32>
    %80 = vector.extract_strided_slice %70 {offsets = [0, 64], sizes = [8, 32], strides = [1, 1]} : vector<8x128xf32> to vector<8x32xf32>
    %81 = vector.extract_strided_slice %70 {offsets = [0, 96], sizes = [8, 32], strides = [1, 1]} : vector<8x128xf32> to vector<8x32xf32>
    %82 = arith.mulf %78, %81 : vector<8x32xf32>
    %83 = arith.addf %80, %82 : vector<8x32xf32>
    %84 = math.tanh %83 : vector<8x32xf32>
    %cst_41 = arith.constant 1.000000e+00 : f32
    %85 = vector.broadcast %cst_41 : f32 to vector<8x32xf32>
    %86 = arith.subf %85, %79 : vector<8x32xf32>
    %87 = arith.mulf %86, %84 : vector<8x32xf32>
    %88 = arith.mulf %79, %19 : vector<8x32xf32>
    %89 = arith.addf %87, %88 : vector<8x32xf32>
    %c0_42 = arith.constant 0 : index
    %c0_43 = arith.constant 0 : index
    %90 = vector.load %arg10[%c0_42, %c0_43] : memref<32x128xf32, #tpu.memory_space<vmem>>, vector<32x128xf32>
    %cst_44 = arith.constant dense<0.000000e+00> : vector<8x128xf32>
    %91 = tpu.matmul %89, %90, %cst_44 {dimension_numbers = #tpu.dot_dimension_numbers<[1], [0], [0], [1], [0, 0, 1, 1], [], []>} : vector<8x32xf32>, vector<32x128xf32>, vector<8x128xf32> -> vector<8x128xf32>
    %c0_45 = arith.constant 0 : index
    %c0_46 = arith.constant 0 : index
    %92 = vector.load %arg11[%c0_45, %c0_46] : memref<32x128xf32, #tpu.memory_space<vmem>>, vector<32x128xf32>
    %cst_47 = arith.constant dense<0.000000e+00> : vector<8x128xf32>
    %93 = tpu.matmul %20, %92, %cst_47 {dimension_numbers = #tpu.dot_dimension_numbers<[1], [0], [0], [1], [0, 0, 1, 1], [], []>} : vector<8x32xf32>, vector<32x128xf32>, vector<8x128xf32> -> vector<8x128xf32>
    %94 = arith.addf %91, %93 : vector<8x128xf32>
    %95 = arith.addf %94, %14 : vector<8x128xf32>
    %cst_48 = arith.constant 5.000000e-01 : f32
    %96 = vector.broadcast %cst_48 : f32 to vector<8x128xf32>
    %97 = arith.mulf %96, %95 : vector<8x128xf32>
    %98 = math.tanh %97 : vector<8x128xf32>
    %cst_49 = arith.constant 5.000000e-01 : f32
    %99 = vector.broadcast %cst_49 : f32 to vector<8x128xf32>
    %100 = arith.mulf %99, %98 : vector<8x128xf32>
    %cst_50 = arith.constant 5.000000e-01 : f32
    %101 = vector.broadcast %cst_50 : f32 to vector<8x128xf32>
    %102 = arith.addf %100, %101 : vector<8x128xf32>
    %103 = vector.extract_strided_slice %102 {offsets = [0, 0], sizes = [8, 32], strides = [1, 1]} : vector<8x128xf32> to vector<8x32xf32>
    %104 = vector.extract_strided_slice %102 {offsets = [0, 32], sizes = [8, 32], strides = [1, 1]} : vector<8x128xf32> to vector<8x32xf32>
    %105 = vector.extract_strided_slice %95 {offsets = [0, 64], sizes = [8, 32], strides = [1, 1]} : vector<8x128xf32> to vector<8x32xf32>
    %106 = vector.extract_strided_slice %95 {offsets = [0, 96], sizes = [8, 32], strides = [1, 1]} : vector<8x128xf32> to vector<8x32xf32>
    %107 = arith.mulf %103, %106 : vector<8x32xf32>
    %108 = arith.addf %105, %107 : vector<8x32xf32>
    %109 = math.tanh %108 : vector<8x32xf32>
    %cst_51 = arith.constant 1.000000e+00 : f32
    %110 = vector.broadcast %cst_51 : f32 to vector<8x32xf32>
    %111 = arith.subf %110, %104 : vector<8x32xf32>
    %112 = arith.mulf %111, %109 : vector<8x32xf32>
    %113 = arith.mulf %104, %20 : vector<8x32xf32>
    %114 = arith.addf %112, %113 : vector<8x32xf32>
    %115 = vector.extract_strided_slice %5 {offsets = [8, 0], sizes = [8, 128], strides = [1, 1]} : vector<64x128xf32> to vector<8x128xf32>
    %c0_52 = arith.constant 0 : index
    %c0_53 = arith.constant 0 : index
    %116 = vector.load %arg2[%c0_52, %c0_53] : memref<32x128xf32, #tpu.memory_space<vmem>>, vector<32x128xf32>
    %cst_54 = arith.constant dense<0.000000e+00> : vector<8x128xf32>
    %117 = tpu.matmul %41, %116, %cst_54 {dimension_numbers = #tpu.dot_dimension_numbers<[1], [0], [0], [1], [0, 0, 1, 1], [], []>} : vector<8x32xf32>, vector<32x128xf32>, vector<8x128xf32> -> vector<8x128xf32>
    %118 = arith.addf %115, %117 : vector<8x128xf32>
    %cst_55 = arith.constant 5.000000e-01 : f32
    %119 = vector.broadcast %cst_55 : f32 to vector<8x128xf32>
    %120 = arith.mulf %119, %118 : vector<8x128xf32>
    %121 = math.tanh %120 : vector<8x128xf32>
    %cst_56 = arith.constant 5.000000e-01 : f32
    %122 = vector.broadcast %cst_56 : f32 to vector<8x128xf32>
    %123 = arith.mulf %122, %121 : vector<8x128xf32>
    %cst_57 = arith.constant 5.000000e-01 : f32
    %124 = vector.broadcast %cst_57 : f32 to vector<8x128xf32>
    %125 = arith.addf %123, %124 : vector<8x128xf32>
    %126 = math.tanh %118 : vector<8x128xf32>
    %127 = vector.extract_strided_slice %125 {offsets = [0, 0], sizes = [8, 32], strides = [1, 1]} : vector<8x128xf32> to vector<8x32xf32>
    %128 = vector.extract_strided_slice %125 {offsets = [0, 32], sizes = [8, 32], strides = [1, 1]} : vector<8x128xf32> to vector<8x32xf32>
    %129 = vector.extract_strided_slice %126 {offsets = [0, 64], sizes = [8, 32], strides = [1, 1]} : vector<8x128xf32> to vector<8x32xf32>
    %130 = vector.extract_strided_slice %125 {offsets = [0, 96], sizes = [8, 32], strides = [1, 1]} : vector<8x128xf32> to vector<8x32xf32>
    %131 = arith.mulf %128, %39 : vector<8x32xf32>
    %132 = arith.mulf %127, %129 : vector<8x32xf32>
    %133 = arith.addf %131, %132 : vector<8x32xf32>
    %134 = math.tanh %133 : vector<8x32xf32>
    %135 = arith.mulf %130, %134 : vector<8x32xf32>
    %c0_58 = arith.constant 0 : index
    %c0_59 = arith.constant 0 : index
    %136 = vector.load %arg4[%c0_58, %c0_59] : memref<32x128xf32, #tpu.memory_space<vmem>>, vector<32x128xf32>
    %cst_60 = arith.constant dense<0.000000e+00> : vector<8x128xf32>
    %137 = tpu.matmul %135, %136, %cst_60 {dimension_numbers = #tpu.dot_dimension_numbers<[1], [0], [0], [1], [0, 0, 1, 1], [], []>} : vector<8x32xf32>, vector<32x128xf32>, vector<8x128xf32> -> vector<8x128xf32>
    %c0_61 = arith.constant 0 : index
    %c0_62 = arith.constant 0 : index
    %138 = vector.load %arg5[%c0_61, %c0_62] : memref<32x128xf32, #tpu.memory_space<vmem>>, vector<32x128xf32>
    %cst_63 = arith.constant dense<0.000000e+00> : vector<8x128xf32>
    %139 = tpu.matmul %64, %138, %cst_63 {dimension_numbers = #tpu.dot_dimension_numbers<[1], [0], [0], [1], [0, 0, 1, 1], [], []>} : vector<8x32xf32>, vector<32x128xf32>, vector<8x128xf32> -> vector<8x128xf32>
    %140 = arith.addf %137, %139 : vector<8x128xf32>
    %141 = arith.addf %140, %8 : vector<8x128xf32>
    %cst_64 = arith.constant 5.000000e-01 : f32
    %142 = vector.broadcast %cst_64 : f32 to vector<8x128xf32>
    %143 = arith.mulf %142, %141 : vector<8x128xf32>
    %144 = math.tanh %143 : vector<8x128xf32>
    %cst_65 = arith.constant 5.000000e-01 : f32
    %145 = vector.broadcast %cst_65 : f32 to vector<8x128xf32>
    %146 = arith.mulf %145, %144 : vector<8x128xf32>
    %cst_66 = arith.constant 5.000000e-01 : f32
    %147 = vector.broadcast %cst_66 : f32 to vector<8x128xf32>
    %148 = arith.addf %146, %147 : vector<8x128xf32>
    %149 = math.tanh %141 : vector<8x128xf32>
    %150 = vector.extract_strided_slice %148 {offsets = [0, 0], sizes = [8, 32], strides = [1, 1]} : vector<8x128xf32> to vector<8x32xf32>
    %151 = vector.extract_strided_slice %148 {offsets = [0, 32], sizes = [8, 32], strides = [1, 1]} : vector<8x128xf32> to vector<8x32xf32>
    %152 = vector.extract_strided_slice %149 {offsets = [0, 64], sizes = [8, 32], strides = [1, 1]} : vector<8x128xf32> to vector<8x32xf32>
    %153 = vector.extract_strided_slice %148 {offsets = [0, 96], sizes = [8, 32], strides = [1, 1]} : vector<8x128xf32> to vector<8x32xf32>
    %154 = arith.mulf %151, %62 : vector<8x32xf32>
    %155 = arith.mulf %150, %152 : vector<8x32xf32>
    %156 = arith.addf %154, %155 : vector<8x32xf32>
    %157 = math.tanh %156 : vector<8x32xf32>
    %158 = arith.mulf %153, %157 : vector<8x32xf32>
    %c0_67 = arith.constant 0 : index
    %c0_68 = arith.constant 0 : index
    %159 = vector.load %arg7[%c0_67, %c0_68] : memref<32x128xf32, #tpu.memory_space<vmem>>, vector<32x128xf32>
    %cst_69 = arith.constant dense<0.000000e+00> : vector<8x128xf32>
    %160 = tpu.matmul %158, %159, %cst_69 {dimension_numbers = #tpu.dot_dimension_numbers<[1], [0], [0], [1], [0, 0, 1, 1], [], []>} : vector<8x32xf32>, vector<32x128xf32>, vector<8x128xf32> -> vector<8x128xf32>
    %c0_70 = arith.constant 0 : index
    %c0_71 = arith.constant 0 : index
    %161 = vector.load %arg8[%c0_70, %c0_71] : memref<32x128xf32, #tpu.memory_space<vmem>>, vector<32x128xf32>
    %cst_72 = arith.constant dense<0.000000e+00> : vector<8x128xf32>
    %162 = tpu.matmul %89, %161, %cst_72 {dimension_numbers = #tpu.dot_dimension_numbers<[1], [0], [0], [1], [0, 0, 1, 1], [], []>} : vector<8x32xf32>, vector<32x128xf32>, vector<8x128xf32> -> vector<8x128xf32>
    %163 = arith.addf %160, %162 : vector<8x128xf32>
    %164 = arith.addf %163, %11 : vector<8x128xf32>
    %cst_73 = arith.constant 5.000000e-01 : f32
    %165 = vector.broadcast %cst_73 : f32 to vector<8x128xf32>
    %166 = arith.mulf %165, %164 : vector<8x128xf32>
    %167 = math.tanh %166 : vector<8x128xf32>
    %cst_74 = arith.constant 5.000000e-01 : f32
    %168 = vector.broadcast %cst_74 : f32 to vector<8x128xf32>
    %169 = arith.mulf %168, %167 : vector<8x128xf32>
    %cst_75 = arith.constant 5.000000e-01 : f32
    %170 = vector.broadcast %cst_75 : f32 to vector<8x128xf32>
    %171 = arith.addf %169, %170 : vector<8x128xf32>
    %172 = vector.extract_strided_slice %171 {offsets = [0, 0], sizes = [8, 32], strides = [1, 1]} : vector<8x128xf32> to vector<8x32xf32>
    %173 = vector.extract_strided_slice %171 {offsets = [0, 32], sizes = [8, 32], strides = [1, 1]} : vector<8x128xf32> to vector<8x32xf32>
    %174 = vector.extract_strided_slice %164 {offsets = [0, 64], sizes = [8, 32], strides = [1, 1]} : vector<8x128xf32> to vector<8x32xf32>
    %175 = vector.extract_strided_slice %164 {offsets = [0, 96], sizes = [8, 32], strides = [1, 1]} : vector<8x128xf32> to vector<8x32xf32>
    %176 = arith.mulf %172, %175 : vector<8x32xf32>
    %177 = arith.addf %174, %176 : vector<8x32xf32>
    %178 = math.tanh %177 : vector<8x32xf32>
    %cst_76 = arith.constant 1.000000e+00 : f32
    %179 = vector.broadcast %cst_76 : f32 to vector<8x32xf32>
    %180 = arith.subf %179, %173 : vector<8x32xf32>
    %181 = arith.mulf %180, %178 : vector<8x32xf32>
    %182 = arith.mulf %173, %89 : vector<8x32xf32>
    %183 = arith.addf %181, %182 : vector<8x32xf32>
    %c0_77 = arith.constant 0 : index
    %c0_78 = arith.constant 0 : index
    %184 = vector.load %arg10[%c0_77, %c0_78] : memref<32x128xf32, #tpu.memory_space<vmem>>, vector<32x128xf32>
    %cst_79 = arith.constant dense<0.000000e+00> : vector<8x128xf32>
    %185 = tpu.matmul %183, %184, %cst_79 {dimension_numbers = #tpu.dot_dimension_numbers<[1], [0], [0], [1], [0, 0, 1, 1], [], []>} : vector<8x32xf32>, vector<32x128xf32>, vector<8x128xf32> -> vector<8x128xf32>
    %c0_80 = arith.constant 0 : index
    %c0_81 = arith.constant 0 : index
    %186 = vector.load %arg11[%c0_80, %c0_81] : memref<32x128xf32, #tpu.memory_space<vmem>>, vector<32x128xf32>
    %cst_82 = arith.constant dense<0.000000e+00> : vector<8x128xf32>
    %187 = tpu.matmul %114, %186, %cst_82 {dimension_numbers = #tpu.dot_dimension_numbers<[1], [0], [0], [1], [0, 0, 1, 1], [], []>} : vector<8x32xf32>, vector<32x128xf32>, vector<8x128xf32> -> vector<8x128xf32>
    %188 = arith.addf %185, %187 : vector<8x128xf32>
    %189 = arith.addf %188, %14 : vector<8x128xf32>
    %cst_83 = arith.constant 5.000000e-01 : f32
    %190 = vector.broadcast %cst_83 : f32 to vector<8x128xf32>
    %191 = arith.mulf %190, %189 : vector<8x128xf32>
    %192 = math.tanh %191 : vector<8x128xf32>
    %cst_84 = arith.constant 5.000000e-01 : f32
    %193 = vector.broadcast %cst_84 : f32 to vector<8x128xf32>
    %194 = arith.mulf %193, %192 : vector<8x128xf32>
    %cst_85 = arith.constant 5.000000e-01 : f32
    %195 = vector.broadcast %cst_85 : f32 to vector<8x128xf32>
    %196 = arith.addf %194, %195 : vector<8x128xf32>
    %197 = vector.extract_strided_slice %196 {offsets = [0, 0], sizes = [8, 32], strides = [1, 1]} : vector<8x128xf32> to vector<8x32xf32>
    %198 = vector.extract_strided_slice %196 {offsets = [0, 32], sizes = [8, 32], strides = [1, 1]} : vector<8x128xf32> to vector<8x32xf32>
    %199 = vector.extract_strided_slice %189 {offsets = [0, 64], sizes = [8, 32], strides = [1, 1]} : vector<8x128xf32> to vector<8x32xf32>
    %200 = vector.extract_strided_slice %189 {offsets = [0, 96], sizes = [8, 32], strides = [1, 1]} : vector<8x128xf32> to vector<8x32xf32>
    %201 = arith.mulf %197, %200 : vector<8x32xf32>
    %202 = arith.addf %199, %201 : vector<8x32xf32>
    %203 = math.tanh %202 : vector<8x32xf32>
    %cst_86 = arith.constant 1.000000e+00 : f32
    %204 = vector.broadcast %cst_86 : f32 to vector<8x32xf32>
    %205 = arith.subf %204, %198 : vector<8x32xf32>
    %206 = arith.mulf %205, %203 : vector<8x32xf32>
    %207 = arith.mulf %198, %114 : vector<8x32xf32>
    %208 = arith.addf %206, %207 : vector<8x32xf32>
    %209 = vector.extract_strided_slice %5 {offsets = [16, 0], sizes = [8, 128], strides = [1, 1]} : vector<64x128xf32> to vector<8x128xf32>
    %c0_87 = arith.constant 0 : index
    %c0_88 = arith.constant 0 : index
    %210 = vector.load %arg2[%c0_87, %c0_88] : memref<32x128xf32, #tpu.memory_space<vmem>>, vector<32x128xf32>
    %cst_89 = arith.constant dense<0.000000e+00> : vector<8x128xf32>
    %211 = tpu.matmul %135, %210, %cst_89 {dimension_numbers = #tpu.dot_dimension_numbers<[1], [0], [0], [1], [0, 0, 1, 1], [], []>} : vector<8x32xf32>, vector<32x128xf32>, vector<8x128xf32> -> vector<8x128xf32>
    %212 = arith.addf %209, %211 : vector<8x128xf32>
    %cst_90 = arith.constant 5.000000e-01 : f32
    %213 = vector.broadcast %cst_90 : f32 to vector<8x128xf32>
    %214 = arith.mulf %213, %212 : vector<8x128xf32>
    %215 = math.tanh %214 : vector<8x128xf32>
    %cst_91 = arith.constant 5.000000e-01 : f32
    %216 = vector.broadcast %cst_91 : f32 to vector<8x128xf32>
    %217 = arith.mulf %216, %215 : vector<8x128xf32>
    %cst_92 = arith.constant 5.000000e-01 : f32
    %218 = vector.broadcast %cst_92 : f32 to vector<8x128xf32>
    %219 = arith.addf %217, %218 : vector<8x128xf32>
    %220 = math.tanh %212 : vector<8x128xf32>
    %221 = vector.extract_strided_slice %219 {offsets = [0, 0], sizes = [8, 32], strides = [1, 1]} : vector<8x128xf32> to vector<8x32xf32>
    %222 = vector.extract_strided_slice %219 {offsets = [0, 32], sizes = [8, 32], strides = [1, 1]} : vector<8x128xf32> to vector<8x32xf32>
    %223 = vector.extract_strided_slice %220 {offsets = [0, 64], sizes = [8, 32], strides = [1, 1]} : vector<8x128xf32> to vector<8x32xf32>
    %224 = vector.extract_strided_slice %219 {offsets = [0, 96], sizes = [8, 32], strides = [1, 1]} : vector<8x128xf32> to vector<8x32xf32>
    %225 = arith.mulf %222, %133 : vector<8x32xf32>
    %226 = arith.mulf %221, %223 : vector<8x32xf32>
    %227 = arith.addf %225, %226 : vector<8x32xf32>
    %228 = math.tanh %227 : vector<8x32xf32>
    %229 = arith.mulf %224, %228 : vector<8x32xf32>
    %c0_93 = arith.constant 0 : index
    %c0_94 = arith.constant 0 : index
    %230 = vector.load %arg4[%c0_93, %c0_94] : memref<32x128xf32, #tpu.memory_space<vmem>>, vector<32x128xf32>
    %cst_95 = arith.constant dense<0.000000e+00> : vector<8x128xf32>
    %231 = tpu.matmul %229, %230, %cst_95 {dimension_numbers = #tpu.dot_dimension_numbers<[1], [0], [0], [1], [0, 0, 1, 1], [], []>} : vector<8x32xf32>, vector<32x128xf32>, vector<8x128xf32> -> vector<8x128xf32>
    %c0_96 = arith.constant 0 : index
    %c0_97 = arith.constant 0 : index
    %232 = vector.load %arg5[%c0_96, %c0_97] : memref<32x128xf32, #tpu.memory_space<vmem>>, vector<32x128xf32>
    %cst_98 = arith.constant dense<0.000000e+00> : vector<8x128xf32>
    %233 = tpu.matmul %158, %232, %cst_98 {dimension_numbers = #tpu.dot_dimension_numbers<[1], [0], [0], [1], [0, 0, 1, 1], [], []>} : vector<8x32xf32>, vector<32x128xf32>, vector<8x128xf32> -> vector<8x128xf32>
    %234 = arith.addf %231, %233 : vector<8x128xf32>
    %235 = arith.addf %234, %8 : vector<8x128xf32>
    %cst_99 = arith.constant 5.000000e-01 : f32
    %236 = vector.broadcast %cst_99 : f32 to vector<8x128xf32>
    %237 = arith.mulf %236, %235 : vector<8x128xf32>
    %238 = math.tanh %237 : vector<8x128xf32>
    %cst_100 = arith.constant 5.000000e-01 : f32
    %239 = vector.broadcast %cst_100 : f32 to vector<8x128xf32>
    %240 = arith.mulf %239, %238 : vector<8x128xf32>
    %cst_101 = arith.constant 5.000000e-01 : f32
    %241 = vector.broadcast %cst_101 : f32 to vector<8x128xf32>
    %242 = arith.addf %240, %241 : vector<8x128xf32>
    %243 = math.tanh %235 : vector<8x128xf32>
    %244 = vector.extract_strided_slice %242 {offsets = [0, 0], sizes = [8, 32], strides = [1, 1]} : vector<8x128xf32> to vector<8x32xf32>
    %245 = vector.extract_strided_slice %242 {offsets = [0, 32], sizes = [8, 32], strides = [1, 1]} : vector<8x128xf32> to vector<8x32xf32>
    %246 = vector.extract_strided_slice %243 {offsets = [0, 64], sizes = [8, 32], strides = [1, 1]} : vector<8x128xf32> to vector<8x32xf32>
    %247 = vector.extract_strided_slice %242 {offsets = [0, 96], sizes = [8, 32], strides = [1, 1]} : vector<8x128xf32> to vector<8x32xf32>
    %248 = arith.mulf %245, %156 : vector<8x32xf32>
    %249 = arith.mulf %244, %246 : vector<8x32xf32>
    %250 = arith.addf %248, %249 : vector<8x32xf32>
    %251 = math.tanh %250 : vector<8x32xf32>
    %252 = arith.mulf %247, %251 : vector<8x32xf32>
    %c0_102 = arith.constant 0 : index
    %c0_103 = arith.constant 0 : index
    %253 = vector.load %arg7[%c0_102, %c0_103] : memref<32x128xf32, #tpu.memory_space<vmem>>, vector<32x128xf32>
    %cst_104 = arith.constant dense<0.000000e+00> : vector<8x128xf32>
    %254 = tpu.matmul %252, %253, %cst_104 {dimension_numbers = #tpu.dot_dimension_numbers<[1], [0], [0], [1], [0, 0, 1, 1], [], []>} : vector<8x32xf32>, vector<32x128xf32>, vector<8x128xf32> -> vector<8x128xf32>
    %c0_105 = arith.constant 0 : index
    %c0_106 = arith.constant 0 : index
    %255 = vector.load %arg8[%c0_105, %c0_106] : memref<32x128xf32, #tpu.memory_space<vmem>>, vector<32x128xf32>
    %cst_107 = arith.constant dense<0.000000e+00> : vector<8x128xf32>
    %256 = tpu.matmul %183, %255, %cst_107 {dimension_numbers = #tpu.dot_dimension_numbers<[1], [0], [0], [1], [0, 0, 1, 1], [], []>} : vector<8x32xf32>, vector<32x128xf32>, vector<8x128xf32> -> vector<8x128xf32>
    %257 = arith.addf %254, %256 : vector<8x128xf32>
    %258 = arith.addf %257, %11 : vector<8x128xf32>
    %cst_108 = arith.constant 5.000000e-01 : f32
    %259 = vector.broadcast %cst_108 : f32 to vector<8x128xf32>
    %260 = arith.mulf %259, %258 : vector<8x128xf32>
    %261 = math.tanh %260 : vector<8x128xf32>
    %cst_109 = arith.constant 5.000000e-01 : f32
    %262 = vector.broadcast %cst_109 : f32 to vector<8x128xf32>
    %263 = arith.mulf %262, %261 : vector<8x128xf32>
    %cst_110 = arith.constant 5.000000e-01 : f32
    %264 = vector.broadcast %cst_110 : f32 to vector<8x128xf32>
    %265 = arith.addf %263, %264 : vector<8x128xf32>
    %266 = vector.extract_strided_slice %265 {offsets = [0, 0], sizes = [8, 32], strides = [1, 1]} : vector<8x128xf32> to vector<8x32xf32>
    %267 = vector.extract_strided_slice %265 {offsets = [0, 32], sizes = [8, 32], strides = [1, 1]} : vector<8x128xf32> to vector<8x32xf32>
    %268 = vector.extract_strided_slice %258 {offsets = [0, 64], sizes = [8, 32], strides = [1, 1]} : vector<8x128xf32> to vector<8x32xf32>
    %269 = vector.extract_strided_slice %258 {offsets = [0, 96], sizes = [8, 32], strides = [1, 1]} : vector<8x128xf32> to vector<8x32xf32>
    %270 = arith.mulf %266, %269 : vector<8x32xf32>
    %271 = arith.addf %268, %270 : vector<8x32xf32>
    %272 = math.tanh %271 : vector<8x32xf32>
    %cst_111 = arith.constant 1.000000e+00 : f32
    %273 = vector.broadcast %cst_111 : f32 to vector<8x32xf32>
    %274 = arith.subf %273, %267 : vector<8x32xf32>
    %275 = arith.mulf %274, %272 : vector<8x32xf32>
    %276 = arith.mulf %267, %183 : vector<8x32xf32>
    %277 = arith.addf %275, %276 : vector<8x32xf32>
    %c0_112 = arith.constant 0 : index
    %c0_113 = arith.constant 0 : index
    %278 = vector.load %arg10[%c0_112, %c0_113] : memref<32x128xf32, #tpu.memory_space<vmem>>, vector<32x128xf32>
    %cst_114 = arith.constant dense<0.000000e+00> : vector<8x128xf32>
    %279 = tpu.matmul %277, %278, %cst_114 {dimension_numbers = #tpu.dot_dimension_numbers<[1], [0], [0], [1], [0, 0, 1, 1], [], []>} : vector<8x32xf32>, vector<32x128xf32>, vector<8x128xf32> -> vector<8x128xf32>
    %c0_115 = arith.constant 0 : index
    %c0_116 = arith.constant 0 : index
    %280 = vector.load %arg11[%c0_115, %c0_116] : memref<32x128xf32, #tpu.memory_space<vmem>>, vector<32x128xf32>
    %cst_117 = arith.constant dense<0.000000e+00> : vector<8x128xf32>
    %281 = tpu.matmul %208, %280, %cst_117 {dimension_numbers = #tpu.dot_dimension_numbers<[1], [0], [0], [1], [0, 0, 1, 1], [], []>} : vector<8x32xf32>, vector<32x128xf32>, vector<8x128xf32> -> vector<8x128xf32>
    %282 = arith.addf %279, %281 : vector<8x128xf32>
    %283 = arith.addf %282, %14 : vector<8x128xf32>
    %cst_118 = arith.constant 5.000000e-01 : f32
    %284 = vector.broadcast %cst_118 : f32 to vector<8x128xf32>
    %285 = arith.mulf %284, %283 : vector<8x128xf32>
    %286 = math.tanh %285 : vector<8x128xf32>
    %cst_119 = arith.constant 5.000000e-01 : f32
    %287 = vector.broadcast %cst_119 : f32 to vector<8x128xf32>
    %288 = arith.mulf %287, %286 : vector<8x128xf32>
    %cst_120 = arith.constant 5.000000e-01 : f32
    %289 = vector.broadcast %cst_120 : f32 to vector<8x128xf32>
    %290 = arith.addf %288, %289 : vector<8x128xf32>
    %291 = vector.extract_strided_slice %290 {offsets = [0, 0], sizes = [8, 32], strides = [1, 1]} : vector<8x128xf32> to vector<8x32xf32>
    %292 = vector.extract_strided_slice %290 {offsets = [0, 32], sizes = [8, 32], strides = [1, 1]} : vector<8x128xf32> to vector<8x32xf32>
    %293 = vector.extract_strided_slice %283 {offsets = [0, 64], sizes = [8, 32], strides = [1, 1]} : vector<8x128xf32> to vector<8x32xf32>
    %294 = vector.extract_strided_slice %283 {offsets = [0, 96], sizes = [8, 32], strides = [1, 1]} : vector<8x128xf32> to vector<8x32xf32>
    %295 = arith.mulf %291, %294 : vector<8x32xf32>
    %296 = arith.addf %293, %295 : vector<8x32xf32>
    %297 = math.tanh %296 : vector<8x32xf32>
    %cst_121 = arith.constant 1.000000e+00 : f32
    %298 = vector.broadcast %cst_121 : f32 to vector<8x32xf32>
    %299 = arith.subf %298, %292 : vector<8x32xf32>
    %300 = arith.mulf %299, %297 : vector<8x32xf32>
    %301 = arith.mulf %292, %208 : vector<8x32xf32>
    %302 = arith.addf %300, %301 : vector<8x32xf32>
    %303 = vector.extract_strided_slice %5 {offsets = [24, 0], sizes = [8, 128], strides = [1, 1]} : vector<64x128xf32> to vector<8x128xf32>
    %c0_122 = arith.constant 0 : index
    %c0_123 = arith.constant 0 : index
    %304 = vector.load %arg2[%c0_122, %c0_123] : memref<32x128xf32, #tpu.memory_space<vmem>>, vector<32x128xf32>
    %cst_124 = arith.constant dense<0.000000e+00> : vector<8x128xf32>
    %305 = tpu.matmul %229, %304, %cst_124 {dimension_numbers = #tpu.dot_dimension_numbers<[1], [0], [0], [1], [0, 0, 1, 1], [], []>} : vector<8x32xf32>, vector<32x128xf32>, vector<8x128xf32> -> vector<8x128xf32>
    %306 = arith.addf %303, %305 : vector<8x128xf32>
    %cst_125 = arith.constant 5.000000e-01 : f32
    %307 = vector.broadcast %cst_125 : f32 to vector<8x128xf32>
    %308 = arith.mulf %307, %306 : vector<8x128xf32>
    %309 = math.tanh %308 : vector<8x128xf32>
    %cst_126 = arith.constant 5.000000e-01 : f32
    %310 = vector.broadcast %cst_126 : f32 to vector<8x128xf32>
    %311 = arith.mulf %310, %309 : vector<8x128xf32>
    %cst_127 = arith.constant 5.000000e-01 : f32
    %312 = vector.broadcast %cst_127 : f32 to vector<8x128xf32>
    %313 = arith.addf %311, %312 : vector<8x128xf32>
    %314 = math.tanh %306 : vector<8x128xf32>
    %315 = vector.extract_strided_slice %313 {offsets = [0, 0], sizes = [8, 32], strides = [1, 1]} : vector<8x128xf32> to vector<8x32xf32>
    %316 = vector.extract_strided_slice %313 {offsets = [0, 32], sizes = [8, 32], strides = [1, 1]} : vector<8x128xf32> to vector<8x32xf32>
    %317 = vector.extract_strided_slice %314 {offsets = [0, 64], sizes = [8, 32], strides = [1, 1]} : vector<8x128xf32> to vector<8x32xf32>
    %318 = vector.extract_strided_slice %313 {offsets = [0, 96], sizes = [8, 32], strides = [1, 1]} : vector<8x128xf32> to vector<8x32xf32>
    %319 = arith.mulf %316, %227 : vector<8x32xf32>
    %320 = arith.mulf %315, %317 : vector<8x32xf32>
    %321 = arith.addf %319, %320 : vector<8x32xf32>
    %322 = math.tanh %321 : vector<8x32xf32>
    %323 = arith.mulf %318, %322 : vector<8x32xf32>
    %c0_128 = arith.constant 0 : index
    %c0_129 = arith.constant 0 : index
    %324 = vector.load %arg4[%c0_128, %c0_129] : memref<32x128xf32, #tpu.memory_space<vmem>>, vector<32x128xf32>
    %cst_130 = arith.constant dense<0.000000e+00> : vector<8x128xf32>
    %325 = tpu.matmul %323, %324, %cst_130 {dimension_numbers = #tpu.dot_dimension_numbers<[1], [0], [0], [1], [0, 0, 1, 1], [], []>} : vector<8x32xf32>, vector<32x128xf32>, vector<8x128xf32> -> vector<8x128xf32>
    %c0_131 = arith.constant 0 : index
    %c0_132 = arith.constant 0 : index
    %326 = vector.load %arg5[%c0_131, %c0_132] : memref<32x128xf32, #tpu.memory_space<vmem>>, vector<32x128xf32>
    %cst_133 = arith.constant dense<0.000000e+00> : vector<8x128xf32>
    %327 = tpu.matmul %252, %326, %cst_133 {dimension_numbers = #tpu.dot_dimension_numbers<[1], [0], [0], [1], [0, 0, 1, 1], [], []>} : vector<8x32xf32>, vector<32x128xf32>, vector<8x128xf32> -> vector<8x128xf32>
    %328 = arith.addf %325, %327 : vector<8x128xf32>
    %329 = arith.addf %328, %8 : vector<8x128xf32>
    %cst_134 = arith.constant 5.000000e-01 : f32
    %330 = vector.broadcast %cst_134 : f32 to vector<8x128xf32>
    %331 = arith.mulf %330, %329 : vector<8x128xf32>
    %332 = math.tanh %331 : vector<8x128xf32>
    %cst_135 = arith.constant 5.000000e-01 : f32
    %333 = vector.broadcast %cst_135 : f32 to vector<8x128xf32>
    %334 = arith.mulf %333, %332 : vector<8x128xf32>
    %cst_136 = arith.constant 5.000000e-01 : f32
    %335 = vector.broadcast %cst_136 : f32 to vector<8x128xf32>
    %336 = arith.addf %334, %335 : vector<8x128xf32>
    %337 = math.tanh %329 : vector<8x128xf32>
    %338 = vector.extract_strided_slice %336 {offsets = [0, 0], sizes = [8, 32], strides = [1, 1]} : vector<8x128xf32> to vector<8x32xf32>
    %339 = vector.extract_strided_slice %336 {offsets = [0, 32], sizes = [8, 32], strides = [1, 1]} : vector<8x128xf32> to vector<8x32xf32>
    %340 = vector.extract_strided_slice %337 {offsets = [0, 64], sizes = [8, 32], strides = [1, 1]} : vector<8x128xf32> to vector<8x32xf32>
    %341 = vector.extract_strided_slice %336 {offsets = [0, 96], sizes = [8, 32], strides = [1, 1]} : vector<8x128xf32> to vector<8x32xf32>
    %342 = arith.mulf %339, %250 : vector<8x32xf32>
    %343 = arith.mulf %338, %340 : vector<8x32xf32>
    %344 = arith.addf %342, %343 : vector<8x32xf32>
    %345 = math.tanh %344 : vector<8x32xf32>
    %346 = arith.mulf %341, %345 : vector<8x32xf32>
    %c0_137 = arith.constant 0 : index
    %c0_138 = arith.constant 0 : index
    %347 = vector.load %arg7[%c0_137, %c0_138] : memref<32x128xf32, #tpu.memory_space<vmem>>, vector<32x128xf32>
    %cst_139 = arith.constant dense<0.000000e+00> : vector<8x128xf32>
    %348 = tpu.matmul %346, %347, %cst_139 {dimension_numbers = #tpu.dot_dimension_numbers<[1], [0], [0], [1], [0, 0, 1, 1], [], []>} : vector<8x32xf32>, vector<32x128xf32>, vector<8x128xf32> -> vector<8x128xf32>
    %c0_140 = arith.constant 0 : index
    %c0_141 = arith.constant 0 : index
    %349 = vector.load %arg8[%c0_140, %c0_141] : memref<32x128xf32, #tpu.memory_space<vmem>>, vector<32x128xf32>
    %cst_142 = arith.constant dense<0.000000e+00> : vector<8x128xf32>
    %350 = tpu.matmul %277, %349, %cst_142 {dimension_numbers = #tpu.dot_dimension_numbers<[1], [0], [0], [1], [0, 0, 1, 1], [], []>} : vector<8x32xf32>, vector<32x128xf32>, vector<8x128xf32> -> vector<8x128xf32>
    %351 = arith.addf %348, %350 : vector<8x128xf32>
    %352 = arith.addf %351, %11 : vector<8x128xf32>
    %cst_143 = arith.constant 5.000000e-01 : f32
    %353 = vector.broadcast %cst_143 : f32 to vector<8x128xf32>
    %354 = arith.mulf %353, %352 : vector<8x128xf32>
    %355 = math.tanh %354 : vector<8x128xf32>
    %cst_144 = arith.constant 5.000000e-01 : f32
    %356 = vector.broadcast %cst_144 : f32 to vector<8x128xf32>
    %357 = arith.mulf %356, %355 : vector<8x128xf32>
    %cst_145 = arith.constant 5.000000e-01 : f32
    %358 = vector.broadcast %cst_145 : f32 to vector<8x128xf32>
    %359 = arith.addf %357, %358 : vector<8x128xf32>
    %360 = vector.extract_strided_slice %359 {offsets = [0, 0], sizes = [8, 32], strides = [1, 1]} : vector<8x128xf32> to vector<8x32xf32>
    %361 = vector.extract_strided_slice %359 {offsets = [0, 32], sizes = [8, 32], strides = [1, 1]} : vector<8x128xf32> to vector<8x32xf32>
    %362 = vector.extract_strided_slice %352 {offsets = [0, 64], sizes = [8, 32], strides = [1, 1]} : vector<8x128xf32> to vector<8x32xf32>
    %363 = vector.extract_strided_slice %352 {offsets = [0, 96], sizes = [8, 32], strides = [1, 1]} : vector<8x128xf32> to vector<8x32xf32>
    %364 = arith.mulf %360, %363 : vector<8x32xf32>
    %365 = arith.addf %362, %364 : vector<8x32xf32>
    %366 = math.tanh %365 : vector<8x32xf32>
    %cst_146 = arith.constant 1.000000e+00 : f32
    %367 = vector.broadcast %cst_146 : f32 to vector<8x32xf32>
    %368 = arith.subf %367, %361 : vector<8x32xf32>
    %369 = arith.mulf %368, %366 : vector<8x32xf32>
    %370 = arith.mulf %361, %277 : vector<8x32xf32>
    %371 = arith.addf %369, %370 : vector<8x32xf32>
    %c0_147 = arith.constant 0 : index
    %c0_148 = arith.constant 0 : index
    %372 = vector.load %arg10[%c0_147, %c0_148] : memref<32x128xf32, #tpu.memory_space<vmem>>, vector<32x128xf32>
    %cst_149 = arith.constant dense<0.000000e+00> : vector<8x128xf32>
    %373 = tpu.matmul %371, %372, %cst_149 {dimension_numbers = #tpu.dot_dimension_numbers<[1], [0], [0], [1], [0, 0, 1, 1], [], []>} : vector<8x32xf32>, vector<32x128xf32>, vector<8x128xf32> -> vector<8x128xf32>
    %c0_150 = arith.constant 0 : index
    %c0_151 = arith.constant 0 : index
    %374 = vector.load %arg11[%c0_150, %c0_151] : memref<32x128xf32, #tpu.memory_space<vmem>>, vector<32x128xf32>
    %cst_152 = arith.constant dense<0.000000e+00> : vector<8x128xf32>
    %375 = tpu.matmul %302, %374, %cst_152 {dimension_numbers = #tpu.dot_dimension_numbers<[1], [0], [0], [1], [0, 0, 1, 1], [], []>} : vector<8x32xf32>, vector<32x128xf32>, vector<8x128xf32> -> vector<8x128xf32>
    %376 = arith.addf %373, %375 : vector<8x128xf32>
    %377 = arith.addf %376, %14 : vector<8x128xf32>
    %cst_153 = arith.constant 5.000000e-01 : f32
    %378 = vector.broadcast %cst_153 : f32 to vector<8x128xf32>
    %379 = arith.mulf %378, %377 : vector<8x128xf32>
    %380 = math.tanh %379 : vector<8x128xf32>
    %cst_154 = arith.constant 5.000000e-01 : f32
    %381 = vector.broadcast %cst_154 : f32 to vector<8x128xf32>
    %382 = arith.mulf %381, %380 : vector<8x128xf32>
    %cst_155 = arith.constant 5.000000e-01 : f32
    %383 = vector.broadcast %cst_155 : f32 to vector<8x128xf32>
    %384 = arith.addf %382, %383 : vector<8x128xf32>
    %385 = vector.extract_strided_slice %384 {offsets = [0, 0], sizes = [8, 32], strides = [1, 1]} : vector<8x128xf32> to vector<8x32xf32>
    %386 = vector.extract_strided_slice %384 {offsets = [0, 32], sizes = [8, 32], strides = [1, 1]} : vector<8x128xf32> to vector<8x32xf32>
    %387 = vector.extract_strided_slice %377 {offsets = [0, 64], sizes = [8, 32], strides = [1, 1]} : vector<8x128xf32> to vector<8x32xf32>
    %388 = vector.extract_strided_slice %377 {offsets = [0, 96], sizes = [8, 32], strides = [1, 1]} : vector<8x128xf32> to vector<8x32xf32>
    %389 = arith.mulf %385, %388 : vector<8x32xf32>
    %390 = arith.addf %387, %389 : vector<8x32xf32>
    %391 = math.tanh %390 : vector<8x32xf32>
    %cst_156 = arith.constant 1.000000e+00 : f32
    %392 = vector.broadcast %cst_156 : f32 to vector<8x32xf32>
    %393 = arith.subf %392, %386 : vector<8x32xf32>
    %394 = arith.mulf %393, %391 : vector<8x32xf32>
    %395 = arith.mulf %386, %302 : vector<8x32xf32>
    %396 = arith.addf %394, %395 : vector<8x32xf32>
    %397 = vector.extract_strided_slice %5 {offsets = [32, 0], sizes = [8, 128], strides = [1, 1]} : vector<64x128xf32> to vector<8x128xf32>
    %c0_157 = arith.constant 0 : index
    %c0_158 = arith.constant 0 : index
    %398 = vector.load %arg2[%c0_157, %c0_158] : memref<32x128xf32, #tpu.memory_space<vmem>>, vector<32x128xf32>
    %cst_159 = arith.constant dense<0.000000e+00> : vector<8x128xf32>
    %399 = tpu.matmul %323, %398, %cst_159 {dimension_numbers = #tpu.dot_dimension_numbers<[1], [0], [0], [1], [0, 0, 1, 1], [], []>} : vector<8x32xf32>, vector<32x128xf32>, vector<8x128xf32> -> vector<8x128xf32>
    %400 = arith.addf %397, %399 : vector<8x128xf32>
    %cst_160 = arith.constant 5.000000e-01 : f32
    %401 = vector.broadcast %cst_160 : f32 to vector<8x128xf32>
    %402 = arith.mulf %401, %400 : vector<8x128xf32>
    %403 = math.tanh %402 : vector<8x128xf32>
    %cst_161 = arith.constant 5.000000e-01 : f32
    %404 = vector.broadcast %cst_161 : f32 to vector<8x128xf32>
    %405 = arith.mulf %404, %403 : vector<8x128xf32>
    %cst_162 = arith.constant 5.000000e-01 : f32
    %406 = vector.broadcast %cst_162 : f32 to vector<8x128xf32>
    %407 = arith.addf %405, %406 : vector<8x128xf32>
    %408 = math.tanh %400 : vector<8x128xf32>
    %409 = vector.extract_strided_slice %407 {offsets = [0, 0], sizes = [8, 32], strides = [1, 1]} : vector<8x128xf32> to vector<8x32xf32>
    %410 = vector.extract_strided_slice %407 {offsets = [0, 32], sizes = [8, 32], strides = [1, 1]} : vector<8x128xf32> to vector<8x32xf32>
    %411 = vector.extract_strided_slice %408 {offsets = [0, 64], sizes = [8, 32], strides = [1, 1]} : vector<8x128xf32> to vector<8x32xf32>
    %412 = vector.extract_strided_slice %407 {offsets = [0, 96], sizes = [8, 32], strides = [1, 1]} : vector<8x128xf32> to vector<8x32xf32>
    %413 = arith.mulf %410, %321 : vector<8x32xf32>
    %414 = arith.mulf %409, %411 : vector<8x32xf32>
    %415 = arith.addf %413, %414 : vector<8x32xf32>
    %416 = math.tanh %415 : vector<8x32xf32>
    %417 = arith.mulf %412, %416 : vector<8x32xf32>
    %c0_163 = arith.constant 0 : index
    %c0_164 = arith.constant 0 : index
    %418 = vector.load %arg4[%c0_163, %c0_164] : memref<32x128xf32, #tpu.memory_space<vmem>>, vector<32x128xf32>
    %cst_165 = arith.constant dense<0.000000e+00> : vector<8x128xf32>
    %419 = tpu.matmul %417, %418, %cst_165 {dimension_numbers = #tpu.dot_dimension_numbers<[1], [0], [0], [1], [0, 0, 1, 1], [], []>} : vector<8x32xf32>, vector<32x128xf32>, vector<8x128xf32> -> vector<8x128xf32>
    %c0_166 = arith.constant 0 : index
    %c0_167 = arith.constant 0 : index
    %420 = vector.load %arg5[%c0_166, %c0_167] : memref<32x128xf32, #tpu.memory_space<vmem>>, vector<32x128xf32>
    %cst_168 = arith.constant dense<0.000000e+00> : vector<8x128xf32>
    %421 = tpu.matmul %346, %420, %cst_168 {dimension_numbers = #tpu.dot_dimension_numbers<[1], [0], [0], [1], [0, 0, 1, 1], [], []>} : vector<8x32xf32>, vector<32x128xf32>, vector<8x128xf32> -> vector<8x128xf32>
    %422 = arith.addf %419, %421 : vector<8x128xf32>
    %423 = arith.addf %422, %8 : vector<8x128xf32>
    %cst_169 = arith.constant 5.000000e-01 : f32
    %424 = vector.broadcast %cst_169 : f32 to vector<8x128xf32>
    %425 = arith.mulf %424, %423 : vector<8x128xf32>
    %426 = math.tanh %425 : vector<8x128xf32>
    %cst_170 = arith.constant 5.000000e-01 : f32
    %427 = vector.broadcast %cst_170 : f32 to vector<8x128xf32>
    %428 = arith.mulf %427, %426 : vector<8x128xf32>
    %cst_171 = arith.constant 5.000000e-01 : f32
    %429 = vector.broadcast %cst_171 : f32 to vector<8x128xf32>
    %430 = arith.addf %428, %429 : vector<8x128xf32>
    %431 = math.tanh %423 : vector<8x128xf32>
    %432 = vector.extract_strided_slice %430 {offsets = [0, 0], sizes = [8, 32], strides = [1, 1]} : vector<8x128xf32> to vector<8x32xf32>
    %433 = vector.extract_strided_slice %430 {offsets = [0, 32], sizes = [8, 32], strides = [1, 1]} : vector<8x128xf32> to vector<8x32xf32>
    %434 = vector.extract_strided_slice %431 {offsets = [0, 64], sizes = [8, 32], strides = [1, 1]} : vector<8x128xf32> to vector<8x32xf32>
    %435 = vector.extract_strided_slice %430 {offsets = [0, 96], sizes = [8, 32], strides = [1, 1]} : vector<8x128xf32> to vector<8x32xf32>
    %436 = arith.mulf %433, %344 : vector<8x32xf32>
    %437 = arith.mulf %432, %434 : vector<8x32xf32>
    %438 = arith.addf %436, %437 : vector<8x32xf32>
    %439 = math.tanh %438 : vector<8x32xf32>
    %440 = arith.mulf %435, %439 : vector<8x32xf32>
    %c0_172 = arith.constant 0 : index
    %c0_173 = arith.constant 0 : index
    %441 = vector.load %arg7[%c0_172, %c0_173] : memref<32x128xf32, #tpu.memory_space<vmem>>, vector<32x128xf32>
    %cst_174 = arith.constant dense<0.000000e+00> : vector<8x128xf32>
    %442 = tpu.matmul %440, %441, %cst_174 {dimension_numbers = #tpu.dot_dimension_numbers<[1], [0], [0], [1], [0, 0, 1, 1], [], []>} : vector<8x32xf32>, vector<32x128xf32>, vector<8x128xf32> -> vector<8x128xf32>
    %c0_175 = arith.constant 0 : index
    %c0_176 = arith.constant 0 : index
    %443 = vector.load %arg8[%c0_175, %c0_176] : memref<32x128xf32, #tpu.memory_space<vmem>>, vector<32x128xf32>
    %cst_177 = arith.constant dense<0.000000e+00> : vector<8x128xf32>
    %444 = tpu.matmul %371, %443, %cst_177 {dimension_numbers = #tpu.dot_dimension_numbers<[1], [0], [0], [1], [0, 0, 1, 1], [], []>} : vector<8x32xf32>, vector<32x128xf32>, vector<8x128xf32> -> vector<8x128xf32>
    %445 = arith.addf %442, %444 : vector<8x128xf32>
    %446 = arith.addf %445, %11 : vector<8x128xf32>
    %cst_178 = arith.constant 5.000000e-01 : f32
    %447 = vector.broadcast %cst_178 : f32 to vector<8x128xf32>
    %448 = arith.mulf %447, %446 : vector<8x128xf32>
    %449 = math.tanh %448 : vector<8x128xf32>
    %cst_179 = arith.constant 5.000000e-01 : f32
    %450 = vector.broadcast %cst_179 : f32 to vector<8x128xf32>
    %451 = arith.mulf %450, %449 : vector<8x128xf32>
    %cst_180 = arith.constant 5.000000e-01 : f32
    %452 = vector.broadcast %cst_180 : f32 to vector<8x128xf32>
    %453 = arith.addf %451, %452 : vector<8x128xf32>
    %454 = vector.extract_strided_slice %453 {offsets = [0, 0], sizes = [8, 32], strides = [1, 1]} : vector<8x128xf32> to vector<8x32xf32>
    %455 = vector.extract_strided_slice %453 {offsets = [0, 32], sizes = [8, 32], strides = [1, 1]} : vector<8x128xf32> to vector<8x32xf32>
    %456 = vector.extract_strided_slice %446 {offsets = [0, 64], sizes = [8, 32], strides = [1, 1]} : vector<8x128xf32> to vector<8x32xf32>
    %457 = vector.extract_strided_slice %446 {offsets = [0, 96], sizes = [8, 32], strides = [1, 1]} : vector<8x128xf32> to vector<8x32xf32>
    %458 = arith.mulf %454, %457 : vector<8x32xf32>
    %459 = arith.addf %456, %458 : vector<8x32xf32>
    %460 = math.tanh %459 : vector<8x32xf32>
    %cst_181 = arith.constant 1.000000e+00 : f32
    %461 = vector.broadcast %cst_181 : f32 to vector<8x32xf32>
    %462 = arith.subf %461, %455 : vector<8x32xf32>
    %463 = arith.mulf %462, %460 : vector<8x32xf32>
    %464 = arith.mulf %455, %371 : vector<8x32xf32>
    %465 = arith.addf %463, %464 : vector<8x32xf32>
    %c0_182 = arith.constant 0 : index
    %c0_183 = arith.constant 0 : index
    %466 = vector.load %arg10[%c0_182, %c0_183] : memref<32x128xf32, #tpu.memory_space<vmem>>, vector<32x128xf32>
    %cst_184 = arith.constant dense<0.000000e+00> : vector<8x128xf32>
    %467 = tpu.matmul %465, %466, %cst_184 {dimension_numbers = #tpu.dot_dimension_numbers<[1], [0], [0], [1], [0, 0, 1, 1], [], []>} : vector<8x32xf32>, vector<32x128xf32>, vector<8x128xf32> -> vector<8x128xf32>
    %c0_185 = arith.constant 0 : index
    %c0_186 = arith.constant 0 : index
    %468 = vector.load %arg11[%c0_185, %c0_186] : memref<32x128xf32, #tpu.memory_space<vmem>>, vector<32x128xf32>
    %cst_187 = arith.constant dense<0.000000e+00> : vector<8x128xf32>
    %469 = tpu.matmul %396, %468, %cst_187 {dimension_numbers = #tpu.dot_dimension_numbers<[1], [0], [0], [1], [0, 0, 1, 1], [], []>} : vector<8x32xf32>, vector<32x128xf32>, vector<8x128xf32> -> vector<8x128xf32>
    %470 = arith.addf %467, %469 : vector<8x128xf32>
    %471 = arith.addf %470, %14 : vector<8x128xf32>
    %cst_188 = arith.constant 5.000000e-01 : f32
    %472 = vector.broadcast %cst_188 : f32 to vector<8x128xf32>
    %473 = arith.mulf %472, %471 : vector<8x128xf32>
    %474 = math.tanh %473 : vector<8x128xf32>
    %cst_189 = arith.constant 5.000000e-01 : f32
    %475 = vector.broadcast %cst_189 : f32 to vector<8x128xf32>
    %476 = arith.mulf %475, %474 : vector<8x128xf32>
    %cst_190 = arith.constant 5.000000e-01 : f32
    %477 = vector.broadcast %cst_190 : f32 to vector<8x128xf32>
    %478 = arith.addf %476, %477 : vector<8x128xf32>
    %479 = vector.extract_strided_slice %478 {offsets = [0, 0], sizes = [8, 32], strides = [1, 1]} : vector<8x128xf32> to vector<8x32xf32>
    %480 = vector.extract_strided_slice %478 {offsets = [0, 32], sizes = [8, 32], strides = [1, 1]} : vector<8x128xf32> to vector<8x32xf32>
    %481 = vector.extract_strided_slice %471 {offsets = [0, 64], sizes = [8, 32], strides = [1, 1]} : vector<8x128xf32> to vector<8x32xf32>
    %482 = vector.extract_strided_slice %471 {offsets = [0, 96], sizes = [8, 32], strides = [1, 1]} : vector<8x128xf32> to vector<8x32xf32>
    %483 = arith.mulf %479, %482 : vector<8x32xf32>
    %484 = arith.addf %481, %483 : vector<8x32xf32>
    %485 = math.tanh %484 : vector<8x32xf32>
    %cst_191 = arith.constant 1.000000e+00 : f32
    %486 = vector.broadcast %cst_191 : f32 to vector<8x32xf32>
    %487 = arith.subf %486, %480 : vector<8x32xf32>
    %488 = arith.mulf %487, %485 : vector<8x32xf32>
    %489 = arith.mulf %480, %396 : vector<8x32xf32>
    %490 = arith.addf %488, %489 : vector<8x32xf32>
    %491 = vector.extract_strided_slice %5 {offsets = [40, 0], sizes = [8, 128], strides = [1, 1]} : vector<64x128xf32> to vector<8x128xf32>
    %c0_192 = arith.constant 0 : index
    %c0_193 = arith.constant 0 : index
    %492 = vector.load %arg2[%c0_192, %c0_193] : memref<32x128xf32, #tpu.memory_space<vmem>>, vector<32x128xf32>
    %cst_194 = arith.constant dense<0.000000e+00> : vector<8x128xf32>
    %493 = tpu.matmul %417, %492, %cst_194 {dimension_numbers = #tpu.dot_dimension_numbers<[1], [0], [0], [1], [0, 0, 1, 1], [], []>} : vector<8x32xf32>, vector<32x128xf32>, vector<8x128xf32> -> vector<8x128xf32>
    %494 = arith.addf %491, %493 : vector<8x128xf32>
    %cst_195 = arith.constant 5.000000e-01 : f32
    %495 = vector.broadcast %cst_195 : f32 to vector<8x128xf32>
    %496 = arith.mulf %495, %494 : vector<8x128xf32>
    %497 = math.tanh %496 : vector<8x128xf32>
    %cst_196 = arith.constant 5.000000e-01 : f32
    %498 = vector.broadcast %cst_196 : f32 to vector<8x128xf32>
    %499 = arith.mulf %498, %497 : vector<8x128xf32>
    %cst_197 = arith.constant 5.000000e-01 : f32
    %500 = vector.broadcast %cst_197 : f32 to vector<8x128xf32>
    %501 = arith.addf %499, %500 : vector<8x128xf32>
    %502 = math.tanh %494 : vector<8x128xf32>
    %503 = vector.extract_strided_slice %501 {offsets = [0, 0], sizes = [8, 32], strides = [1, 1]} : vector<8x128xf32> to vector<8x32xf32>
    %504 = vector.extract_strided_slice %501 {offsets = [0, 32], sizes = [8, 32], strides = [1, 1]} : vector<8x128xf32> to vector<8x32xf32>
    %505 = vector.extract_strided_slice %502 {offsets = [0, 64], sizes = [8, 32], strides = [1, 1]} : vector<8x128xf32> to vector<8x32xf32>
    %506 = vector.extract_strided_slice %501 {offsets = [0, 96], sizes = [8, 32], strides = [1, 1]} : vector<8x128xf32> to vector<8x32xf32>
    %507 = arith.mulf %504, %415 : vector<8x32xf32>
    %508 = arith.mulf %503, %505 : vector<8x32xf32>
    %509 = arith.addf %507, %508 : vector<8x32xf32>
    %510 = math.tanh %509 : vector<8x32xf32>
    %511 = arith.mulf %506, %510 : vector<8x32xf32>
    %c0_198 = arith.constant 0 : index
    %c0_199 = arith.constant 0 : index
    %512 = vector.load %arg4[%c0_198, %c0_199] : memref<32x128xf32, #tpu.memory_space<vmem>>, vector<32x128xf32>
    %cst_200 = arith.constant dense<0.000000e+00> : vector<8x128xf32>
    %513 = tpu.matmul %511, %512, %cst_200 {dimension_numbers = #tpu.dot_dimension_numbers<[1], [0], [0], [1], [0, 0, 1, 1], [], []>} : vector<8x32xf32>, vector<32x128xf32>, vector<8x128xf32> -> vector<8x128xf32>
    %c0_201 = arith.constant 0 : index
    %c0_202 = arith.constant 0 : index
    %514 = vector.load %arg5[%c0_201, %c0_202] : memref<32x128xf32, #tpu.memory_space<vmem>>, vector<32x128xf32>
    %cst_203 = arith.constant dense<0.000000e+00> : vector<8x128xf32>
    %515 = tpu.matmul %440, %514, %cst_203 {dimension_numbers = #tpu.dot_dimension_numbers<[1], [0], [0], [1], [0, 0, 1, 1], [], []>} : vector<8x32xf32>, vector<32x128xf32>, vector<8x128xf32> -> vector<8x128xf32>
    %516 = arith.addf %513, %515 : vector<8x128xf32>
    %517 = arith.addf %516, %8 : vector<8x128xf32>
    %cst_204 = arith.constant 5.000000e-01 : f32
    %518 = vector.broadcast %cst_204 : f32 to vector<8x128xf32>
    %519 = arith.mulf %518, %517 : vector<8x128xf32>
    %520 = math.tanh %519 : vector<8x128xf32>
    %cst_205 = arith.constant 5.000000e-01 : f32
    %521 = vector.broadcast %cst_205 : f32 to vector<8x128xf32>
    %522 = arith.mulf %521, %520 : vector<8x128xf32>
    %cst_206 = arith.constant 5.000000e-01 : f32
    %523 = vector.broadcast %cst_206 : f32 to vector<8x128xf32>
    %524 = arith.addf %522, %523 : vector<8x128xf32>
    %525 = math.tanh %517 : vector<8x128xf32>
    %526 = vector.extract_strided_slice %524 {offsets = [0, 0], sizes = [8, 32], strides = [1, 1]} : vector<8x128xf32> to vector<8x32xf32>
    %527 = vector.extract_strided_slice %524 {offsets = [0, 32], sizes = [8, 32], strides = [1, 1]} : vector<8x128xf32> to vector<8x32xf32>
    %528 = vector.extract_strided_slice %525 {offsets = [0, 64], sizes = [8, 32], strides = [1, 1]} : vector<8x128xf32> to vector<8x32xf32>
    %529 = vector.extract_strided_slice %524 {offsets = [0, 96], sizes = [8, 32], strides = [1, 1]} : vector<8x128xf32> to vector<8x32xf32>
    %530 = arith.mulf %527, %438 : vector<8x32xf32>
    %531 = arith.mulf %526, %528 : vector<8x32xf32>
    %532 = arith.addf %530, %531 : vector<8x32xf32>
    %533 = math.tanh %532 : vector<8x32xf32>
    %534 = arith.mulf %529, %533 : vector<8x32xf32>
    %c0_207 = arith.constant 0 : index
    %c0_208 = arith.constant 0 : index
    %535 = vector.load %arg7[%c0_207, %c0_208] : memref<32x128xf32, #tpu.memory_space<vmem>>, vector<32x128xf32>
    %cst_209 = arith.constant dense<0.000000e+00> : vector<8x128xf32>
    %536 = tpu.matmul %534, %535, %cst_209 {dimension_numbers = #tpu.dot_dimension_numbers<[1], [0], [0], [1], [0, 0, 1, 1], [], []>} : vector<8x32xf32>, vector<32x128xf32>, vector<8x128xf32> -> vector<8x128xf32>
    %c0_210 = arith.constant 0 : index
    %c0_211 = arith.constant 0 : index
    %537 = vector.load %arg8[%c0_210, %c0_211] : memref<32x128xf32, #tpu.memory_space<vmem>>, vector<32x128xf32>
    %cst_212 = arith.constant dense<0.000000e+00> : vector<8x128xf32>
    %538 = tpu.matmul %465, %537, %cst_212 {dimension_numbers = #tpu.dot_dimension_numbers<[1], [0], [0], [1], [0, 0, 1, 1], [], []>} : vector<8x32xf32>, vector<32x128xf32>, vector<8x128xf32> -> vector<8x128xf32>
    %539 = arith.addf %536, %538 : vector<8x128xf32>
    %540 = arith.addf %539, %11 : vector<8x128xf32>
    %cst_213 = arith.constant 5.000000e-01 : f32
    %541 = vector.broadcast %cst_213 : f32 to vector<8x128xf32>
    %542 = arith.mulf %541, %540 : vector<8x128xf32>
    %543 = math.tanh %542 : vector<8x128xf32>
    %cst_214 = arith.constant 5.000000e-01 : f32
    %544 = vector.broadcast %cst_214 : f32 to vector<8x128xf32>
    %545 = arith.mulf %544, %543 : vector<8x128xf32>
    %cst_215 = arith.constant 5.000000e-01 : f32
    %546 = vector.broadcast %cst_215 : f32 to vector<8x128xf32>
    %547 = arith.addf %545, %546 : vector<8x128xf32>
    %548 = vector.extract_strided_slice %547 {offsets = [0, 0], sizes = [8, 32], strides = [1, 1]} : vector<8x128xf32> to vector<8x32xf32>
    %549 = vector.extract_strided_slice %547 {offsets = [0, 32], sizes = [8, 32], strides = [1, 1]} : vector<8x128xf32> to vector<8x32xf32>
    %550 = vector.extract_strided_slice %540 {offsets = [0, 64], sizes = [8, 32], strides = [1, 1]} : vector<8x128xf32> to vector<8x32xf32>
    %551 = vector.extract_strided_slice %540 {offsets = [0, 96], sizes = [8, 32], strides = [1, 1]} : vector<8x128xf32> to vector<8x32xf32>
    %552 = arith.mulf %548, %551 : vector<8x32xf32>
    %553 = arith.addf %550, %552 : vector<8x32xf32>
    %554 = math.tanh %553 : vector<8x32xf32>
    %cst_216 = arith.constant 1.000000e+00 : f32
    %555 = vector.broadcast %cst_216 : f32 to vector<8x32xf32>
    %556 = arith.subf %555, %549 : vector<8x32xf32>
    %557 = arith.mulf %556, %554 : vector<8x32xf32>
    %558 = arith.mulf %549, %465 : vector<8x32xf32>
    %559 = arith.addf %557, %558 : vector<8x32xf32>
    %c0_217 = arith.constant 0 : index
    %c0_218 = arith.constant 0 : index
    %560 = vector.load %arg10[%c0_217, %c0_218] : memref<32x128xf32, #tpu.memory_space<vmem>>, vector<32x128xf32>
    %cst_219 = arith.constant dense<0.000000e+00> : vector<8x128xf32>
    %561 = tpu.matmul %559, %560, %cst_219 {dimension_numbers = #tpu.dot_dimension_numbers<[1], [0], [0], [1], [0, 0, 1, 1], [], []>} : vector<8x32xf32>, vector<32x128xf32>, vector<8x128xf32> -> vector<8x128xf32>
    %c0_220 = arith.constant 0 : index
    %c0_221 = arith.constant 0 : index
    %562 = vector.load %arg11[%c0_220, %c0_221] : memref<32x128xf32, #tpu.memory_space<vmem>>, vector<32x128xf32>
    %cst_222 = arith.constant dense<0.000000e+00> : vector<8x128xf32>
    %563 = tpu.matmul %490, %562, %cst_222 {dimension_numbers = #tpu.dot_dimension_numbers<[1], [0], [0], [1], [0, 0, 1, 1], [], []>} : vector<8x32xf32>, vector<32x128xf32>, vector<8x128xf32> -> vector<8x128xf32>
    %564 = arith.addf %561, %563 : vector<8x128xf32>
    %565 = arith.addf %564, %14 : vector<8x128xf32>
    %cst_223 = arith.constant 5.000000e-01 : f32
    %566 = vector.broadcast %cst_223 : f32 to vector<8x128xf32>
    %567 = arith.mulf %566, %565 : vector<8x128xf32>
    %568 = math.tanh %567 : vector<8x128xf32>
    %cst_224 = arith.constant 5.000000e-01 : f32
    %569 = vector.broadcast %cst_224 : f32 to vector<8x128xf32>
    %570 = arith.mulf %569, %568 : vector<8x128xf32>
    %cst_225 = arith.constant 5.000000e-01 : f32
    %571 = vector.broadcast %cst_225 : f32 to vector<8x128xf32>
    %572 = arith.addf %570, %571 : vector<8x128xf32>
    %573 = vector.extract_strided_slice %572 {offsets = [0, 0], sizes = [8, 32], strides = [1, 1]} : vector<8x128xf32> to vector<8x32xf32>
    %574 = vector.extract_strided_slice %572 {offsets = [0, 32], sizes = [8, 32], strides = [1, 1]} : vector<8x128xf32> to vector<8x32xf32>
    %575 = vector.extract_strided_slice %565 {offsets = [0, 64], sizes = [8, 32], strides = [1, 1]} : vector<8x128xf32> to vector<8x32xf32>
    %576 = vector.extract_strided_slice %565 {offsets = [0, 96], sizes = [8, 32], strides = [1, 1]} : vector<8x128xf32> to vector<8x32xf32>
    %577 = arith.mulf %573, %576 : vector<8x32xf32>
    %578 = arith.addf %575, %577 : vector<8x32xf32>
    %579 = math.tanh %578 : vector<8x32xf32>
    %cst_226 = arith.constant 1.000000e+00 : f32
    %580 = vector.broadcast %cst_226 : f32 to vector<8x32xf32>
    %581 = arith.subf %580, %574 : vector<8x32xf32>
    %582 = arith.mulf %581, %579 : vector<8x32xf32>
    %583 = arith.mulf %574, %490 : vector<8x32xf32>
    %584 = arith.addf %582, %583 : vector<8x32xf32>
    %585 = vector.extract_strided_slice %5 {offsets = [48, 0], sizes = [8, 128], strides = [1, 1]} : vector<64x128xf32> to vector<8x128xf32>
    %c0_227 = arith.constant 0 : index
    %c0_228 = arith.constant 0 : index
    %586 = vector.load %arg2[%c0_227, %c0_228] : memref<32x128xf32, #tpu.memory_space<vmem>>, vector<32x128xf32>
    %cst_229 = arith.constant dense<0.000000e+00> : vector<8x128xf32>
    %587 = tpu.matmul %511, %586, %cst_229 {dimension_numbers = #tpu.dot_dimension_numbers<[1], [0], [0], [1], [0, 0, 1, 1], [], []>} : vector<8x32xf32>, vector<32x128xf32>, vector<8x128xf32> -> vector<8x128xf32>
    %588 = arith.addf %585, %587 : vector<8x128xf32>
    %cst_230 = arith.constant 5.000000e-01 : f32
    %589 = vector.broadcast %cst_230 : f32 to vector<8x128xf32>
    %590 = arith.mulf %589, %588 : vector<8x128xf32>
    %591 = math.tanh %590 : vector<8x128xf32>
    %cst_231 = arith.constant 5.000000e-01 : f32
    %592 = vector.broadcast %cst_231 : f32 to vector<8x128xf32>
    %593 = arith.mulf %592, %591 : vector<8x128xf32>
    %cst_232 = arith.constant 5.000000e-01 : f32
    %594 = vector.broadcast %cst_232 : f32 to vector<8x128xf32>
    %595 = arith.addf %593, %594 : vector<8x128xf32>
    %596 = math.tanh %588 : vector<8x128xf32>
    %597 = vector.extract_strided_slice %595 {offsets = [0, 0], sizes = [8, 32], strides = [1, 1]} : vector<8x128xf32> to vector<8x32xf32>
    %598 = vector.extract_strided_slice %595 {offsets = [0, 32], sizes = [8, 32], strides = [1, 1]} : vector<8x128xf32> to vector<8x32xf32>
    %599 = vector.extract_strided_slice %596 {offsets = [0, 64], sizes = [8, 32], strides = [1, 1]} : vector<8x128xf32> to vector<8x32xf32>
    %600 = vector.extract_strided_slice %595 {offsets = [0, 96], sizes = [8, 32], strides = [1, 1]} : vector<8x128xf32> to vector<8x32xf32>
    %601 = arith.mulf %598, %509 : vector<8x32xf32>
    %602 = arith.mulf %597, %599 : vector<8x32xf32>
    %603 = arith.addf %601, %602 : vector<8x32xf32>
    %604 = math.tanh %603 : vector<8x32xf32>
    %605 = arith.mulf %600, %604 : vector<8x32xf32>
    %c0_233 = arith.constant 0 : index
    %c0_234 = arith.constant 0 : index
    %606 = vector.load %arg4[%c0_233, %c0_234] : memref<32x128xf32, #tpu.memory_space<vmem>>, vector<32x128xf32>
    %cst_235 = arith.constant dense<0.000000e+00> : vector<8x128xf32>
    %607 = tpu.matmul %605, %606, %cst_235 {dimension_numbers = #tpu.dot_dimension_numbers<[1], [0], [0], [1], [0, 0, 1, 1], [], []>} : vector<8x32xf32>, vector<32x128xf32>, vector<8x128xf32> -> vector<8x128xf32>
    %c0_236 = arith.constant 0 : index
    %c0_237 = arith.constant 0 : index
    %608 = vector.load %arg5[%c0_236, %c0_237] : memref<32x128xf32, #tpu.memory_space<vmem>>, vector<32x128xf32>
    %cst_238 = arith.constant dense<0.000000e+00> : vector<8x128xf32>
    %609 = tpu.matmul %534, %608, %cst_238 {dimension_numbers = #tpu.dot_dimension_numbers<[1], [0], [0], [1], [0, 0, 1, 1], [], []>} : vector<8x32xf32>, vector<32x128xf32>, vector<8x128xf32> -> vector<8x128xf32>
    %610 = arith.addf %607, %609 : vector<8x128xf32>
    %611 = arith.addf %610, %8 : vector<8x128xf32>
    %cst_239 = arith.constant 5.000000e-01 : f32
    %612 = vector.broadcast %cst_239 : f32 to vector<8x128xf32>
    %613 = arith.mulf %612, %611 : vector<8x128xf32>
    %614 = math.tanh %613 : vector<8x128xf32>
    %cst_240 = arith.constant 5.000000e-01 : f32
    %615 = vector.broadcast %cst_240 : f32 to vector<8x128xf32>
    %616 = arith.mulf %615, %614 : vector<8x128xf32>
    %cst_241 = arith.constant 5.000000e-01 : f32
    %617 = vector.broadcast %cst_241 : f32 to vector<8x128xf32>
    %618 = arith.addf %616, %617 : vector<8x128xf32>
    %619 = math.tanh %611 : vector<8x128xf32>
    %620 = vector.extract_strided_slice %618 {offsets = [0, 0], sizes = [8, 32], strides = [1, 1]} : vector<8x128xf32> to vector<8x32xf32>
    %621 = vector.extract_strided_slice %618 {offsets = [0, 32], sizes = [8, 32], strides = [1, 1]} : vector<8x128xf32> to vector<8x32xf32>
    %622 = vector.extract_strided_slice %619 {offsets = [0, 64], sizes = [8, 32], strides = [1, 1]} : vector<8x128xf32> to vector<8x32xf32>
    %623 = vector.extract_strided_slice %618 {offsets = [0, 96], sizes = [8, 32], strides = [1, 1]} : vector<8x128xf32> to vector<8x32xf32>
    %624 = arith.mulf %621, %532 : vector<8x32xf32>
    %625 = arith.mulf %620, %622 : vector<8x32xf32>
    %626 = arith.addf %624, %625 : vector<8x32xf32>
    %627 = math.tanh %626 : vector<8x32xf32>
    %628 = arith.mulf %623, %627 : vector<8x32xf32>
    %c0_242 = arith.constant 0 : index
    %c0_243 = arith.constant 0 : index
    %629 = vector.load %arg7[%c0_242, %c0_243] : memref<32x128xf32, #tpu.memory_space<vmem>>, vector<32x128xf32>
    %cst_244 = arith.constant dense<0.000000e+00> : vector<8x128xf32>
    %630 = tpu.matmul %628, %629, %cst_244 {dimension_numbers = #tpu.dot_dimension_numbers<[1], [0], [0], [1], [0, 0, 1, 1], [], []>} : vector<8x32xf32>, vector<32x128xf32>, vector<8x128xf32> -> vector<8x128xf32>
    %c0_245 = arith.constant 0 : index
    %c0_246 = arith.constant 0 : index
    %631 = vector.load %arg8[%c0_245, %c0_246] : memref<32x128xf32, #tpu.memory_space<vmem>>, vector<32x128xf32>
    %cst_247 = arith.constant dense<0.000000e+00> : vector<8x128xf32>
    %632 = tpu.matmul %559, %631, %cst_247 {dimension_numbers = #tpu.dot_dimension_numbers<[1], [0], [0], [1], [0, 0, 1, 1], [], []>} : vector<8x32xf32>, vector<32x128xf32>, vector<8x128xf32> -> vector<8x128xf32>
    %633 = arith.addf %630, %632 : vector<8x128xf32>
    %634 = arith.addf %633, %11 : vector<8x128xf32>
    %cst_248 = arith.constant 5.000000e-01 : f32
    %635 = vector.broadcast %cst_248 : f32 to vector<8x128xf32>
    %636 = arith.mulf %635, %634 : vector<8x128xf32>
    %637 = math.tanh %636 : vector<8x128xf32>
    %cst_249 = arith.constant 5.000000e-01 : f32
    %638 = vector.broadcast %cst_249 : f32 to vector<8x128xf32>
    %639 = arith.mulf %638, %637 : vector<8x128xf32>
    %cst_250 = arith.constant 5.000000e-01 : f32
    %640 = vector.broadcast %cst_250 : f32 to vector<8x128xf32>
    %641 = arith.addf %639, %640 : vector<8x128xf32>
    %642 = vector.extract_strided_slice %641 {offsets = [0, 0], sizes = [8, 32], strides = [1, 1]} : vector<8x128xf32> to vector<8x32xf32>
    %643 = vector.extract_strided_slice %641 {offsets = [0, 32], sizes = [8, 32], strides = [1, 1]} : vector<8x128xf32> to vector<8x32xf32>
    %644 = vector.extract_strided_slice %634 {offsets = [0, 64], sizes = [8, 32], strides = [1, 1]} : vector<8x128xf32> to vector<8x32xf32>
    %645 = vector.extract_strided_slice %634 {offsets = [0, 96], sizes = [8, 32], strides = [1, 1]} : vector<8x128xf32> to vector<8x32xf32>
    %646 = arith.mulf %642, %645 : vector<8x32xf32>
    %647 = arith.addf %644, %646 : vector<8x32xf32>
    %648 = math.tanh %647 : vector<8x32xf32>
    %cst_251 = arith.constant 1.000000e+00 : f32
    %649 = vector.broadcast %cst_251 : f32 to vector<8x32xf32>
    %650 = arith.subf %649, %643 : vector<8x32xf32>
    %651 = arith.mulf %650, %648 : vector<8x32xf32>
    %652 = arith.mulf %643, %559 : vector<8x32xf32>
    %653 = arith.addf %651, %652 : vector<8x32xf32>
    %c0_252 = arith.constant 0 : index
    %c0_253 = arith.constant 0 : index
    %654 = vector.load %arg10[%c0_252, %c0_253] : memref<32x128xf32, #tpu.memory_space<vmem>>, vector<32x128xf32>
    %cst_254 = arith.constant dense<0.000000e+00> : vector<8x128xf32>
    %655 = tpu.matmul %653, %654, %cst_254 {dimension_numbers = #tpu.dot_dimension_numbers<[1], [0], [0], [1], [0, 0, 1, 1], [], []>} : vector<8x32xf32>, vector<32x128xf32>, vector<8x128xf32> -> vector<8x128xf32>
    %c0_255 = arith.constant 0 : index
    %c0_256 = arith.constant 0 : index
    %656 = vector.load %arg11[%c0_255, %c0_256] : memref<32x128xf32, #tpu.memory_space<vmem>>, vector<32x128xf32>
    %cst_257 = arith.constant dense<0.000000e+00> : vector<8x128xf32>
    %657 = tpu.matmul %584, %656, %cst_257 {dimension_numbers = #tpu.dot_dimension_numbers<[1], [0], [0], [1], [0, 0, 1, 1], [], []>} : vector<8x32xf32>, vector<32x128xf32>, vector<8x128xf32> -> vector<8x128xf32>
    %658 = arith.addf %655, %657 : vector<8x128xf32>
    %659 = arith.addf %658, %14 : vector<8x128xf32>
    %cst_258 = arith.constant 5.000000e-01 : f32
    %660 = vector.broadcast %cst_258 : f32 to vector<8x128xf32>
    %661 = arith.mulf %660, %659 : vector<8x128xf32>
    %662 = math.tanh %661 : vector<8x128xf32>
    %cst_259 = arith.constant 5.000000e-01 : f32
    %663 = vector.broadcast %cst_259 : f32 to vector<8x128xf32>
    %664 = arith.mulf %663, %662 : vector<8x128xf32>
    %cst_260 = arith.constant 5.000000e-01 : f32
    %665 = vector.broadcast %cst_260 : f32 to vector<8x128xf32>
    %666 = arith.addf %664, %665 : vector<8x128xf32>
    %667 = vector.extract_strided_slice %666 {offsets = [0, 0], sizes = [8, 32], strides = [1, 1]} : vector<8x128xf32> to vector<8x32xf32>
    %668 = vector.extract_strided_slice %666 {offsets = [0, 32], sizes = [8, 32], strides = [1, 1]} : vector<8x128xf32> to vector<8x32xf32>
    %669 = vector.extract_strided_slice %659 {offsets = [0, 64], sizes = [8, 32], strides = [1, 1]} : vector<8x128xf32> to vector<8x32xf32>
    %670 = vector.extract_strided_slice %659 {offsets = [0, 96], sizes = [8, 32], strides = [1, 1]} : vector<8x128xf32> to vector<8x32xf32>
    %671 = arith.mulf %667, %670 : vector<8x32xf32>
    %672 = arith.addf %669, %671 : vector<8x32xf32>
    %673 = math.tanh %672 : vector<8x32xf32>
    %cst_261 = arith.constant 1.000000e+00 : f32
    %674 = vector.broadcast %cst_261 : f32 to vector<8x32xf32>
    %675 = arith.subf %674, %668 : vector<8x32xf32>
    %676 = arith.mulf %675, %673 : vector<8x32xf32>
    %677 = arith.mulf %668, %584 : vector<8x32xf32>
    %678 = arith.addf %676, %677 : vector<8x32xf32>
    %679 = vector.extract_strided_slice %5 {offsets = [56, 0], sizes = [8, 128], strides = [1, 1]} : vector<64x128xf32> to vector<8x128xf32>
    %c0_262 = arith.constant 0 : index
    %c0_263 = arith.constant 0 : index
    %680 = vector.load %arg2[%c0_262, %c0_263] : memref<32x128xf32, #tpu.memory_space<vmem>>, vector<32x128xf32>
    %cst_264 = arith.constant dense<0.000000e+00> : vector<8x128xf32>
    %681 = tpu.matmul %605, %680, %cst_264 {dimension_numbers = #tpu.dot_dimension_numbers<[1], [0], [0], [1], [0, 0, 1, 1], [], []>} : vector<8x32xf32>, vector<32x128xf32>, vector<8x128xf32> -> vector<8x128xf32>
    %682 = arith.addf %679, %681 : vector<8x128xf32>
    %cst_265 = arith.constant 5.000000e-01 : f32
    %683 = vector.broadcast %cst_265 : f32 to vector<8x128xf32>
    %684 = arith.mulf %683, %682 : vector<8x128xf32>
    %685 = math.tanh %684 : vector<8x128xf32>
    %cst_266 = arith.constant 5.000000e-01 : f32
    %686 = vector.broadcast %cst_266 : f32 to vector<8x128xf32>
    %687 = arith.mulf %686, %685 : vector<8x128xf32>
    %cst_267 = arith.constant 5.000000e-01 : f32
    %688 = vector.broadcast %cst_267 : f32 to vector<8x128xf32>
    %689 = arith.addf %687, %688 : vector<8x128xf32>
    %690 = math.tanh %682 : vector<8x128xf32>
    %691 = vector.extract_strided_slice %689 {offsets = [0, 0], sizes = [8, 32], strides = [1, 1]} : vector<8x128xf32> to vector<8x32xf32>
    %692 = vector.extract_strided_slice %689 {offsets = [0, 32], sizes = [8, 32], strides = [1, 1]} : vector<8x128xf32> to vector<8x32xf32>
    %693 = vector.extract_strided_slice %690 {offsets = [0, 64], sizes = [8, 32], strides = [1, 1]} : vector<8x128xf32> to vector<8x32xf32>
    %694 = vector.extract_strided_slice %689 {offsets = [0, 96], sizes = [8, 32], strides = [1, 1]} : vector<8x128xf32> to vector<8x32xf32>
    %695 = arith.mulf %692, %603 : vector<8x32xf32>
    %696 = arith.mulf %691, %693 : vector<8x32xf32>
    %697 = arith.addf %695, %696 : vector<8x32xf32>
    %698 = math.tanh %697 : vector<8x32xf32>
    %699 = arith.mulf %694, %698 : vector<8x32xf32>
    %c0_268 = arith.constant 0 : index
    %c0_269 = arith.constant 0 : index
    %700 = vector.load %arg4[%c0_268, %c0_269] : memref<32x128xf32, #tpu.memory_space<vmem>>, vector<32x128xf32>
    %cst_270 = arith.constant dense<0.000000e+00> : vector<8x128xf32>
    %701 = tpu.matmul %699, %700, %cst_270 {dimension_numbers = #tpu.dot_dimension_numbers<[1], [0], [0], [1], [0, 0, 1, 1], [], []>} : vector<8x32xf32>, vector<32x128xf32>, vector<8x128xf32> -> vector<8x128xf32>
    %c0_271 = arith.constant 0 : index
    %c0_272 = arith.constant 0 : index
    %702 = vector.load %arg5[%c0_271, %c0_272] : memref<32x128xf32, #tpu.memory_space<vmem>>, vector<32x128xf32>
    %cst_273 = arith.constant dense<0.000000e+00> : vector<8x128xf32>
    %703 = tpu.matmul %628, %702, %cst_273 {dimension_numbers = #tpu.dot_dimension_numbers<[1], [0], [0], [1], [0, 0, 1, 1], [], []>} : vector<8x32xf32>, vector<32x128xf32>, vector<8x128xf32> -> vector<8x128xf32>
    %704 = arith.addf %701, %703 : vector<8x128xf32>
    %705 = arith.addf %704, %8 : vector<8x128xf32>
    %cst_274 = arith.constant 5.000000e-01 : f32
    %706 = vector.broadcast %cst_274 : f32 to vector<8x128xf32>
    %707 = arith.mulf %706, %705 : vector<8x128xf32>
    %708 = math.tanh %707 : vector<8x128xf32>
    %cst_275 = arith.constant 5.000000e-01 : f32
    %709 = vector.broadcast %cst_275 : f32 to vector<8x128xf32>
    %710 = arith.mulf %709, %708 : vector<8x128xf32>
    %cst_276 = arith.constant 5.000000e-01 : f32
    %711 = vector.broadcast %cst_276 : f32 to vector<8x128xf32>
    %712 = arith.addf %710, %711 : vector<8x128xf32>
    %713 = math.tanh %705 : vector<8x128xf32>
    %714 = vector.extract_strided_slice %712 {offsets = [0, 0], sizes = [8, 32], strides = [1, 1]} : vector<8x128xf32> to vector<8x32xf32>
    %715 = vector.extract_strided_slice %712 {offsets = [0, 32], sizes = [8, 32], strides = [1, 1]} : vector<8x128xf32> to vector<8x32xf32>
    %716 = vector.extract_strided_slice %713 {offsets = [0, 64], sizes = [8, 32], strides = [1, 1]} : vector<8x128xf32> to vector<8x32xf32>
    %717 = vector.extract_strided_slice %712 {offsets = [0, 96], sizes = [8, 32], strides = [1, 1]} : vector<8x128xf32> to vector<8x32xf32>
    %718 = arith.mulf %715, %626 : vector<8x32xf32>
    %719 = arith.mulf %714, %716 : vector<8x32xf32>
    %720 = arith.addf %718, %719 : vector<8x32xf32>
    %721 = math.tanh %720 : vector<8x32xf32>
    %722 = arith.mulf %717, %721 : vector<8x32xf32>
    %c0_277 = arith.constant 0 : index
    %c0_278 = arith.constant 0 : index
    %723 = vector.load %arg7[%c0_277, %c0_278] : memref<32x128xf32, #tpu.memory_space<vmem>>, vector<32x128xf32>
    %cst_279 = arith.constant dense<0.000000e+00> : vector<8x128xf32>
    %724 = tpu.matmul %722, %723, %cst_279 {dimension_numbers = #tpu.dot_dimension_numbers<[1], [0], [0], [1], [0, 0, 1, 1], [], []>} : vector<8x32xf32>, vector<32x128xf32>, vector<8x128xf32> -> vector<8x128xf32>
    %c0_280 = arith.constant 0 : index
    %c0_281 = arith.constant 0 : index
    %725 = vector.load %arg8[%c0_280, %c0_281] : memref<32x128xf32, #tpu.memory_space<vmem>>, vector<32x128xf32>
    %cst_282 = arith.constant dense<0.000000e+00> : vector<8x128xf32>
    %726 = tpu.matmul %653, %725, %cst_282 {dimension_numbers = #tpu.dot_dimension_numbers<[1], [0], [0], [1], [0, 0, 1, 1], [], []>} : vector<8x32xf32>, vector<32x128xf32>, vector<8x128xf32> -> vector<8x128xf32>
    %727 = arith.addf %724, %726 : vector<8x128xf32>
    %728 = arith.addf %727, %11 : vector<8x128xf32>
    %cst_283 = arith.constant 5.000000e-01 : f32
    %729 = vector.broadcast %cst_283 : f32 to vector<8x128xf32>
    %730 = arith.mulf %729, %728 : vector<8x128xf32>
    %731 = math.tanh %730 : vector<8x128xf32>
    %cst_284 = arith.constant 5.000000e-01 : f32
    %732 = vector.broadcast %cst_284 : f32 to vector<8x128xf32>
    %733 = arith.mulf %732, %731 : vector<8x128xf32>
    %cst_285 = arith.constant 5.000000e-01 : f32
    %734 = vector.broadcast %cst_285 : f32 to vector<8x128xf32>
    %735 = arith.addf %733, %734 : vector<8x128xf32>
    %736 = vector.extract_strided_slice %735 {offsets = [0, 0], sizes = [8, 32], strides = [1, 1]} : vector<8x128xf32> to vector<8x32xf32>
    %737 = vector.extract_strided_slice %735 {offsets = [0, 32], sizes = [8, 32], strides = [1, 1]} : vector<8x128xf32> to vector<8x32xf32>
    %738 = vector.extract_strided_slice %728 {offsets = [0, 64], sizes = [8, 32], strides = [1, 1]} : vector<8x128xf32> to vector<8x32xf32>
    %739 = vector.extract_strided_slice %728 {offsets = [0, 96], sizes = [8, 32], strides = [1, 1]} : vector<8x128xf32> to vector<8x32xf32>
    %740 = arith.mulf %736, %739 : vector<8x32xf32>
    %741 = arith.addf %738, %740 : vector<8x32xf32>
    %742 = math.tanh %741 : vector<8x32xf32>
    %cst_286 = arith.constant 1.000000e+00 : f32
    %743 = vector.broadcast %cst_286 : f32 to vector<8x32xf32>
    %744 = arith.subf %743, %737 : vector<8x32xf32>
    %745 = arith.mulf %744, %742 : vector<8x32xf32>
    %746 = arith.mulf %737, %653 : vector<8x32xf32>
    %747 = arith.addf %745, %746 : vector<8x32xf32>
    %c0_287 = arith.constant 0 : index
    %c0_288 = arith.constant 0 : index
    %748 = vector.load %arg10[%c0_287, %c0_288] : memref<32x128xf32, #tpu.memory_space<vmem>>, vector<32x128xf32>
    %cst_289 = arith.constant dense<0.000000e+00> : vector<8x128xf32>
    %749 = tpu.matmul %747, %748, %cst_289 {dimension_numbers = #tpu.dot_dimension_numbers<[1], [0], [0], [1], [0, 0, 1, 1], [], []>} : vector<8x32xf32>, vector<32x128xf32>, vector<8x128xf32> -> vector<8x128xf32>
    %c0_290 = arith.constant 0 : index
    %c0_291 = arith.constant 0 : index
    %750 = vector.load %arg11[%c0_290, %c0_291] : memref<32x128xf32, #tpu.memory_space<vmem>>, vector<32x128xf32>
    %cst_292 = arith.constant dense<0.000000e+00> : vector<8x128xf32>
    %751 = tpu.matmul %678, %750, %cst_292 {dimension_numbers = #tpu.dot_dimension_numbers<[1], [0], [0], [1], [0, 0, 1, 1], [], []>} : vector<8x32xf32>, vector<32x128xf32>, vector<8x128xf32> -> vector<8x128xf32>
    %752 = arith.addf %749, %751 : vector<8x128xf32>
    %753 = arith.addf %752, %14 : vector<8x128xf32>
    %cst_293 = arith.constant 5.000000e-01 : f32
    %754 = vector.broadcast %cst_293 : f32 to vector<8x128xf32>
    %755 = arith.mulf %754, %753 : vector<8x128xf32>
    %756 = math.tanh %755 : vector<8x128xf32>
    %cst_294 = arith.constant 5.000000e-01 : f32
    %757 = vector.broadcast %cst_294 : f32 to vector<8x128xf32>
    %758 = arith.mulf %757, %756 : vector<8x128xf32>
    %cst_295 = arith.constant 5.000000e-01 : f32
    %759 = vector.broadcast %cst_295 : f32 to vector<8x128xf32>
    %760 = arith.addf %758, %759 : vector<8x128xf32>
    %761 = vector.extract_strided_slice %760 {offsets = [0, 0], sizes = [8, 32], strides = [1, 1]} : vector<8x128xf32> to vector<8x32xf32>
    %762 = vector.extract_strided_slice %760 {offsets = [0, 32], sizes = [8, 32], strides = [1, 1]} : vector<8x128xf32> to vector<8x32xf32>
    %763 = vector.extract_strided_slice %753 {offsets = [0, 64], sizes = [8, 32], strides = [1, 1]} : vector<8x128xf32> to vector<8x32xf32>
    %764 = vector.extract_strided_slice %753 {offsets = [0, 96], sizes = [8, 32], strides = [1, 1]} : vector<8x128xf32> to vector<8x32xf32>
    %765 = arith.mulf %761, %764 : vector<8x32xf32>
    %766 = arith.addf %763, %765 : vector<8x32xf32>
    %767 = math.tanh %766 : vector<8x32xf32>
    %cst_296 = arith.constant 1.000000e+00 : f32
    %768 = vector.broadcast %cst_296 : f32 to vector<8x32xf32>
    %769 = arith.subf %768, %762 : vector<8x32xf32>
    %770 = arith.mulf %769, %767 : vector<8x32xf32>
    %771 = arith.mulf %762, %678 : vector<8x32xf32>
    %772 = arith.addf %770, %771 : vector<8x32xf32>
    %c0_297 = arith.constant 0 : index
    %c0_298 = arith.constant 0 : index
    %773 = vector.load %arg13[%c0_297, %c0_298] : memref<32x128xf32, #tpu.memory_space<vmem>>, vector<32x128xf32>
    %cst_299 = arith.constant dense<0.000000e+00> : vector<8x128xf32>
    %774 = tpu.matmul %772, %773, %cst_299 {dimension_numbers = #tpu.dot_dimension_numbers<[1], [0], [0], [1], [0, 0, 1, 1], [], []>} : vector<8x32xf32>, vector<32x128xf32>, vector<8x128xf32> -> vector<8x128xf32>
    %c0_300 = arith.constant 0 : index
    %c0_301 = arith.constant 0 : index
    %775 = vector.load %arg14[%c0_300, %c0_301] : memref<1x128xf32, #tpu.memory_space<vmem>>, vector<1x128xf32>
    %776 = vector.broadcast %775 : vector<1x128xf32> to vector<8x128xf32>
    %777 = arith.addf %774, %776 : vector<8x128xf32>
    %cst_302 = arith.constant 0.000000e+00 : f32
    %778 = vector.broadcast %cst_302 : f32 to vector<8x128xf32>
    %779 = arith.maximumf %777, %778 : vector<8x128xf32>
    %c0_303 = arith.constant 0 : index
    %c0_304 = arith.constant 0 : index
    %780 = vector.load %arg15[%c0_303, %c0_304] : memref<128x128xf32, #tpu.memory_space<vmem>>, vector<128x128xf32>
    %cst_305 = arith.constant dense<0.000000e+00> : vector<8x128xf32>
    %781 = tpu.matmul %779, %780, %cst_305 {dimension_numbers = #tpu.dot_dimension_numbers<[1], [0], [0], [1], [0, 0, 1, 1], [], []>} : vector<8x128xf32>, vector<128x128xf32>, vector<8x128xf32> -> vector<8x128xf32>
    %c0_306 = arith.constant 0 : index
    %c0_307 = arith.constant 0 : index
    %782 = vector.load %arg16[%c0_306, %c0_307] : memref<1x128xf32, #tpu.memory_space<vmem>>, vector<1x128xf32>
    %783 = vector.broadcast %782 : vector<1x128xf32> to vector<8x128xf32>
    %784 = arith.addf %781, %783 : vector<8x128xf32>
    %c0_308 = arith.constant 0 : index
    %c0_309 = arith.constant 0 : index
    %785 = vector.load %arg17[%c0_308, %c0_309] : memref<8x128xf32, #tpu.memory_space<vmem>>, vector<8x128xf32>
    tpu.vector_store %arg17[%c0_308, %c0_309], %784 {strides = array<i32>} : memref<8x128xf32, #tpu.memory_space<vmem>>, vector<8x128xf32>,
    return
  }
}

</mosaic_0001>

<llo_original>
// kernel: _lambda_.1
$region0: #{_lambda_.1}
  #allocation0 [shape = 'u32[]', space=smem, size = 0x4, offset = 0x4, fixed_abs, tag = 'smem constant byte address 0x4 - core index']
  #allocation1 [shape = 'u32[72,128]{1,0:T(1,128)}', space=vmem, size = 0x9000, scoped, tag = 'internal scratch']
  %s0 = inlined_call_operand.vmem [shape: f32[64,8], index: 0, kind: input, shape index: {}]
  %s1 = inlined_call_operand.vmem [shape: f32[8,128], index: 1, kind: input, shape index: {}]
  %s2 = inlined_call_operand.hbm [shape: f32[32,128], index: 2, kind: input, shape index: {}]
  %s3 = inlined_call_operand.vmem [shape: f32[1,128], index: 3, kind: input, shape index: {}]
  %s4 = inlined_call_operand.hbm [shape: f32[32,128], index: 4, kind: input, shape index: {}]
  %s5 = inlined_call_operand.hbm [shape: f32[32,128], index: 5, kind: input, shape index: {}]
  %s6 = inlined_call_operand.vmem [shape: f32[1,128], index: 6, kind: input, shape index: {}]
  %s7 = inlined_call_operand.hbm [shape: f32[32,128], index: 7, kind: input, shape index: {}]
  %s8 = inlined_call_operand.hbm [shape: f32[32,128], index: 8, kind: input, shape index: {}]
  %s9 = inlined_call_operand.vmem [shape: f32[1,128], index: 9, kind: input, shape index: {}]
  %s10 = inlined_call_operand.vmem [shape: f32[32,128], index: 10, kind: input, shape index: {}]
  %s11 = inlined_call_operand.vmem [shape: f32[32,128], index: 11, kind: input, shape index: {}]
  %s12 = inlined_call_operand.vmem [shape: f32[1,128], index: 12, kind: input, shape index: {}]
  %s13 = inlined_call_operand.vmem [shape: f32[32,128], index: 13, kind: input, shape index: {}]
  %s14 = inlined_call_operand.vmem [shape: f32[1,128], index: 14, kind: input, shape index: {}]
  %s15 = inlined_call_operand.hbm [shape: f32[128,128], index: 15, kind: input, shape index: {}]
  %s16 = inlined_call_operand.vmem [shape: f32[1,128], index: 16, kind: input, shape index: {}]
  %s17 = inlined_call_operand.vmem [shape: f32[8,128], index: 17, kind: output, shape index: {}]
  %s18 = sld [smem:[#allocation0]]
  $region102: #{_lambda_.1} parent=0
    _
  %s20 = ssub.s32 1, %s18
  %s21 = scalar_select 0, %s20, %s18
  $region1: #{_lambda_.1} parent=0
    #allocation2 [shape = 'u8[16384]{0}', space=vmem, size = 0x4000, scoped, tag = 'input window, operand 2, single buffered']
    #allocation3 [shape = 's32[1]{0}', space=sflag, size = 0x4, scoped, tag = 'scoped memory for _lambda_.1']
    #allocation4 [shape = 'u8[16384]{0}', space=vmem, size = 0x4000, scoped, tag = 'input window, operand 4, single buffered']
    #allocation5 [shape = 's32[1]{0}', space=sflag, size = 0x4, scoped, tag = 'scoped memory for _lambda_.1']
    #allocation6 [shape = 'u8[16384]{0}', space=vmem, size = 0x4000, scoped, tag = 'input window, operand 5, single buffered']
    #allocation7 [shape = 'u8[16384]{0}', space=vmem, size = 0x4000, scoped, tag = 'input window, operand 7, single buffered']
    #allocation8 [shape = 's32[1]{0}', space=sflag, size = 0x4, scoped, tag = 'scoped memory for _lambda_.1']
    #allocation9 [shape = 'u8[16384]{0}', space=vmem, size = 0x4000, scoped, tag = 'input window, operand 8, single buffered']
    #allocation10 [shape = 'u8[65536]{0}', space=vmem, size = 0x10000, scoped, tag = 'input window, operand 15, single buffered']
    #allocation11 [shape = 's32[1]{0}', space=sflag, size = 0x4, scoped, tag = 'scoped memory for _lambda_.1']
    %22 = vsyncpa [#allocation3], 0
    %23 = vsyncpa [#allocation5], 0
    %24 = vsyncpa [#allocation8], 0
    %25 = vsyncpa [#allocation11], 0
    // Predicated region
    $region2: #{_lambda_.1} parent=1 // pred_check
      _
    $region3: #{_lambda_.1} parent=1 // pred_check_branch
      %27 = sbr.rel (0) target = $region5
    $region4: #{_lambda_.1} parent=1 // pred_region
      _
    $region5: #{_lambda_.1} parent=1 // pred_fallthru
      _
    // Predicated region
    $region6: #{_lambda_.1} parent=1 // pred_check
      _
    $region7: #{_lambda_.1} parent=1 // pred_check_branch
      %29 = sbr.rel (0) target = $region9
    $region8: #{_lambda_.1} parent=1 // pred_region
      _
    $region9: #{_lambda_.1} parent=1 // pred_fallthru
      _
    // Predicated region
    $region10: #{_lambda_.1} parent=1 // pred_check
      _
    $region11: #{_lambda_.1} parent=1 // pred_check_branch
      %31 = sbr.rel (0) target = $region13
    $region12: #{_lambda_.1} parent=1 // pred_region
      %33 = vsyncadd [#allocation3], 0
      %s34 = sshll.u32 %s2, 4
      %s35 = int_to_ptr.hbm [resolvable:$true] %s34
      %s36 = sshll.u32 [#allocation2], 4
      %s37 = int_to_ptr.vmem [resolvable:$true] %s36
      %42 = dma.hbm_to_vmem [thread:$0]  %s35, 512, %s37, [#allocation3], 128, 128, 8
    $region13: #{_lambda_.1} parent=1 // pred_fallthru
      _
    // Predicated region
    $region14: #{_lambda_.1} parent=1 // pred_check
      _
    $region15: #{_lambda_.1} parent=1 // pred_check_branch
      %44 = sbr.rel (0) target = $region17
    $region16: #{_lambda_.1} parent=1 // pred_region
      _
    $region17: #{_lambda_.1} parent=1 // pred_fallthru
      _
    // Predicated region
    $region18: #{_lambda_.1} parent=1 // pred_check
      _
    $region19: #{_lambda_.1} parent=1 // pred_check_branch
      %46 = sbr.rel (0) target = $region21
    $region20: #{_lambda_.1} parent=1 // pred_region
      %48 = vsyncadd [#allocation5], 0
      %s49 = sshll.u32 %s4, 4
      %s50 = int_to_ptr.hbm [resolvable:$true] %s49
      %s51 = sshll.u32 [#allocation4], 4
      %s52 = int_to_ptr.vmem [resolvable:$true] %s51
      %57 = dma.hbm_to_vmem [thread:$0]  %s50, 512, %s52, [#allocation5], 128, 128, 8
    $region21: #{_lambda_.1} parent=1 // pred_fallthru
      _
    // Predicated region
    $region22: #{_lambda_.1} parent=1 // pred_check
      _
    $region23: #{_lambda_.1} parent=1 // pred_check_branch
      %59 = sbr.rel (0) target = $region25
    $region24: #{_lambda_.1} parent=1 // pred_region
      %61 = vsyncadd [#allocation5], 0
      %s62 = sshll.u32 %s5, 4
      %s63 = int_to_ptr.hbm [resolvable:$true] %s62
      %s64 = sshll.u32 [#allocation6], 4
      %s65 = int_to_ptr.vmem [resolvable:$true] %s64
      %70 = dma.hbm_to_vmem [thread:$0]  %s63, 512, %s65, [#allocation5], 128, 128, 8
    $region25: #{_lambda_.1} parent=1 // pred_fallthru
      _
    // Predicated region
    $region26: #{_lambda_.1} parent=1 // pred_check
      _
    $region27: #{_lambda_.1} parent=1 // pred_check_branch
      %72 = sbr.rel (0) target = $region29
    $region28: #{_lambda_.1} parent=1 // pred_region
      _
    $region29: #{_lambda_.1} parent=1 // pred_fallthru
      _
    // Predicated region
    $region30: #{_lambda_.1} parent=1 // pred_check
      _
    $region31: #{_lambda_.1} parent=1 // pred_check_branch
      %74 = sbr.rel (0) target = $region33
    $region32: #{_lambda_.1} parent=1 // pred_region
      %76 = vsyncadd [#allocation8], 0
      %s77 = sshll.u32 %s7, 4
      %s78 = int_to_ptr.hbm [resolvable:$true] %s77
      %s79 = sshll.u32 [#allocation7], 4
      %s80 = int_to_ptr.vmem [resolvable:$true] %s79
      %85 = dma.hbm_to_vmem [thread:$0]  %s78, 512, %s80, [#allocation8], 128, 128, 8
    $region33: #{_lambda_.1} parent=1 // pred_fallthru
      _
    // Predicated region
    $region34: #{_lambda_.1} parent=1 // pred_check
      _
    $region35: #{_lambda_.1} parent=1 // pred_check_branch
      %87 = sbr.rel (0) target = $region37
    $region36: #{_lambda_.1} parent=1 // pred_region
      %89 = vsyncadd [#allocation8], 0
      %s90 = sshll.u32 %s8, 4
      %s91 = int_to_ptr.hbm [resolvable:$true] %s90
      %s92 = sshll.u32 [#allocation9], 4
      %s93 = int_to_ptr.vmem [resolvable:$true] %s92
      %98 = dma.hbm_to_vmem [thread:$0]  %s91, 512, %s93, [#allocation8], 128, 128, 8
    $region37: #{_lambda_.1} parent=1 // pred_fallthru
      _
    // Predicated region
    $region38: #{_lambda_.1} parent=1 // pred_check
      _
    $region39: #{_lambda_.1} parent=1 // pred_check_branch
      %100 = sbr.rel (0) target = $region41
    $region40: #{_lambda_.1} parent=1 // pred_region
      _
    $region41: #{_lambda_.1} parent=1 // pred_fallthru
      _
    // Predicated region
    $region42: #{_lambda_.1} parent=1 // pred_check
      _
    $region43: #{_lambda_.1} parent=1 // pred_check_branch
      %102 = sbr.rel (0) target = $region45
    $region44: #{_lambda_.1} parent=1 // pred_region
      _
    $region45: #{_lambda_.1} parent=1 // pred_fallthru
      _
    // Predicated region
    $region46: #{_lambda_.1} parent=1 // pred_check
      _
    $region47: #{_lambda_.1} parent=1 // pred_check_branch
      %104 = sbr.rel (0) target = $region49
    $region48: #{_lambda_.1} parent=1 // pred_region
      _
    $region49: #{_lambda_.1} parent=1 // pred_fallthru
      _
    // Predicated region
    $region50: #{_lambda_.1} parent=1 // pred_check
      _
    $region51: #{_lambda_.1} parent=1 // pred_check_branch
      %106 = sbr.rel (0) target = $region53
    $region52: #{_lambda_.1} parent=1 // pred_region
      _
    $region53: #{_lambda_.1} parent=1 // pred_fallthru
      _
    // Predicated region
    $region54: #{_lambda_.1} parent=1 // pred_check
      _
    $region55: #{_lambda_.1} parent=1 // pred_check_branch
      %108 = sbr.rel (0) target = $region57
    $region56: #{_lambda_.1} parent=1 // pred_region
      _
    $region57: #{_lambda_.1} parent=1 // pred_fallthru
      _
    // Predicated region
    $region58: #{_lambda_.1} parent=1 // pred_check
      _
    $region59: #{_lambda_.1} parent=1 // pred_check_branch
      %110 = sbr.rel (0) target = $region61
    $region60: #{_lambda_.1} parent=1 // pred_region
      _
    $region61: #{_lambda_.1} parent=1 // pred_fallthru
      _
    // Predicated region
    $region62: #{_lambda_.1} parent=1 // pred_check
      _
    $region63: #{_lambda_.1} parent=1 // pred_check_branch
      %112 = sbr.rel (0) target = $region65
    $region64: #{_lambda_.1} parent=1 // pred_region
      %114 = vsyncadd [#allocation11], 0
      %s115 = sshll.u32 %s15, 4
      %s116 = int_to_ptr.hbm [resolvable:$true] %s115
      %s117 = sshll.u32 [#allocation10], 4
      %s118 = int_to_ptr.vmem [resolvable:$true] %s117
      %123 = dma.hbm_to_vmem [thread:$0]  %s116, 2048, %s118, [#allocation11], 128, 128, 8
    $region65: #{_lambda_.1} parent=1 // pred_fallthru
      _
    // Predicated region
    $region66: #{_lambda_.1} parent=1 // pred_check
      _
    $region67: #{_lambda_.1} parent=1 // pred_check_branch
      %125 = sbr.rel (0) target = $region69
    $region68: #{_lambda_.1} parent=1 // pred_region
      _
    $region69: #{_lambda_.1} parent=1 // pred_fallthru
      _
    // Predicated region
    $region70: #{_lambda_.1} parent=1 // pred_check
      _
    $region71: #{_lambda_.1} parent=1 // pred_check_branch
      %127 = sbr.rel (0) target = $region73
    $region72: #{_lambda_.1} parent=1 // pred_region
      %129 = dma.done [#allocation3], 512
    $region73: #{_lambda_.1} parent=1 // pred_fallthru
      _
    // Predicated region
    $region74: #{_lambda_.1} parent=1 // pred_check
      _
    $region75: #{_lambda_.1} parent=1 // pred_check_branch
      %131 = sbr.rel (0) target = $region77
    $region76: #{_lambda_.1} parent=1 // pred_region
      %133 = dma.done [#allocation5], 512
    $region77: #{_lambda_.1} parent=1 // pred_fallthru
      _
    // Predicated region
    $region78: #{_lambda_.1} parent=1 // pred_check
      _
    $region79: #{_lambda_.1} parent=1 // pred_check_branch
      %135 = sbr.rel (0) target = $region81
    $region80: #{_lambda_.1} parent=1 // pred_region
      %137 = dma.done [#allocation5], 512
    $region81: #{_lambda_.1} parent=1 // pred_fallthru
      _
    // Predicated region
    $region82: #{_lambda_.1} parent=1 // pred_check
      _
    $region83: #{_lambda_.1} parent=1 // pred_check_branch
      %139 = sbr.rel (0) target = $region85
    $region84: #{_lambda_.1} parent=1 // pred_region
      %141 = dma.done [#allocation8], 512
    $region85: #{_lambda_.1} parent=1 // pred_fallthru
      _
    // Predicated region
    $region86: #{_lambda_.1} parent=1 // pred_check
      _
    $region87: #{_lambda_.1} parent=1 // pred_check_branch
      %143 = sbr.rel (0) target = $region89
    $region88: #{_lambda_.1} parent=1 // pred_region
      %145 = dma.done [#allocation8], 512
    $region89: #{_lambda_.1} parent=1 // pred_fallthru
      _
    // Predicated region
    $region90: #{_lambda_.1} parent=1 // pred_check
      _
    $region91: #{_lambda_.1} parent=1 // pred_check_branch
      %147 = sbr.rel (0) target = $region93
    $region92: #{_lambda_.1} parent=1 // pred_region
      %149 = dma.done [#allocation11], 2048
    $region93: #{_lambda_.1} parent=1 // pred_fallthru
      _
    %v150 = vld [vmem:[%s0] sm:$0xff]
    %v151 = vld [vmem:[%s0 + $0x8] sm:$0xff]
    %v152 = vld [vmem:[%s0 + $0x10] sm:$0xff]
    %v153 = vld [vmem:[%s0 + $0x18] sm:$0xff]
    %v154 = vld [vmem:[%s0 + $0x20] sm:$0xff]
    %v155 = vld [vmem:[%s0 + $0x28] sm:$0xff]
    %v156 = vld [vmem:[%s0 + $0x30] sm:$0xff]
    %v157 = vld [vmem:[%s0 + $0x38] sm:$0xff]
    %v158 = vld [vmem:[%s1] sm:$0xff]
    %v159 = vld [vmem:[%s3] sm:$0x1]
    %v161 = vperm.slane %v159, 0
    %vm163 = vcmask 64512
    %v165 = vsel %vm163, %v150, 0
    %v168 = vsel %vm163, %v151, 0
    %v171 = vsel %vm163, %v152, 0
    %v174 = vsel %vm163, %v153, 0
    %v177 = vsel %vm163, %v154, 0
    %v180 = vsel %vm163, %v155, 0
    %v183 = vsel %vm163, %v156, 0
    %v186 = vsel %vm163, %v157, 0
    %188 = vmatpush.msra.mxu0 0.0
    %189 = vmatpush.msra.mxu0 0.0
    %190 = vmatpush.msra.mxu0 0.0
    %191 = vmatpush.msra.mxu0 0.0
    %192 = vmatpush.msra.mxu0 0.0
    %193 = vmatpush.msra.mxu0 0.0
    %194 = vmatpush.msra.mxu0 0.0
    %195 = vmatpush.msra.mxu0 0.0
    %196 = vmatpush.msra.mxu0 0.0
    %197 = vmatpush.msra.mxu0 0.0
    %198 = vmatpush.msra.mxu0 0.0
    %199 = vmatpush.msra.mxu0 0.0
    %200 = vmatpush.msra.mxu0 0.0
    %201 = vmatpush.msra.mxu0 0.0
    %202 = vmatpush.msra.mxu0 0.0
    %203 = vmatpush.msra.mxu0 %v158
    %204 = vmatmul.f32.gmra.mxu0 %v165
    %v205 = vpop.f32.mrf.mxu0
    %v206 = vadd.f32 %v161, %v205
    %207 = vmatmul.f32.gmra.mxu0 %v168
    %v208 = vpop.f32.mrf.mxu0
    %v209 = vadd.f32 %v161, %v208
    %210 = vmatmul.f32.gmra.mxu0 %v171
    %v211 = vpop.f32.mrf.mxu0
    %v212 = vadd.f32 %v161, %v211
    %213 = vmatmul.f32.gmra.mxu0 %v174
    %v214 = vpop.f32.mrf.mxu0
    %v215 = vadd.f32 %v161, %v214
    %216 = vmatmul.f32.gmra.mxu0 %v177
    %v217 = vpop.f32.mrf.mxu0
    %v218 = vadd.f32 %v161, %v217
    %219 = vmatmul.f32.gmra.mxu0 %v180
    %v220 = vpop.f32.mrf.mxu0
    %v221 = vadd.f32 %v161, %v220
    %222 = vmatmul.f32.gmra.mxu0 %v183
    %v223 = vpop.f32.mrf.mxu0
    %v224 = vadd.f32 %v161, %v223
    %225 = vmatmul.f32.gmra.mxu0 %v186
    %v226 = vpop.f32.mrf.mxu0
    %v227 = vadd.f32 %v161, %v226
    %228 = vdwg.mxu0
    %v229 = vld [vmem:[%s6] sm:$0x1]
    %v231 = vperm.slane %v229, 0
    %v233 = vld [vmem:[%s9] sm:$0x1]
    %v235 = vperm.slane %v233, 0
    %v237 = vld [vmem:[%s12] sm:$0x1]
    %v239 = vperm.slane %v237, 0
    %v241 = vld [vmem:[#allocation2] sm:$0xff]
    %v242 = vld [vmem:[#allocation2 + $0x8] sm:$0xff]
    %v243 = vld [vmem:[#allocation2 + $0x10] sm:$0xff]
    %v244 = vld [vmem:[#allocation2 + $0x18] sm:$0xff]
    %vm245 = vcmask 261120
    %v247 = vsel %vm245, 0.0, 0
    %249 = vmatpush.msra.mxu0 0.0
    %250 = vmatpush.msra.mxu0 0.0
    %251 = vmatpush.msra.mxu0 0.0
    %252 = vmatpush.msra.mxu0 0.0
    %253 = vmatpush.msra.mxu0 0.0
    %254 = vmatpush.msra.mxu0 0.0
    %255 = vmatpush.msra.mxu0 0.0
    %256 = vmatpush.msra.mxu0 0.0
    %257 = vmatpush.msra.mxu0 0.0
    %258 = vmatpush.msra.mxu0 0.0
    %259 = vmatpush.msra.mxu0 0.0
    %260 = vmatpush.msra.mxu0 0.0
    %261 = vmatpush.msra.mxu0 %v244
    %262 = vmatpush.msra.mxu0 %v243
    %263 = vmatpush.msra.mxu0 %v242
    %264 = vmatpush.msra.mxu0 %v241
    %265 = vmatmul.f32.gmra.mxu0 %v247
    %v266 = vpop.f32.mrf.mxu0
    %v267 = vadd.f32 0.0, %v266
    %268 = vdwg.mxu0
    %v269 = vadd.f32 %v206, %v267
    %v270 = vmul.f32 %v269, 0.5
    %v271 = vtanh.pop %v270
    %v272 = vmul.f32 %v271, 0.5
    %v273 = vadd.f32 %v272, 0.5
    %v274 = vtanh.pop %v269
    %v275 = vmul.f32 %v273, 0.0
    %277 = vrot.lane.b32.xlu0 %v274, 64
    %v278 = vpop.permute.xlu0 %277
    %v280 = vmul.f32 %v273, %v278
    %282 = vrot.lane.b32.xlu0 %v280, 32
    %v283 = vpop.permute.xlu0 %282
    %v285 = vadd.f32 %v275, %v283
    %v286 = vtanh.pop %v285
    %288 = vrot.lane.b32.xlu0 %v286, 64
    %v289 = vpop.permute.xlu0 %288
    %v291 = vmul.f32 %v273, %v289
    %v292 = vld [vmem:[#allocation4] sm:$0xff]
    %v293 = vld [vmem:[#allocation4 + $0x8] sm:$0xff]
    %v294 = vld [vmem:[#allocation4 + $0x10] sm:$0xff]
    %v295 = vld [vmem:[#allocation4 + $0x18] sm:$0xff]
    %v296 = vld [vmem:[#allocation6] sm:$0xff]
    %v297 = vld [vmem:[#allocation6 + $0x8] sm:$0xff]
    %v298 = vld [vmem:[#allocation6 + $0x10] sm:$0xff]
    %v299 = vld [vmem:[#allocation6 + $0x18] sm:$0xff]
    %300 = vmatpush.msra.mxu0 0.0
    %301 = vmatpush.msra.mxu0 0.0
    %302 = vmatpush.msra.mxu0 0.0
    %303 = vmatpush.msra.mxu0 0.0
    %304 = vmatpush.msra.mxu0 0.0
    %305 = vmatpush.msra.mxu0 0.0
    %306 = vmatpush.msra.mxu0 0.0
    %307 = vmatpush.msra.mxu0 0.0
    %308 = vmatpush.msra.mxu0 0.0
    %309 = vmatpush.msra.mxu0 0.0
    %310 = vmatpush.msra.mxu0 0.0
    %311 = vmatpush.msra.mxu0 0.0
    %312 = vmatpush.msra.mxu0 %v299
    %313 = vmatpush.msra.mxu0 %v298
    %314 = vmatpush.msra.mxu0 %v297
    %315 = vmatpush.msra.mxu0 %v296
    %316 = vmatmul.f32.gmra.mxu0 %v247
    %v317 = vpop.f32.mrf.mxu0
    %v318 = vadd.f32 0.0, %v317
    %319 = vdwg.mxu0
    %321 = vrot.lane.b32.xlu0 %v291, 32
    %v322 = vpop.permute.xlu0 %321
    %v323 = vsel %vm245, %v322, 0
    %325 = vmatpush.msra.mxu0 0.0
    %326 = vmatpush.msra.mxu0 0.0
    %327 = vmatpush.msra.mxu0 0.0
    %328 = vmatpush.msra.mxu0 0.0
    %329 = vmatpush.msra.mxu0 0.0
    %330 = vmatpush.msra.mxu0 0.0
    %331 = vmatpush.msra.mxu0 0.0
    %332 = vmatpush.msra.mxu0 0.0
    %333 = vmatpush.msra.mxu0 0.0
    %334 = vmatpush.msra.mxu0 0.0
    %335 = vmatpush.msra.mxu0 0.0
    %336 = vmatpush.msra.mxu0 0.0
    %337 = vmatpush.msra.mxu0 %v295
    %338 = vmatpush.msra.mxu0 %v294
    %339 = vmatpush.msra.mxu0 %v293
    %340 = vmatpush.msra.mxu0 %v292
    %341 = vmatmul.f32.gmra.mxu0 %v323
    %v342 = vpop.f32.mrf.mxu0
    %v343 = vadd.f32 %v318, %v342
    %344 = vdwg.mxu0
    %v345 = vadd.f32 %v343, %v231
    %v346 = vmul.f32 %v345, 0.5
    %v347 = vtanh.pop %v346
    %v348 = vmul.f32 %v347, 0.5
    %v349 = vadd.f32 %v348, 0.5
    %v350 = vtanh.pop %v345
    %v351 = vmul.f32 %v349, 0.0
    %353 = vrot.lane.b32.xlu0 %v350, 64
    %v354 = vpop.permute.xlu0 %353
    %v356 = vmul.f32 %v349, %v354
    %358 = vrot.lane.b32.xlu0 %v356, 32
    %v359 = vpop.permute.xlu0 %358
    %v361 = vadd.f32 %v351, %v359
    %v362 = vtanh.pop %v361
    %364 = vrot.lane.b32.xlu0 %v362, 64
    %v365 = vpop.permute.xlu0 %364
    %v367 = vmul.f32 %v349, %v365
    %v368 = vld [vmem:[#allocation7] sm:$0xff]
    %v369 = vld [vmem:[#allocation7 + $0x8] sm:$0xff]
    %v370 = vld [vmem:[#allocation7 + $0x10] sm:$0xff]
    %v371 = vld [vmem:[#allocation7 + $0x18] sm:$0xff]
    %v372 = vld [vmem:[#allocation9] sm:$0xff]
    %v373 = vld [vmem:[#allocation9 + $0x8] sm:$0xff]
    %v374 = vld [vmem:[#allocation9 + $0x10] sm:$0xff]
    %v375 = vld [vmem:[#allocation9 + $0x18] sm:$0xff]
    %376 = vmatpush.msra.mxu0 0.0
    %377 = vmatpush.msra.mxu0 0.0
    %378 = vmatpush.msra.mxu0 0.0
    %379 = vmatpush.msra.mxu0 0.0
    %380 = vmatpush.msra.mxu0 0.0
    %381 = vmatpush.msra.mxu0 0.0
    %382 = vmatpush.msra.mxu0 0.0
    %383 = vmatpush.msra.mxu0 0.0
    %384 = vmatpush.msra.mxu0 0.0
    %385 = vmatpush.msra.mxu0 0.0
    %386 = vmatpush.msra.mxu0 0.0
    %387 = vmatpush.msra.mxu0 0.0
    %388 = vmatpush.msra.mxu0 %v375
    %389 = vmatpush.msra.mxu0 %v374
    %390 = vmatpush.msra.mxu0 %v373
    %391 = vmatpush.msra.mxu0 %v372
    %392 = vmatmul.f32.gmra.mxu0 %v247
    %v393 = vpop.f32.mrf.mxu0
    %v394 = vadd.f32 0.0, %v393
    %395 = vdwg.mxu0
    %397 = vrot.lane.b32.xlu0 %v367, 32
    %v398 = vpop.permute.xlu0 %397
    %v399 = vsel %vm245, %v398, 0
    %401 = vmatpush.msra.mxu0 0.0
    %402 = vmatpush.msra.mxu0 0.0
    %403 = vmatpush.msra.mxu0 0.0
    %404 = vmatpush.msra.mxu0 0.0
    %405 = vmatpush.msra.mxu0 0.0
    %406 = vmatpush.msra.mxu0 0.0
    %407 = vmatpush.msra.mxu0 0.0
    %408 = vmatpush.msra.mxu0 0.0
    %409 = vmatpush.msra.mxu0 0.0
    %410 = vmatpush.msra.mxu0 0.0
    %411 = vmatpush.msra.mxu0 0.0
    %412 = vmatpush.msra.mxu0 0.0
    %413 = vmatpush.msra.mxu0 %v371
    %414 = vmatpush.msra.mxu0 %v370
    %415 = vmatpush.msra.mxu0 %v369
    %416 = vmatpush.msra.mxu0 %v368
    %417 = vmatmul.f32.gmra.mxu0 %v399
    %v418 = vpop.f32.mrf.mxu0
    %v419 = vadd.f32 %v394, %v418
    %420 = vdwg.mxu0
    %v421 = vadd.f32 %v419, %v235
    %v422 = vmul.f32 %v421, 0.5
    %v423 = vtanh.pop %v422
    %v424 = vmul.f32 %v423, 0.5
    %v425 = vadd.f32 %v424, 0.5
    %427 = vrot.lane.b32.xlu0 %v421, 32
    %v428 = vpop.permute.xlu0 %427
    %v430 = vmul.f32 %v425, %v428
    %432 = vrot.lane.b32.xlu0 %v430, 64
    %v433 = vpop.permute.xlu0 %432
    %v435 = vadd.f32 %v421, %v433
    %v436 = vtanh.pop %v435
    %v437 = vsub.f32 1.0, %v425
    %439 = vrot.lane.b32.xlu0 %v436, 96
    %v440 = vpop.permute.xlu0 %439
    %v442 = vmul.f32 %v437, %v440
    %v443 = vmul.f32 %v425, 0.0
    %v444 = vadd.f32 %v442, %v443
    %v445 = vld [vmem:[%s10] sm:$0xff]
    %v446 = vld [vmem:[%s10 + $0x8] sm:$0xff]
    %v447 = vld [vmem:[%s10 + $0x10] sm:$0xff]
    %v448 = vld [vmem:[%s10 + $0x18] sm:$0xff]
    %v449 = vld [vmem:[%s11] sm:$0xff]
    %v450 = vld [vmem:[%s11 + $0x8] sm:$0xff]
    %v451 = vld [vmem:[%s11 + $0x10] sm:$0xff]
    %v452 = vld [vmem:[%s11 + $0x18] sm:$0xff]
    %453 = vmatpush.msra.mxu0 0.0
    %454 = vmatpush.msra.mxu0 0.0
    %455 = vmatpush.msra.mxu0 0.0
    %456 = vmatpush.msra.mxu0 0.0
    %457 = vmatpush.msra.mxu0 0.0
    %458 = vmatpush.msra.mxu0 0.0
    %459 = vmatpush.msra.mxu0 0.0
    %460 = vmatpush.msra.mxu0 0.0
    %461 = vmatpush.msra.mxu0 0.0
    %462 = vmatpush.msra.mxu0 0.0
    %463 = vmatpush.msra.mxu0 0.0
    %464 = vmatpush.msra.mxu0 0.0
    %465 = vmatpush.msra.mxu0 %v452
    %466 = vmatpush.msra.mxu0 %v451
    %467 = vmatpush.msra.mxu0 %v450
    %468 = vmatpush.msra.mxu0 %v449
    %469 = vmatmul.f32.gmra.mxu0 %v247
    %v470 = vpop.f32.mrf.mxu0
    %v471 = vadd.f32 0.0, %v470
    %472 = vdwg.mxu0
    %474 = vrot.lane.b32.xlu0 %v444, 96
    %v475 = vpop.permute.xlu0 %474
    %v476 = vsel %vm245, %v475, 0
    %478 = vmatpush.msra.mxu0 0.0
    %479 = vmatpush.msra.mxu0 0.0
    %480 = vmatpush.msra.mxu0 0.0
    %481 = vmatpush.msra.mxu0 0.0
    %482 = vmatpush.msra.mxu0 0.0
    %483 = vmatpush.msra.mxu0 0.0
    %484 = vmatpush.msra.mxu0 0.0
    %485 = vmatpush.msra.mxu0 0.0
    %486 = vmatpush.msra.mxu0 0.0
    %487 = vmatpush.msra.mxu0 0.0
    %488 = vmatpush.msra.mxu0 0.0
    %489 = vmatpush.msra.mxu0 0.0
    %490 = vmatpush.msra.mxu0 %v448
    %491 = vmatpush.msra.mxu0 %v447
    %492 = vmatpush.msra.mxu0 %v446
    %493 = vmatpush.msra.mxu0 %v445
    %494 = vmatmul.f32.gmra.mxu0 %v476
    %v495 = vpop.f32.mrf.mxu0
    %v496 = vadd.f32 %v471, %v495
    %497 = vdwg.mxu0
    %v498 = vadd.f32 %v496, %v239
    %v499 = vmul.f32 %v498, 0.5
    %v500 = vtanh.pop %v499
    %v501 = vmul.f32 %v500, 0.5
    %v502 = vadd.f32 %v501, 0.5
    %504 = vrot.lane.b32.xlu0 %v498, 32
    %v505 = vpop.permute.xlu0 %504
    %v507 = vmul.f32 %v502, %v505
    %509 = vrot.lane.b32.xlu0 %v507, 64
    %v510 = vpop.permute.xlu0 %509
    %v512 = vadd.f32 %v498, %v510
    %v513 = vtanh.pop %v512
    %v514 = vsub.f32 1.0, %v502
    %516 = vrot.lane.b32.xlu0 %v513, 96
    %v517 = vpop.permute.xlu0 %516
    %v519 = vmul.f32 %v514, %v517
    %v520 = vmul.f32 %v502, 0.0
    %v521 = vadd.f32 %v519, %v520
    %522 = vmatpush.msra.mxu0 0.0
    %523 = vmatpush.msra.mxu0 0.0
    %524 = vmatpush.msra.mxu0 0.0
    %525 = vmatpush.msra.mxu0 0.0
    %526 = vmatpush.msra.mxu0 0.0
    %527 = vmatpush.msra.mxu0 0.0
    %528 = vmatpush.msra.mxu0 0.0
    %529 = vmatpush.msra.mxu0 0.0
    %530 = vmatpush.msra.mxu0 0.0
    %531 = vmatpush.msra.mxu0 0.0
    %532 = vmatpush.msra.mxu0 0.0
    %533 = vmatpush.msra.mxu0 0.0
    %534 = vmatpush.msra.mxu0 %v244
    %535 = vmatpush.msra.mxu0 %v243
    %536 = vmatpush.msra.mxu0 %v242
    %537 = vmatpush.msra.mxu0 %v241
    %538 = vmatmul.f32.gmra.mxu0 %v323
    %v539 = vpop.f32.mrf.mxu0
    %v540 = vadd.f32 0.0, %v539
    %541 = vdwg.mxu0
    %v542 = vadd.f32 %v209, %v540
    %v543 = vmul.f32 %v542, 0.5
    %v544 = vtanh.pop %v543
    %v545 = vmul.f32 %v544, 0.5
    %v546 = vadd.f32 %v545, 0.5
    %v547 = vtanh.pop %v542
    %v548 = vmul.f32 %v546, %v285
    %550 = vrot.lane.b32.xlu0 %v547, 64
    %v551 = vpop.permute.xlu0 %550
    %v553 = vmul.f32 %v546, %v551
    %555 = vrot.lane.b32.xlu0 %v553, 32
    %v556 = vpop.permute.xlu0 %555
    %v558 = vadd.f32 %v548, %v556
    %v559 = vtanh.pop %v558
    %561 = vrot.lane.b32.xlu0 %v559, 64
    %v562 = vpop.permute.xlu0 %561
    %v564 = vmul.f32 %v546, %v562
    %565 = vmatpush.msra.mxu0 0.0
    %566 = vmatpush.msra.mxu0 0.0
    %567 = vmatpush.msra.mxu0 0.0
    %568 = vmatpush.msra.mxu0 0.0
    %569 = vmatpush.msra.mxu0 0.0
    %570 = vmatpush.msra.mxu0 0.0
    %571 = vmatpush.msra.mxu0 0.0
    %572 = vmatpush.msra.mxu0 0.0
    %573 = vmatpush.msra.mxu0 0.0
    %574 = vmatpush.msra.mxu0 0.0
    %575 = vmatpush.msra.mxu0 0.0
    %576 = vmatpush.msra.mxu0 0.0
    %577 = vmatpush.msra.mxu0 %v299
    %578 = vmatpush.msra.mxu0 %v298
    %579 = vmatpush.msra.mxu0 %v297
    %580 = vmatpush.msra.mxu0 %v296
    %581 = vmatmul.f32.gmra.mxu0 %v399
    %v582 = vpop.f32.mrf.mxu0
    %v583 = vadd.f32 0.0, %v582
    %584 = vdwg.mxu0
    %586 = vrot.lane.b32.xlu0 %v564, 32
    %v587 = vpop.permute.xlu0 %586
    %v588 = vsel %vm245, %v587, 0
    %590 = vmatpush.msra.mxu0 0.0
    %591 = vmatpush.msra.mxu0 0.0
    %592 = vmatpush.msra.mxu0 0.0
    %593 = vmatpush.msra.mxu0 0.0
    %594 = vmatpush.msra.mxu0 0.0
    %595 = vmatpush.msra.mxu0 0.0
    %596 = vmatpush.msra.mxu0 0.0
    %597 = vmatpush.msra.mxu0 0.0
    %598 = vmatpush.msra.mxu0 0.0
    %599 = vmatpush.msra.mxu0 0.0
    %600 = vmatpush.msra.mxu0 0.0
    %601 = vmatpush.msra.mxu0 0.0
    %602 = vmatpush.msra.mxu0 %v295
    %603 = vmatpush.msra.mxu0 %v294
    %604 = vmatpush.msra.mxu0 %v293
    %605 = vmatpush.msra.mxu0 %v292
    %606 = vmatmul.f32.gmra.mxu0 %v588
    %v607 = vpop.f32.mrf.mxu0
    %v608 = vadd.f32 %v583, %v607
    %609 = vdwg.mxu0
    %v610 = vadd.f32 %v608, %v231
    %v611 = vmul.f32 %v610, 0.5
    %v612 = vtanh.pop %v611
    %v613 = vmul.f32 %v612, 0.5
    %v614 = vadd.f32 %v613, 0.5
    %v615 = vtanh.pop %v610
    %v616 = vmul.f32 %v614, %v361
    %618 = vrot.lane.b32.xlu0 %v615, 64
    %v619 = vpop.permute.xlu0 %618
    %v621 = vmul.f32 %v614, %v619
    %623 = vrot.lane.b32.xlu0 %v621, 32
    %v624 = vpop.permute.xlu0 %623
    %v626 = vadd.f32 %v616, %v624
    %v627 = vtanh.pop %v626
    %629 = vrot.lane.b32.xlu0 %v627, 64
    %v630 = vpop.permute.xlu0 %629
    %v632 = vmul.f32 %v614, %v630
    %633 = vmatpush.msra.mxu0 0.0
    %634 = vmatpush.msra.mxu0 0.0
    %635 = vmatpush.msra.mxu0 0.0
    %636 = vmatpush.msra.mxu0 0.0
    %637 = vmatpush.msra.mxu0 0.0
    %638 = vmatpush.msra.mxu0 0.0
    %639 = vmatpush.msra.mxu0 0.0
    %640 = vmatpush.msra.mxu0 0.0
    %641 = vmatpush.msra.mxu0 0.0
    %642 = vmatpush.msra.mxu0 0.0
    %643 = vmatpush.msra.mxu0 0.0
    %644 = vmatpush.msra.mxu0 0.0
    %645 = vmatpush.msra.mxu0 %v375
    %646 = vmatpush.msra.mxu0 %v374
    %647 = vmatpush.msra.mxu0 %v373
    %648 = vmatpush.msra.mxu0 %v372
    %649 = vmatmul.f32.gmra.mxu0 %v476
    %v650 = vpop.f32.mrf.mxu0
    %v651 = vadd.f32 0.0, %v650
    %652 = vdwg.mxu0
    %654 = vrot.lane.b32.xlu0 %v632, 32
    %v655 = vpop.permute.xlu0 %654
    %v656 = vsel %vm245, %v655, 0
    %658 = vmatpush.msra.mxu0 0.0
    %659 = vmatpush.msra.mxu0 0.0
    %660 = vmatpush.msra.mxu0 0.0
    %661 = vmatpush.msra.mxu0 0.0
    %662 = vmatpush.msra.mxu0 0.0
    %663 = vmatpush.msra.mxu0 0.0
    %664 = vmatpush.msra.mxu0 0.0
    %665 = vmatpush.msra.mxu0 0.0
    %666 = vmatpush.msra.mxu0 0.0
    %667 = vmatpush.msra.mxu0 0.0
    %668 = vmatpush.msra.mxu0 0.0
    %669 = vmatpush.msra.mxu0 0.0
    %670 = vmatpush.msra.mxu0 %v371
    %671 = vmatpush.msra.mxu0 %v370
    %672 = vmatpush.msra.mxu0 %v369
    %673 = vmatpush.msra.mxu0 %v368
    %674 = vmatmul.f32.gmra.mxu0 %v656
    %v675 = vpop.f32.mrf.mxu0
    %v676 = vadd.f32 %v651, %v675
    %677 = vdwg.mxu0
    %v678 = vadd.f32 %v676, %v235
    %v679 = vmul.f32 %v678, 0.5
    %v680 = vtanh.pop %v679
    %v681 = vmul.f32 %v680, 0.5
    %v682 = vadd.f32 %v681, 0.5
    %684 = vrot.lane.b32.xlu0 %v678, 32
    %v685 = vpop.permute.xlu0 %684
    %v687 = vmul.f32 %v682, %v685
    %689 = vrot.lane.b32.xlu0 %v687, 64
    %v690 = vpop.permute.xlu0 %689
    %v692 = vadd.f32 %v678, %v690
    %v693 = vtanh.pop %v692
    %v694 = vsub.f32 1.0, %v682
    %696 = vrot.lane.b32.xlu0 %v693, 96
    %v697 = vpop.permute.xlu0 %696
    %v699 = vmul.f32 %v694, %v697
    %v700 = vmul.f32 %v682, %v444
    %v701 = vadd.f32 %v699, %v700
    %703 = vrot.lane.b32.xlu0 %v521, 96
    %v704 = vpop.permute.xlu0 %703
    %v705 = vsel %vm245, %v704, 0
    %707 = vmatpush.msra.mxu0 0.0
    %708 = vmatpush.msra.mxu0 0.0
    %709 = vmatpush.msra.mxu0 0.0
    %710 = vmatpush.msra.mxu0 0.0
    %711 = vmatpush.msra.mxu0 0.0
    %712 = vmatpush.msra.mxu0 0.0
    %713 = vmatpush.msra.mxu0 0.0
    %714 = vmatpush.msra.mxu0 0.0
    %715 = vmatpush.msra.mxu0 0.0
    %716 = vmatpush.msra.mxu0 0.0
    %717 = vmatpush.msra.mxu0 0.0
    %718 = vmatpush.msra.mxu0 0.0
    %719 = vmatpush.msra.mxu0 %v452
    %720 = vmatpush.msra.mxu0 %v451
    %721 = vmatpush.msra.mxu0 %v450
    %722 = vmatpush.msra.mxu0 %v449
    %723 = vmatmul.f32.gmra.mxu0 %v705
    %v724 = vpop.f32.mrf.mxu0
    %v725 = vadd.f32 0.0, %v724
    %726 = vdwg.mxu0
    %728 = vrot.lane.b32.xlu0 %v701, 96
    %v729 = vpop.permute.xlu0 %728
    %v730 = vsel %vm245, %v729, 0
    %732 = vmatpush.msra.mxu0 0.0
    %733 = vmatpush.msra.mxu0 0.0
    %734 = vmatpush.msra.mxu0 0.0
    %735 = vmatpush.msra.mxu0 0.0
    %736 = vmatpush.msra.mxu0 0.0
    %737 = vmatpush.msra.mxu0 0.0
    %738 = vmatpush.msra.mxu0 0.0
    %739 = vmatpush.msra.mxu0 0.0
    %740 = vmatpush.msra.mxu0 0.0
    %741 = vmatpush.msra.mxu0 0.0
    %742 = vmatpush.msra.mxu0 0.0
    %743 = vmatpush.msra.mxu0 0.0
    %744 = vmatpush.msra.mxu0 %v448
    %745 = vmatpush.msra.mxu0 %v447
    %746 = vmatpush.msra.mxu0 %v446
    %747 = vmatpush.msra.mxu0 %v445
    %748 = vmatmul.f32.gmra.mxu0 %v730
    %v749 = vpop.f32.mrf.mxu0
    %v750 = vadd.f32 %v725, %v749
    %751 = vdwg.mxu0
    %v752 = vadd.f32 %v750, %v239
    %v753 = vmul.f32 %v752, 0.5
    %v754 = vtanh.pop %v753
    %v755 = vmul.f32 %v754, 0.5
    %v756 = vadd.f32 %v755, 0.5
    %758 = vrot.lane.b32.xlu0 %v752, 32
    %v759 = vpop.permute.xlu0 %758
    %v761 = vmul.f32 %v756, %v759
    %763 = vrot.lane.b32.xlu0 %v761, 64
    %v764 = vpop.permute.xlu0 %763
    %v766 = vadd.f32 %v752, %v764
    %v767 = vtanh.pop %v766
    %v768 = vsub.f32 1.0, %v756
    %770 = vrot.lane.b32.xlu0 %v767, 96
    %v771 = vpop.permute.xlu0 %770
    %v773 = vmul.f32 %v768, %v771
    %v774 = vmul.f32 %v756, %v521
    %v775 = vadd.f32 %v773, %v774
    %776 = vmatpush.msra.mxu0 0.0
    %777 = vmatpush.msra.mxu0 0.0
    %778 = vmatpush.msra.mxu0 0.0
    %779 = vmatpush.msra.mxu0 0.0
    %780 = vmatpush.msra.mxu0 0.0
    %781 = vmatpush.msra.mxu0 0.0
    %782 = vmatpush.msra.mxu0 0.0
    %783 = vmatpush.msra.mxu0 0.0
    %784 = vmatpush.msra.mxu0 0.0
    %785 = vmatpush.msra.mxu0 0.0
    %786 = vmatpush.msra.mxu0 0.0
    %787 = vmatpush.msra.mxu0 0.0
    %788 = vmatpush.msra.mxu0 %v244
    %789 = vmatpush.msra.mxu0 %v243
    %790 = vmatpush.msra.mxu0 %v242
    %791 = vmatpush.msra.mxu0 %v241
    %792 = vmatmul.f32.gmra.mxu0 %v588
    %v793 = vpop.f32.mrf.mxu0
    %v794 = vadd.f32 0.0, %v793
    %795 = vdwg.mxu0
    %v796 = vadd.f32 %v212, %v794
    %v797 = vmul.f32 %v796, 0.5
    %v798 = vtanh.pop %v797
    %v799 = vmul.f32 %v798, 0.5
    %v800 = vadd.f32 %v799, 0.5
    %v801 = vtanh.pop %v796
    %v802 = vmul.f32 %v800, %v558
    %804 = vrot.lane.b32.xlu0 %v801, 64
    %v805 = vpop.permute.xlu0 %804
    %v807 = vmul.f32 %v800, %v805
    %809 = vrot.lane.b32.xlu0 %v807, 32
    %v810 = vpop.permute.xlu0 %809
    %v812 = vadd.f32 %v802, %v810
    %v813 = vtanh.pop %v812
    %815 = vrot.lane.b32.xlu0 %v813, 64
    %v816 = vpop.permute.xlu0 %815
    %v818 = vmul.f32 %v800, %v816
    %819 = vmatpush.msra.mxu0 0.0
    %820 = vmatpush.msra.mxu0 0.0
    %821 = vmatpush.msra.mxu0 0.0
    %822 = vmatpush.msra.mxu0 0.0
    %823 = vmatpush.msra.mxu0 0.0
    %824 = vmatpush.msra.mxu0 0.0
    %825 = vmatpush.msra.mxu0 0.0
    %826 = vmatpush.msra.mxu0 0.0
    %827 = vmatpush.msra.mxu0 0.0
    %828 = vmatpush.msra.mxu0 0.0
    %829 = vmatpush.msra.mxu0 0.0
    %830 = vmatpush.msra.mxu0 0.0
    %831 = vmatpush.msra.mxu0 %v299
    %832 = vmatpush.msra.mxu0 %v298
    %833 = vmatpush.msra.mxu0 %v297
    %834 = vmatpush.msra.mxu0 %v296
    %835 = vmatmul.f32.gmra.mxu0 %v656
    %v836 = vpop.f32.mrf.mxu0
    %v837 = vadd.f32 0.0, %v836
    %838 = vdwg.mxu0
    %840 = vrot.lane.b32.xlu0 %v818, 32
    %v841 = vpop.permute.xlu0 %840
    %v842 = vsel %vm245, %v841, 0
    %844 = vmatpush.msra.mxu0 0.0
    %845 = vmatpush.msra.mxu0 0.0
    %846 = vmatpush.msra.mxu0 0.0
    %847 = vmatpush.msra.mxu0 0.0
    %848 = vmatpush.msra.mxu0 0.0
    %849 = vmatpush.msra.mxu0 0.0
    %850 = vmatpush.msra.mxu0 0.0
    %851 = vmatpush.msra.mxu0 0.0
    %852 = vmatpush.msra.mxu0 0.0
    %853 = vmatpush.msra.mxu0 0.0
    %854 = vmatpush.msra.mxu0 0.0
    %855 = vmatpush.msra.mxu0 0.0
    %856 = vmatpush.msra.mxu0 %v295
    %857 = vmatpush.msra.mxu0 %v294
    %858 = vmatpush.msra.mxu0 %v293
    %859 = vmatpush.msra.mxu0 %v292
    %860 = vmatmul.f32.gmra.mxu0 %v842
    %v861 = vpop.f32.mrf.mxu0
    %v862 = vadd.f32 %v837, %v861
    %863 = vdwg.mxu0
    %v864 = vadd.f32 %v862, %v231
    %v865 = vmul.f32 %v864, 0.5
    %v866 = vtanh.pop %v865
    %v867 = vmul.f32 %v866, 0.5
    %v868 = vadd.f32 %v867, 0.5
    %v869 = vtanh.pop %v864
    %v870 = vmul.f32 %v868, %v626
    %872 = vrot.lane.b32.xlu0 %v869, 64
    %v873 = vpop.permute.xlu0 %872
    %v875 = vmul.f32 %v868, %v873
    %877 = vrot.lane.b32.xlu0 %v875, 32
    %v878 = vpop.permute.xlu0 %877
    %v880 = vadd.f32 %v870, %v878
    %v881 = vtanh.pop %v880
    %883 = vrot.lane.b32.xlu0 %v881, 64
    %v884 = vpop.permute.xlu0 %883
    %v886 = vmul.f32 %v868, %v884
    %887 = vmatpush.msra.mxu0 0.0
    %888 = vmatpush.msra.mxu0 0.0
    %889 = vmatpush.msra.mxu0 0.0
    %890 = vmatpush.msra.mxu0 0.0
    %891 = vmatpush.msra.mxu0 0.0
    %892 = vmatpush.msra.mxu0 0.0
    %893 = vmatpush.msra.mxu0 0.0
    %894 = vmatpush.msra.mxu0 0.0
    %895 = vmatpush.msra.mxu0 0.0
    %896 = vmatpush.msra.mxu0 0.0
    %897 = vmatpush.msra.mxu0 0.0
    %898 = vmatpush.msra.mxu0 0.0
    %899 = vmatpush.msra.mxu0 %v375
    %900 = vmatpush.msra.mxu0 %v374
    %901 = vmatpush.msra.mxu0 %v373
    %902 = vmatpush.msra.mxu0 %v372
    %903 = vmatmul.f32.gmra.mxu0 %v730
    %v904 = vpop.f32.mrf.mxu0
    %v905 = vadd.f32 0.0, %v904
    %906 = vdwg.mxu0
    %908 = vrot.lane.b32.xlu0 %v886, 32
    %v909 = vpop.permute.xlu0 %908
    %v910 = vsel %vm245, %v909, 0
    %912 = vmatpush.msra.mxu0 0.0
    %913 = vmatpush.msra.mxu0 0.0
    %914 = vmatpush.msra.mxu0 0.0
    %915 = vmatpush.msra.mxu0 0.0
    %916 = vmatpush.msra.mxu0 0.0
    %917 = vmatpush.msra.mxu0 0.0
    %918 = vmatpush.msra.mxu0 0.0
    %919 = vmatpush.msra.mxu0 0.0
    %920 = vmatpush.msra.mxu0 0.0
    %921 = vmatpush.msra.mxu0 0.0
    %922 = vmatpush.msra.mxu0 0.0
    %923 = vmatpush.msra.mxu0 0.0
    %924 = vmatpush.msra.mxu0 %v371
    %925 = vmatpush.msra.mxu0 %v370
    %926 = vmatpush.msra.mxu0 %v369
    %927 = vmatpush.msra.mxu0 %v368
    %928 = vmatmul.f32.gmra.mxu0 %v910
    %v929 = vpop.f32.mrf.mxu0
    %v930 = vadd.f32 %v905, %v929
    %931 = vdwg.mxu0
    %v932 = vadd.f32 %v930, %v235
    %v933 = vmul.f32 %v932, 0.5
    %v934 = vtanh.pop %v933
    %v935 = vmul.f32 %v934, 0.5
    %v936 = vadd.f32 %v935, 0.5
    %938 = vrot.lane.b32.xlu0 %v932, 32
    %v939 = vpop.permute.xlu0 %938
    %v941 = vmul.f32 %v936, %v939
    %943 = vrot.lane.b32.xlu0 %v941, 64
    %v944 = vpop.permute.xlu0 %943
    %v946 = vadd.f32 %v932, %v944
    %v947 = vtanh.pop %v946
    %v948 = vsub.f32 1.0, %v936
    %950 = vrot.lane.b32.xlu0 %v947, 96
    %v951 = vpop.permute.xlu0 %950
    %v953 = vmul.f32 %v948, %v951
    %v954 = vmul.f32 %v936, %v701
    %v955 = vadd.f32 %v953, %v954
    %957 = vrot.lane.b32.xlu0 %v775, 96
    %v958 = vpop.permute.xlu0 %957
    %v959 = vsel %vm245, %v958, 0
    %961 = vmatpush.msra.mxu0 0.0
    %962 = vmatpush.msra.mxu0 0.0
    %963 = vmatpush.msra.mxu0 0.0
    %964 = vmatpush.msra.mxu0 0.0
    %965 = vmatpush.msra.mxu0 0.0
    %966 = vmatpush.msra.mxu0 0.0
    %967 = vmatpush.msra.mxu0 0.0
    %968 = vmatpush.msra.mxu0 0.0
    %969 = vmatpush.msra.mxu0 0.0
    %970 = vmatpush.msra.mxu0 0.0
    %971 = vmatpush.msra.mxu0 0.0
    %972 = vmatpush.msra.mxu0 0.0
    %973 = vmatpush.msra.mxu0 %v452
    %974 = vmatpush.msra.mxu0 %v451
    %975 = vmatpush.msra.mxu0 %v450
    %976 = vmatpush.msra.mxu0 %v449
    %977 = vmatmul.f32.gmra.mxu0 %v959
    %v978 = vpop.f32.mrf.mxu0
    %v979 = vadd.f32 0.0, %v978
    %980 = vdwg.mxu0
    %982 = vrot.lane.b32.xlu0 %v955, 96
    %v983 = vpop.permute.xlu0 %982
    %v984 = vsel %vm245, %v983, 0
    %986 = vmatpush.msra.mxu0 0.0
    %987 = vmatpush.msra.mxu0 0.0
    %988 = vmatpush.msra.mxu0 0.0
    %989 = vmatpush.msra.mxu0 0.0
    %990 = vmatpush.msra.mxu0 0.0
    %991 = vmatpush.msra.mxu0 0.0
    %992 = vmatpush.msra.mxu0 0.0
    %993 = vmatpush.msra.mxu0 0.0
    %994 = vmatpush.msra.mxu0 0.0
    %995 = vmatpush.msra.mxu0 0.0
    %996 = vmatpush.msra.mxu0 0.0
    %997 = vmatpush.msra.mxu0 0.0
    %998 = vmatpush.msra.mxu0 %v448
    %999 = vmatpush.msra.mxu0 %v447
    %1000 = vmatpush.msra.mxu0 %v446
    %1001 = vmatpush.msra.mxu0 %v445
    %1002 = vmatmul.f32.gmra.mxu0 %v984
    %v1003 = vpop.f32.mrf.mxu0
    %v1004 = vadd.f32 %v979, %v1003
    %1005 = vdwg.mxu0
    %v1006 = vadd.f32 %v1004, %v239
    %v1007 = vmul.f32 %v1006, 0.5
    %v1008 = vtanh.pop %v1007
    %v1009 = vmul.f32 %v1008, 0.5
    %v1010 = vadd.f32 %v1009, 0.5
    %1012 = vrot.lane.b32.xlu0 %v1006, 32
    %v1013 = vpop.permute.xlu0 %1012
    %v1015 = vmul.f32 %v1010, %v1013
    %1017 = vrot.lane.b32.xlu0 %v1015, 64
    %v1018 = vpop.permute.xlu0 %1017
    %v1020 = vadd.f32 %v1006, %v1018
    %v1021 = vtanh.pop %v1020
    %v1022 = vsub.f32 1.0, %v1010
    %1024 = vrot.lane.b32.xlu0 %v1021, 96
    %v1025 = vpop.permute.xlu0 %1024
    %v1027 = vmul.f32 %v1022, %v1025
    %v1028 = vmul.f32 %v1010, %v775
    %v1029 = vadd.f32 %v1027, %v1028
    %1030 = vmatpush.msra.mxu0 0.0
    %1031 = vmatpush.msra.mxu0 0.0
    %1032 = vmatpush.msra.mxu0 0.0
    %1033 = vmatpush.msra.mxu0 0.0
    %1034 = vmatpush.msra.mxu0 0.0
    %1035 = vmatpush.msra.mxu0 0.0
    %1036 = vmatpush.msra.mxu0 0.0
    %1037 = vmatpush.msra.mxu0 0.0
    %1038 = vmatpush.msra.mxu0 0.0
    %1039 = vmatpush.msra.mxu0 0.0
    %1040 = vmatpush.msra.mxu0 0.0
    %1041 = vmatpush.msra.mxu0 0.0
    %1042 = vmatpush.msra.mxu0 %v244
    %1043 = vmatpush.msra.mxu0 %v243
    %1044 = vmatpush.msra.mxu0 %v242
    %1045 = vmatpush.msra.mxu0 %v241
    %1046 = vmatmul.f32.gmra.mxu0 %v842
    %v1047 = vpop.f32.mrf.mxu0
    %v1048 = vadd.f32 0.0, %v1047
    %1049 = vdwg.mxu0
    %v1050 = vadd.f32 %v215, %v1048
    %v1051 = vmul.f32 %v1050, 0.5
    %v1052 = vtanh.pop %v1051
    %v1053 = vmul.f32 %v1052, 0.5
    %v1054 = vadd.f32 %v1053, 0.5
    %v1055 = vtanh.pop %v1050
    %v1056 = vmul.f32 %v1054, %v812
    %1058 = vrot.lane.b32.xlu0 %v1055, 64
    %v1059 = vpop.permute.xlu0 %1058
    %v1061 = vmul.f32 %v1054, %v1059
    %1063 = vrot.lane.b32.xlu0 %v1061, 32
    %v1064 = vpop.permute.xlu0 %1063
    %v1066 = vadd.f32 %v1056, %v1064
    %v1067 = vtanh.pop %v1066
    %1069 = vrot.lane.b32.xlu0 %v1067, 64
    %v1070 = vpop.permute.xlu0 %1069
    %v1072 = vmul.f32 %v1054, %v1070
    %1073 = vmatpush.msra.mxu0 0.0
    %1074 = vmatpush.msra.mxu0 0.0
    %1075 = vmatpush.msra.mxu0 0.0
    %1076 = vmatpush.msra.mxu0 0.0
    %1077 = vmatpush.msra.mxu0 0.0
    %1078 = vmatpush.msra.mxu0 0.0
    %1079 = vmatpush.msra.mxu0 0.0
    %1080 = vmatpush.msra.mxu0 0.0
    %1081 = vmatpush.msra.mxu0 0.0
    %1082 = vmatpush.msra.mxu0 0.0
    %1083 = vmatpush.msra.mxu0 0.0
    %1084 = vmatpush.msra.mxu0 0.0
    %1085 = vmatpush.msra.mxu0 %v299
    %1086 = vmatpush.msra.mxu0 %v298
    %1087 = vmatpush.msra.mxu0 %v297
    %1088 = vmatpush.msra.mxu0 %v296
    %1089 = vmatmul.f32.gmra.mxu0 %v910
    %v1090 = vpop.f32.mrf.mxu0
    %v1091 = vadd.f32 0.0, %v1090
    %1092 = vdwg.mxu0
    %1094 = vrot.lane.b32.xlu0 %v1072, 32
    %v1095 = vpop.permute.xlu0 %1094
    %v1096 = vsel %vm245, %v1095, 0
    %1098 = vmatpush.msra.mxu0 0.0
    %1099 = vmatpush.msra.mxu0 0.0
    %1100 = vmatpush.msra.mxu0 0.0
    %1101 = vmatpush.msra.mxu0 0.0
    %1102 = vmatpush.msra.mxu0 0.0
    %1103 = vmatpush.msra.mxu0 0.0
    %1104 = vmatpush.msra.mxu0 0.0
    %1105 = vmatpush.msra.mxu0 0.0
    %1106 = vmatpush.msra.mxu0 0.0
    %1107 = vmatpush.msra.mxu0 0.0
    %1108 = vmatpush.msra.mxu0 0.0
    %1109 = vmatpush.msra.mxu0 0.0
    %1110 = vmatpush.msra.mxu0 %v295
    %1111 = vmatpush.msra.mxu0 %v294
    %1112 = vmatpush.msra.mxu0 %v293
    %1113 = vmatpush.msra.mxu0 %v292
    %1114 = vmatmul.f32.gmra.mxu0 %v1096
    %v1115 = vpop.f32.mrf.mxu0
    %v1116 = vadd.f32 %v1091, %v1115
    %1117 = vdwg.mxu0
    %v1118 = vadd.f32 %v1116, %v231
    %v1119 = vmul.f32 %v1118, 0.5
    %v1120 = vtanh.pop %v1119
    %v1121 = vmul.f32 %v1120, 0.5
    %v1122 = vadd.f32 %v1121, 0.5
    %v1123 = vtanh.pop %v1118
    %v1124 = vmul.f32 %v1122, %v880
    %1126 = vrot.lane.b32.xlu0 %v1123, 64
    %v1127 = vpop.permute.xlu0 %1126
    %v1129 = vmul.f32 %v1122, %v1127
    %1131 = vrot.lane.b32.xlu0 %v1129, 32
    %v1132 = vpop.permute.xlu0 %1131
    %v1134 = vadd.f32 %v1124, %v1132
    %v1135 = vtanh.pop %v1134
    %1137 = vrot.lane.b32.xlu0 %v1135, 64
    %v1138 = vpop.permute.xlu0 %1137
    %v1140 = vmul.f32 %v1122, %v1138
    %1141 = vmatpush.msra.mxu0 0.0
    %1142 = vmatpush.msra.mxu0 0.0
    %1143 = vmatpush.msra.mxu0 0.0
    %1144 = vmatpush.msra.mxu0 0.0
    %1145 = vmatpush.msra.mxu0 0.0
    %1146 = vmatpush.msra.mxu0 0.0
    %1147 = vmatpush.msra.mxu0 0.0
    %1148 = vmatpush.msra.mxu0 0.0
    %1149 = vmatpush.msra.mxu0 0.0
    %1150 = vmatpush.msra.mxu0 0.0
    %1151 = vmatpush.msra.mxu0 0.0
    %1152 = vmatpush.msra.mxu0 0.0
    %1153 = vmatpush.msra.mxu0 %v375
    %1154 = vmatpush.msra.mxu0 %v374
    %1155 = vmatpush.msra.mxu0 %v373
    %1156 = vmatpush.msra.mxu0 %v372
    %1157 = vmatmul.f32.gmra.mxu0 %v984
    %v1158 = vpop.f32.mrf.mxu0
    %v1159 = vadd.f32 0.0, %v1158
    %1160 = vdwg.mxu0
    %1162 = vrot.lane.b32.xlu0 %v1140, 32
    %v1163 = vpop.permute.xlu0 %1162
    %v1164 = vsel %vm245, %v1163, 0
    %1166 = vmatpush.msra.mxu0 0.0
    %1167 = vmatpush.msra.mxu0 0.0
    %1168 = vmatpush.msra.mxu0 0.0
    %1169 = vmatpush.msra.mxu0 0.0
    %1170 = vmatpush.msra.mxu0 0.0
    %1171 = vmatpush.msra.mxu0 0.0
    %1172 = vmatpush.msra.mxu0 0.0
    %1173 = vmatpush.msra.mxu0 0.0
    %1174 = vmatpush.msra.mxu0 0.0
    %1175 = vmatpush.msra.mxu0 0.0
    %1176 = vmatpush.msra.mxu0 0.0
    %1177 = vmatpush.msra.mxu0 0.0
    %1178 = vmatpush.msra.mxu0 %v371
    %1179 = vmatpush.msra.mxu0 %v370
    %1180 = vmatpush.msra.mxu0 %v369
    %1181 = vmatpush.msra.mxu0 %v368
    %1182 = vmatmul.f32.gmra.mxu0 %v1164
    %v1183 = vpop.f32.mrf.mxu0
    %v1184 = vadd.f32 %v1159, %v1183
    %1185 = vdwg.mxu0
    %v1186 = vadd.f32 %v1184, %v235
    %v1187 = vmul.f32 %v1186, 0.5
    %v1188 = vtanh.pop %v1187
    %v1189 = vmul.f32 %v1188, 0.5
    %v1190 = vadd.f32 %v1189, 0.5
    %1192 = vrot.lane.b32.xlu0 %v1186, 32
    %v1193 = vpop.permute.xlu0 %1192
    %v1195 = vmul.f32 %v1190, %v1193
    %1197 = vrot.lane.b32.xlu0 %v1195, 64
    %v1198 = vpop.permute.xlu0 %1197
    %v1200 = vadd.f32 %v1186, %v1198
    %v1201 = vtanh.pop %v1200
    %v1202 = vsub.f32 1.0, %v1190
    %1204 = vrot.lane.b32.xlu0 %v1201, 96
    %v1205 = vpop.permute.xlu0 %1204
    %v1207 = vmul.f32 %v1202, %v1205
    %v1208 = vmul.f32 %v1190, %v955
    %v1209 = vadd.f32 %v1207, %v1208
    %1211 = vrot.lane.b32.xlu0 %v1029, 96
    %v1212 = vpop.permute.xlu0 %1211
    %v1213 = vsel %vm245, %v1212, 0
    %1215 = vmatpush.msra.mxu0 0.0
    %1216 = vmatpush.msra.mxu0 0.0
    %1217 = vmatpush.msra.mxu0 0.0
    %1218 = vmatpush.msra.mxu0 0.0
    %1219 = vmatpush.msra.mxu0 0.0
    %1220 = vmatpush.msra.mxu0 0.0
    %1221 = vmatpush.msra.mxu0 0.0
    %1222 = vmatpush.msra.mxu0 0.0
    %1223 = vmatpush.msra.mxu0 0.0
    %1224 = vmatpush.msra.mxu0 0.0
    %1225 = vmatpush.msra.mxu0 0.0
    %1226 = vmatpush.msra.mxu0 0.0
    %1227 = vmatpush.msra.mxu0 %v452
    %1228 = vmatpush.msra.mxu0 %v451
    %1229 = vmatpush.msra.mxu0 %v450
    %1230 = vmatpush.msra.mxu0 %v449
    %1231 = vmatmul.f32.gmra.mxu0 %v1213
    %v1232 = vpop.f32.mrf.mxu0
    %v1233 = vadd.f32 0.0, %v1232
    %1234 = vdwg.mxu0
    %1236 = vrot.lane.b32.xlu0 %v1209, 96
    %v1237 = vpop.permute.xlu0 %1236
    %v1238 = vsel %vm245, %v1237, 0
    %1240 = vmatpush.msra.mxu0 0.0
    %1241 = vmatpush.msra.mxu0 0.0
    %1242 = vmatpush.msra.mxu0 0.0
    %1243 = vmatpush.msra.mxu0 0.0
    %1244 = vmatpush.msra.mxu0 0.0
    %1245 = vmatpush.msra.mxu0 0.0
    %1246 = vmatpush.msra.mxu0 0.0
    %1247 = vmatpush.msra.mxu0 0.0
    %1248 = vmatpush.msra.mxu0 0.0
    %1249 = vmatpush.msra.mxu0 0.0
    %1250 = vmatpush.msra.mxu0 0.0
    %1251 = vmatpush.msra.mxu0 0.0
    %1252 = vmatpush.msra.mxu0 %v448
    %1253 = vmatpush.msra.mxu0 %v447
    %1254 = vmatpush.msra.mxu0 %v446
    %1255 = vmatpush.msra.mxu0 %v445
    %1256 = vmatmul.f32.gmra.mxu0 %v1238
    %v1257 = vpop.f32.mrf.mxu0
    %v1258 = vadd.f32 %v1233, %v1257
    %1259 = vdwg.mxu0
    %v1260 = vadd.f32 %v1258, %v239
    %v1261 = vmul.f32 %v1260, 0.5
    %v1262 = vtanh.pop %v1261
    %v1263 = vmul.f32 %v1262, 0.5
    %v1264 = vadd.f32 %v1263, 0.5
    %1266 = vrot.lane.b32.xlu0 %v1260, 32
    %v1267 = vpop.permute.xlu0 %1266
    %v1269 = vmul.f32 %v1264, %v1267
    %1271 = vrot.lane.b32.xlu0 %v1269, 64
    %v1272 = vpop.permute.xlu0 %1271
    %v1274 = vadd.f32 %v1260, %v1272
    %v1275 = vtanh.pop %v1274
    %v1276 = vsub.f32 1.0, %v1264
    %1278 = vrot.lane.b32.xlu0 %v1275, 96
    %v1279 = vpop.permute.xlu0 %1278
    %v1281 = vmul.f32 %v1276, %v1279
    %v1282 = vmul.f32 %v1264, %v1029
    %v1283 = vadd.f32 %v1281, %v1282
    %1284 = vmatpush.msra.mxu0 0.0
    %1285 = vmatpush.msra.mxu0 0.0
    %1286 = vmatpush.msra.mxu0 0.0
    %1287 = vmatpush.msra.mxu0 0.0
    %1288 = vmatpush.msra.mxu0 0.0
    %1289 = vmatpush.msra.mxu0 0.0
    %1290 = vmatpush.msra.mxu0 0.0
    %1291 = vmatpush.msra.mxu0 0.0
    %1292 = vmatpush.msra.mxu0 0.0
    %1293 = vmatpush.msra.mxu0 0.0
    %1294 = vmatpush.msra.mxu0 0.0
    %1295 = vmatpush.msra.mxu0 0.0
    %1296 = vmatpush.msra.mxu0 %v244
    %1297 = vmatpush.msra.mxu0 %v243
    %1298 = vmatpush.msra.mxu0 %v242
    %1299 = vmatpush.msra.mxu0 %v241
    %1300 = vmatmul.f32.gmra.mxu0 %v1096
    %v1301 = vpop.f32.mrf.mxu0
    %v1302 = vadd.f32 0.0, %v1301
    %1303 = vdwg.mxu0
    %v1304 = vadd.f32 %v218, %v1302
    %v1305 = vmul.f32 %v1304, 0.5
    %v1306 = vtanh.pop %v1305
    %v1307 = vmul.f32 %v1306, 0.5
    %v1308 = vadd.f32 %v1307, 0.5
    %v1309 = vtanh.pop %v1304
    %v1310 = vmul.f32 %v1308, %v1066
    %1312 = vrot.lane.b32.xlu0 %v1309, 64
    %v1313 = vpop.permute.xlu0 %1312
    %v1315 = vmul.f32 %v1308, %v1313
    %1317 = vrot.lane.b32.xlu0 %v1315, 32
    %v1318 = vpop.permute.xlu0 %1317
    %v1320 = vadd.f32 %v1310, %v1318
    %v1321 = vtanh.pop %v1320
    %1323 = vrot.lane.b32.xlu0 %v1321, 64
    %v1324 = vpop.permute.xlu0 %1323
    %v1326 = vmul.f32 %v1308, %v1324
    %1327 = vmatpush.msra.mxu0 0.0
    %1328 = vmatpush.msra.mxu0 0.0
    %1329 = vmatpush.msra.mxu0 0.0
    %1330 = vmatpush.msra.mxu0 0.0
    %1331 = vmatpush.msra.mxu0 0.0
    %1332 = vmatpush.msra.mxu0 0.0
    %1333 = vmatpush.msra.mxu0 0.0
    %1334 = vmatpush.msra.mxu0 0.0
    %1335 = vmatpush.msra.mxu0 0.0
    %1336 = vmatpush.msra.mxu0 0.0
    %1337 = vmatpush.msra.mxu0 0.0
    %1338 = vmatpush.msra.mxu0 0.0
    %1339 = vmatpush.msra.mxu0 %v299
    %1340 = vmatpush.msra.mxu0 %v298
    %1341 = vmatpush.msra.mxu0 %v297
    %1342 = vmatpush.msra.mxu0 %v296
    %1343 = vmatmul.f32.gmra.mxu0 %v1164
    %v1344 = vpop.f32.mrf.mxu0
    %v1345 = vadd.f32 0.0, %v1344
    %1346 = vdwg.mxu0
    %1348 = vrot.lane.b32.xlu0 %v1326, 32
    %v1349 = vpop.permute.xlu0 %1348
    %v1350 = vsel %vm245, %v1349, 0
    %1352 = vmatpush.msra.mxu0 0.0
    %1353 = vmatpush.msra.mxu0 0.0
    %1354 = vmatpush.msra.mxu0 0.0
    %1355 = vmatpush.msra.mxu0 0.0
    %1356 = vmatpush.msra.mxu0 0.0
    %1357 = vmatpush.msra.mxu0 0.0
    %1358 = vmatpush.msra.mxu0 0.0
    %1359 = vmatpush.msra.mxu0 0.0
    %1360 = vmatpush.msra.mxu0 0.0
    %1361 = vmatpush.msra.mxu0 0.0
    %1362 = vmatpush.msra.mxu0 0.0
    %1363 = vmatpush.msra.mxu0 0.0
    %1364 = vmatpush.msra.mxu0 %v295
    %1365 = vmatpush.msra.mxu0 %v294
    %1366 = vmatpush.msra.mxu0 %v293
    %1367 = vmatpush.msra.mxu0 %v292
    %1368 = vmatmul.f32.gmra.mxu0 %v1350
    %v1369 = vpop.f32.mrf.mxu0
    %v1370 = vadd.f32 %v1345, %v1369
    %1371 = vdwg.mxu0
    %v1372 = vadd.f32 %v1370, %v231
    %v1373 = vmul.f32 %v1372, 0.5
    %v1374 = vtanh.pop %v1373
    %v1375 = vmul.f32 %v1374, 0.5
    %v1376 = vadd.f32 %v1375, 0.5
    %v1377 = vtanh.pop %v1372
    %v1378 = vmul.f32 %v1376, %v1134
    %1380 = vrot.lane.b32.xlu0 %v1377, 64
    %v1381 = vpop.permute.xlu0 %1380
    %v1383 = vmul.f32 %v1376, %v1381
    %1385 = vrot.lane.b32.xlu0 %v1383, 32
    %v1386 = vpop.permute.xlu0 %1385
    %v1388 = vadd.f32 %v1378, %v1386
    %v1389 = vtanh.pop %v1388
    %1391 = vrot.lane.b32.xlu0 %v1389, 64
    %v1392 = vpop.permute.xlu0 %1391
    %v1394 = vmul.f32 %v1376, %v1392
    %1395 = vmatpush.msra.mxu0 0.0
    %1396 = vmatpush.msra.mxu0 0.0
    %1397 = vmatpush.msra.mxu0 0.0
    %1398 = vmatpush.msra.mxu0 0.0
    %1399 = vmatpush.msra.mxu0 0.0
    %1400 = vmatpush.msra.mxu0 0.0
    %1401 = vmatpush.msra.mxu0 0.0
    %1402 = vmatpush.msra.mxu0 0.0
    %1403 = vmatpush.msra.mxu0 0.0
    %1404 = vmatpush.msra.mxu0 0.0
    %1405 = vmatpush.msra.mxu0 0.0
    %1406 = vmatpush.msra.mxu0 0.0
    %1407 = vmatpush.msra.mxu0 %v375
    %1408 = vmatpush.msra.mxu0 %v374
    %1409 = vmatpush.msra.mxu0 %v373
    %1410 = vmatpush.msra.mxu0 %v372
    %1411 = vmatmul.f32.gmra.mxu0 %v1238
    %v1412 = vpop.f32.mrf.mxu0
    %v1413 = vadd.f32 0.0, %v1412
    %1414 = vdwg.mxu0
    %1416 = vrot.lane.b32.xlu0 %v1394, 32
    %v1417 = vpop.permute.xlu0 %1416
    %v1418 = vsel %vm245, %v1417, 0
    %1420 = vmatpush.msra.mxu0 0.0
    %1421 = vmatpush.msra.mxu0 0.0
    %1422 = vmatpush.msra.mxu0 0.0
    %1423 = vmatpush.msra.mxu0 0.0
    %1424 = vmatpush.msra.mxu0 0.0
    %1425 = vmatpush.msra.mxu0 0.0
    %1426 = vmatpush.msra.mxu0 0.0
    %1427 = vmatpush.msra.mxu0 0.0
    %1428 = vmatpush.msra.mxu0 0.0
    %1429 = vmatpush.msra.mxu0 0.0
    %1430 = vmatpush.msra.mxu0 0.0
    %1431 = vmatpush.msra.mxu0 0.0
    %1432 = vmatpush.msra.mxu0 %v371
    %1433 = vmatpush.msra.mxu0 %v370
    %1434 = vmatpush.msra.mxu0 %v369
    %1435 = vmatpush.msra.mxu0 %v368
    %1436 = vmatmul.f32.gmra.mxu0 %v1418
    %v1437 = vpop.f32.mrf.mxu0
    %v1438 = vadd.f32 %v1413, %v1437
    %1439 = vdwg.mxu0
    %v1440 = vadd.f32 %v1438, %v235
    %v1441 = vmul.f32 %v1440, 0.5
    %v1442 = vtanh.pop %v1441
    %v1443 = vmul.f32 %v1442, 0.5
    %v1444 = vadd.f32 %v1443, 0.5
    %1446 = vrot.lane.b32.xlu0 %v1440, 32
    %v1447 = vpop.permute.xlu0 %1446
    %v1449 = vmul.f32 %v1444, %v1447
    %1451 = vrot.lane.b32.xlu0 %v1449, 64
    %v1452 = vpop.permute.xlu0 %1451
    %v1454 = vadd.f32 %v1440, %v1452
    %v1455 = vtanh.pop %v1454
    %v1456 = vsub.f32 1.0, %v1444
    %1458 = vrot.lane.b32.xlu0 %v1455, 96
    %v1459 = vpop.permute.xlu0 %1458
    %v1461 = vmul.f32 %v1456, %v1459
    %v1462 = vmul.f32 %v1444, %v1209
    %v1463 = vadd.f32 %v1461, %v1462
    %1465 = vrot.lane.b32.xlu0 %v1283, 96
    %v1466 = vpop.permute.xlu0 %1465
    %v1467 = vsel %vm245, %v1466, 0
    %1469 = vmatpush.msra.mxu0 0.0
    %1470 = vmatpush.msra.mxu0 0.0
    %1471 = vmatpush.msra.mxu0 0.0
    %1472 = vmatpush.msra.mxu0 0.0
    %1473 = vmatpush.msra.mxu0 0.0
    %1474 = vmatpush.msra.mxu0 0.0
    %1475 = vmatpush.msra.mxu0 0.0
    %1476 = vmatpush.msra.mxu0 0.0
    %1477 = vmatpush.msra.mxu0 0.0
    %1478 = vmatpush.msra.mxu0 0.0
    %1479 = vmatpush.msra.mxu0 0.0
    %1480 = vmatpush.msra.mxu0 0.0
    %1481 = vmatpush.msra.mxu0 %v452
    %1482 = vmatpush.msra.mxu0 %v451
    %1483 = vmatpush.msra.mxu0 %v450
    %1484 = vmatpush.msra.mxu0 %v449
    %1485 = vmatmul.f32.gmra.mxu0 %v1467
    %v1486 = vpop.f32.mrf.mxu0
    %v1487 = vadd.f32 0.0, %v1486
    %1488 = vdwg.mxu0
    %1490 = vrot.lane.b32.xlu0 %v1463, 96
    %v1491 = vpop.permute.xlu0 %1490
    %v1492 = vsel %vm245, %v1491, 0
    %1494 = vmatpush.msra.mxu0 0.0
    %1495 = vmatpush.msra.mxu0 0.0
    %1496 = vmatpush.msra.mxu0 0.0
    %1497 = vmatpush.msra.mxu0 0.0
    %1498 = vmatpush.msra.mxu0 0.0
    %1499 = vmatpush.msra.mxu0 0.0
    %1500 = vmatpush.msra.mxu0 0.0
    %1501 = vmatpush.msra.mxu0 0.0
    %1502 = vmatpush.msra.mxu0 0.0
    %1503 = vmatpush.msra.mxu0 0.0
    %1504 = vmatpush.msra.mxu0 0.0
    %1505 = vmatpush.msra.mxu0 0.0
    %1506 = vmatpush.msra.mxu0 %v448
    %1507 = vmatpush.msra.mxu0 %v447
    %1508 = vmatpush.msra.mxu0 %v446
    %1509 = vmatpush.msra.mxu0 %v445
    %1510 = vmatmul.f32.gmra.mxu0 %v1492
    %v1511 = vpop.f32.mrf.mxu0
    %v1512 = vadd.f32 %v1487, %v1511
    %1513 = vdwg.mxu0
    %v1514 = vadd.f32 %v1512, %v239
    %v1515 = vmul.f32 %v1514, 0.5
    %v1516 = vtanh.pop %v1515
    %v1517 = vmul.f32 %v1516, 0.5
    %v1518 = vadd.f32 %v1517, 0.5
    %1520 = vrot.lane.b32.xlu0 %v1514, 32
    %v1521 = vpop.permute.xlu0 %1520
    %v1523 = vmul.f32 %v1518, %v1521
    %1525 = vrot.lane.b32.xlu0 %v1523, 64
    %v1526 = vpop.permute.xlu0 %1525
    %v1528 = vadd.f32 %v1514, %v1526
    %v1529 = vtanh.pop %v1528
    %v1530 = vsub.f32 1.0, %v1518
    %1532 = vrot.lane.b32.xlu0 %v1529, 96
    %v1533 = vpop.permute.xlu0 %1532
    %v1535 = vmul.f32 %v1530, %v1533
    %v1536 = vmul.f32 %v1518, %v1283
    %v1537 = vadd.f32 %v1535, %v1536
    %1538 = vmatpush.msra.mxu0 0.0
    %1539 = vmatpush.msra.mxu0 0.0
    %1540 = vmatpush.msra.mxu0 0.0
    %1541 = vmatpush.msra.mxu0 0.0
    %1542 = vmatpush.msra.mxu0 0.0
    %1543 = vmatpush.msra.mxu0 0.0
    %1544 = vmatpush.msra.mxu0 0.0
    %1545 = vmatpush.msra.mxu0 0.0
    %1546 = vmatpush.msra.mxu0 0.0
    %1547 = vmatpush.msra.mxu0 0.0
    %1548 = vmatpush.msra.mxu0 0.0
    %1549 = vmatpush.msra.mxu0 0.0
    %1550 = vmatpush.msra.mxu0 %v244
    %1551 = vmatpush.msra.mxu0 %v243
    %1552 = vmatpush.msra.mxu0 %v242
    %1553 = vmatpush.msra.mxu0 %v241
    %1554 = vmatmul.f32.gmra.mxu0 %v1350
    %v1555 = vpop.f32.mrf.mxu0
    %v1556 = vadd.f32 0.0, %v1555
    %1557 = vdwg.mxu0
    %v1558 = vadd.f32 %v221, %v1556
    %v1559 = vmul.f32 %v1558, 0.5
    %v1560 = vtanh.pop %v1559
    %v1561 = vmul.f32 %v1560, 0.5
    %v1562 = vadd.f32 %v1561, 0.5
    %v1563 = vtanh.pop %v1558
    %v1564 = vmul.f32 %v1562, %v1320
    %1566 = vrot.lane.b32.xlu0 %v1563, 64
    %v1567 = vpop.permute.xlu0 %1566
    %v1569 = vmul.f32 %v1562, %v1567
    %1571 = vrot.lane.b32.xlu0 %v1569, 32
    %v1572 = vpop.permute.xlu0 %1571
    %v1574 = vadd.f32 %v1564, %v1572
    %v1575 = vtanh.pop %v1574
    %1577 = vrot.lane.b32.xlu0 %v1575, 64
    %v1578 = vpop.permute.xlu0 %1577
    %v1580 = vmul.f32 %v1562, %v1578
    %1581 = vmatpush.msra.mxu0 0.0
    %1582 = vmatpush.msra.mxu0 0.0
    %1583 = vmatpush.msra.mxu0 0.0
    %1584 = vmatpush.msra.mxu0 0.0
    %1585 = vmatpush.msra.mxu0 0.0
    %1586 = vmatpush.msra.mxu0 0.0
    %1587 = vmatpush.msra.mxu0 0.0
    %1588 = vmatpush.msra.mxu0 0.0
    %1589 = vmatpush.msra.mxu0 0.0
    %1590 = vmatpush.msra.mxu0 0.0
    %1591 = vmatpush.msra.mxu0 0.0
    %1592 = vmatpush.msra.mxu0 0.0
    %1593 = vmatpush.msra.mxu0 %v299
    %1594 = vmatpush.msra.mxu0 %v298
    %1595 = vmatpush.msra.mxu0 %v297
    %1596 = vmatpush.msra.mxu0 %v296
    %1597 = vmatmul.f32.gmra.mxu0 %v1418
    %v1598 = vpop.f32.mrf.mxu0
    %v1599 = vadd.f32 0.0, %v1598
    %1600 = vdwg.mxu0
    %1602 = vrot.lane.b32.xlu0 %v1580, 32
    %v1603 = vpop.permute.xlu0 %1602
    %v1604 = vsel %vm245, %v1603, 0
    %1606 = vmatpush.msra.mxu0 0.0
    %1607 = vmatpush.msra.mxu0 0.0
    %1608 = vmatpush.msra.mxu0 0.0
    %1609 = vmatpush.msra.mxu0 0.0
    %1610 = vmatpush.msra.mxu0 0.0
    %1611 = vmatpush.msra.mxu0 0.0
    %1612 = vmatpush.msra.mxu0 0.0
    %1613 = vmatpush.msra.mxu0 0.0
    %1614 = vmatpush.msra.mxu0 0.0
    %1615 = vmatpush.msra.mxu0 0.0
    %1616 = vmatpush.msra.mxu0 0.0
    %1617 = vmatpush.msra.mxu0 0.0
    %1618 = vmatpush.msra.mxu0 %v295
    %1619 = vmatpush.msra.mxu0 %v294
    %1620 = vmatpush.msra.mxu0 %v293
    %1621 = vmatpush.msra.mxu0 %v292
    %1622 = vmatmul.f32.gmra.mxu0 %v1604
    %v1623 = vpop.f32.mrf.mxu0
    %v1624 = vadd.f32 %v1599, %v1623
    %1625 = vdwg.mxu0
    %v1626 = vadd.f32 %v1624, %v231
    %v1627 = vmul.f32 %v1626, 0.5
    %v1628 = vtanh.pop %v1627
    %v1629 = vmul.f32 %v1628, 0.5
    %v1630 = vadd.f32 %v1629, 0.5
    %v1631 = vtanh.pop %v1626
    %v1632 = vmul.f32 %v1630, %v1388
    %1634 = vrot.lane.b32.xlu0 %v1631, 64
    %v1635 = vpop.permute.xlu0 %1634
    %v1637 = vmul.f32 %v1630, %v1635
    %1639 = vrot.lane.b32.xlu0 %v1637, 32
    %v1640 = vpop.permute.xlu0 %1639
    %v1642 = vadd.f32 %v1632, %v1640
    %v1643 = vtanh.pop %v1642
    %1645 = vrot.lane.b32.xlu0 %v1643, 64
    %v1646 = vpop.permute.xlu0 %1645
    %v1648 = vmul.f32 %v1630, %v1646
    %1649 = vmatpush.msra.mxu0 0.0
    %1650 = vmatpush.msra.mxu0 0.0
    %1651 = vmatpush.msra.mxu0 0.0
    %1652 = vmatpush.msra.mxu0 0.0
    %1653 = vmatpush.msra.mxu0 0.0
    %1654 = vmatpush.msra.mxu0 0.0
    %1655 = vmatpush.msra.mxu0 0.0
    %1656 = vmatpush.msra.mxu0 0.0
    %1657 = vmatpush.msra.mxu0 0.0
    %1658 = vmatpush.msra.mxu0 0.0
    %1659 = vmatpush.msra.mxu0 0.0
    %1660 = vmatpush.msra.mxu0 0.0
    %1661 = vmatpush.msra.mxu0 %v375
    %1662 = vmatpush.msra.mxu0 %v374
    %1663 = vmatpush.msra.mxu0 %v373
    %1664 = vmatpush.msra.mxu0 %v372
    %1665 = vmatmul.f32.gmra.mxu0 %v1492
    %v1666 = vpop.f32.mrf.mxu0
    %v1667 = vadd.f32 0.0, %v1666
    %1668 = vdwg.mxu0
    %1670 = vrot.lane.b32.xlu0 %v1648, 32
    %v1671 = vpop.permute.xlu0 %1670
    %v1672 = vsel %vm245, %v1671, 0
    %1674 = vmatpush.msra.mxu0 0.0
    %1675 = vmatpush.msra.mxu0 0.0
    %1676 = vmatpush.msra.mxu0 0.0
    %1677 = vmatpush.msra.mxu0 0.0
    %1678 = vmatpush.msra.mxu0 0.0
    %1679 = vmatpush.msra.mxu0 0.0
    %1680 = vmatpush.msra.mxu0 0.0
    %1681 = vmatpush.msra.mxu0 0.0
    %1682 = vmatpush.msra.mxu0 0.0
    %1683 = vmatpush.msra.mxu0 0.0
    %1684 = vmatpush.msra.mxu0 0.0
    %1685 = vmatpush.msra.mxu0 0.0
    %1686 = vmatpush.msra.mxu0 %v371
    %1687 = vmatpush.msra.mxu0 %v370
    %1688 = vmatpush.msra.mxu0 %v369
    %1689 = vmatpush.msra.mxu0 %v368
    %1690 = vmatmul.f32.gmra.mxu0 %v1672
    %v1691 = vpop.f32.mrf.mxu0
    %v1692 = vadd.f32 %v1667, %v1691
    %1693 = vdwg.mxu0
    %v1694 = vadd.f32 %v1692, %v235
    %v1695 = vmul.f32 %v1694, 0.5
    %v1696 = vtanh.pop %v1695
    %v1697 = vmul.f32 %v1696, 0.5
    %v1698 = vadd.f32 %v1697, 0.5
    %1700 = vrot.lane.b32.xlu0 %v1694, 32
    %v1701 = vpop.permute.xlu0 %1700
    %v1703 = vmul.f32 %v1698, %v1701
    %1705 = vrot.lane.b32.xlu0 %v1703, 64
    %v1706 = vpop.permute.xlu0 %1705
    %v1708 = vadd.f32 %v1694, %v1706
    %v1709 = vtanh.pop %v1708
    %v1710 = vsub.f32 1.0, %v1698
    %1712 = vrot.lane.b32.xlu0 %v1709, 96
    %v1713 = vpop.permute.xlu0 %1712
    %v1715 = vmul.f32 %v1710, %v1713
    %v1716 = vmul.f32 %v1698, %v1463
    %v1717 = vadd.f32 %v1715, %v1716
    %1719 = vrot.lane.b32.xlu0 %v1537, 96
    %v1720 = vpop.permute.xlu0 %1719
    %v1721 = vsel %vm245, %v1720, 0
    %1723 = vmatpush.msra.mxu0 0.0
    %1724 = vmatpush.msra.mxu0 0.0
    %1725 = vmatpush.msra.mxu0 0.0
    %1726 = vmatpush.msra.mxu0 0.0
    %1727 = vmatpush.msra.mxu0 0.0
    %1728 = vmatpush.msra.mxu0 0.0
    %1729 = vmatpush.msra.mxu0 0.0
    %1730 = vmatpush.msra.mxu0 0.0
    %1731 = vmatpush.msra.mxu0 0.0
    %1732 = vmatpush.msra.mxu0 0.0
    %1733 = vmatpush.msra.mxu0 0.0
    %1734 = vmatpush.msra.mxu0 0.0
    %1735 = vmatpush.msra.mxu0 %v452
    %1736 = vmatpush.msra.mxu0 %v451
    %1737 = vmatpush.msra.mxu0 %v450
    %1738 = vmatpush.msra.mxu0 %v449
    %1739 = vmatmul.f32.gmra.mxu0 %v1721
    %v1740 = vpop.f32.mrf.mxu0
    %v1741 = vadd.f32 0.0, %v1740
    %1742 = vdwg.mxu0
    %1744 = vrot.lane.b32.xlu0 %v1717, 96
    %v1745 = vpop.permute.xlu0 %1744
    %v1746 = vsel %vm245, %v1745, 0
    %1748 = vmatpush.msra.mxu0 0.0
    %1749 = vmatpush.msra.mxu0 0.0
    %1750 = vmatpush.msra.mxu0 0.0
    %1751 = vmatpush.msra.mxu0 0.0
    %1752 = vmatpush.msra.mxu0 0.0
    %1753 = vmatpush.msra.mxu0 0.0
    %1754 = vmatpush.msra.mxu0 0.0
    %1755 = vmatpush.msra.mxu0 0.0
    %1756 = vmatpush.msra.mxu0 0.0
    %1757 = vmatpush.msra.mxu0 0.0
    %1758 = vmatpush.msra.mxu0 0.0
    %1759 = vmatpush.msra.mxu0 0.0
    %1760 = vmatpush.msra.mxu0 %v448
    %1761 = vmatpush.msra.mxu0 %v447
    %1762 = vmatpush.msra.mxu0 %v446
    %1763 = vmatpush.msra.mxu0 %v445
    %1764 = vmatmul.f32.gmra.mxu0 %v1746
    %v1765 = vpop.f32.mrf.mxu0
    %v1766 = vadd.f32 %v1741, %v1765
    %1767 = vdwg.mxu0
    %v1768 = vadd.f32 %v1766, %v239
    %v1769 = vmul.f32 %v1768, 0.5
    %v1770 = vtanh.pop %v1769
    %v1771 = vmul.f32 %v1770, 0.5
    %v1772 = vadd.f32 %v1771, 0.5
    %1774 = vrot.lane.b32.xlu0 %v1768, 32
    %v1775 = vpop.permute.xlu0 %1774
    %v1777 = vmul.f32 %v1772, %v1775
    %1779 = vrot.lane.b32.xlu0 %v1777, 64
    %v1780 = vpop.permute.xlu0 %1779
    %v1782 = vadd.f32 %v1768, %v1780
    %v1783 = vtanh.pop %v1782
    %v1784 = vsub.f32 1.0, %v1772
    %1786 = vrot.lane.b32.xlu0 %v1783, 96
    %v1787 = vpop.permute.xlu0 %1786
    %v1789 = vmul.f32 %v1784, %v1787
    %v1790 = vmul.f32 %v1772, %v1537
    %v1791 = vadd.f32 %v1789, %v1790
    %1792 = vmatpush.msra.mxu0 0.0
    %1793 = vmatpush.msra.mxu0 0.0
    %1794 = vmatpush.msra.mxu0 0.0
    %1795 = vmatpush.msra.mxu0 0.0
    %1796 = vmatpush.msra.mxu0 0.0
    %1797 = vmatpush.msra.mxu0 0.0
    %1798 = vmatpush.msra.mxu0 0.0
    %1799 = vmatpush.msra.mxu0 0.0
    %1800 = vmatpush.msra.mxu0 0.0
    %1801 = vmatpush.msra.mxu0 0.0
    %1802 = vmatpush.msra.mxu0 0.0
    %1803 = vmatpush.msra.mxu0 0.0
    %1804 = vmatpush.msra.mxu0 %v244
    %1805 = vmatpush.msra.mxu0 %v243
    %1806 = vmatpush.msra.mxu0 %v242
    %1807 = vmatpush.msra.mxu0 %v241
    %1808 = vmatmul.f32.gmra.mxu0 %v1604
    %v1809 = vpop.f32.mrf.mxu0
    %v1810 = vadd.f32 0.0, %v1809
    %1811 = vdwg.mxu0
    %v1812 = vadd.f32 %v224, %v1810
    %v1813 = vmul.f32 %v1812, 0.5
    %v1814 = vtanh.pop %v1813
    %v1815 = vmul.f32 %v1814, 0.5
    %v1816 = vadd.f32 %v1815, 0.5
    %v1817 = vtanh.pop %v1812
    %v1818 = vmul.f32 %v1816, %v1574
    %1820 = vrot.lane.b32.xlu0 %v1817, 64
    %v1821 = vpop.permute.xlu0 %1820
    %v1823 = vmul.f32 %v1816, %v1821
    %1825 = vrot.lane.b32.xlu0 %v1823, 32
    %v1826 = vpop.permute.xlu0 %1825
    %v1828 = vadd.f32 %v1818, %v1826
    %v1829 = vtanh.pop %v1828
    %1831 = vrot.lane.b32.xlu0 %v1829, 64
    %v1832 = vpop.permute.xlu0 %1831
    %v1834 = vmul.f32 %v1816, %v1832
    %1835 = vmatpush.msra.mxu0 0.0
    %1836 = vmatpush.msra.mxu0 0.0
    %1837 = vmatpush.msra.mxu0 0.0
    %1838 = vmatpush.msra.mxu0 0.0
    %1839 = vmatpush.msra.mxu0 0.0
    %1840 = vmatpush.msra.mxu0 0.0
    %1841 = vmatpush.msra.mxu0 0.0
    %1842 = vmatpush.msra.mxu0 0.0
    %1843 = vmatpush.msra.mxu0 0.0
    %1844 = vmatpush.msra.mxu0 0.0
    %1845 = vmatpush.msra.mxu0 0.0
    %1846 = vmatpush.msra.mxu0 0.0
    %1847 = vmatpush.msra.mxu0 %v299
    %1848 = vmatpush.msra.mxu0 %v298
    %1849 = vmatpush.msra.mxu0 %v297
    %1850 = vmatpush.msra.mxu0 %v296
    %1851 = vmatmul.f32.gmra.mxu0 %v1672
    %v1852 = vpop.f32.mrf.mxu0
    %v1853 = vadd.f32 0.0, %v1852
    %1854 = vdwg.mxu0
    %1856 = vrot.lane.b32.xlu0 %v1834, 32
    %v1857 = vpop.permute.xlu0 %1856
    %v1858 = vsel %vm245, %v1857, 0
    %1860 = vmatpush.msra.mxu0 0.0
    %1861 = vmatpush.msra.mxu0 0.0
    %1862 = vmatpush.msra.mxu0 0.0
    %1863 = vmatpush.msra.mxu0 0.0
    %1864 = vmatpush.msra.mxu0 0.0
    %1865 = vmatpush.msra.mxu0 0.0
    %1866 = vmatpush.msra.mxu0 0.0
    %1867 = vmatpush.msra.mxu0 0.0
    %1868 = vmatpush.msra.mxu0 0.0
    %1869 = vmatpush.msra.mxu0 0.0
    %1870 = vmatpush.msra.mxu0 0.0
    %1871 = vmatpush.msra.mxu0 0.0
    %1872 = vmatpush.msra.mxu0 %v295
    %1873 = vmatpush.msra.mxu0 %v294
    %1874 = vmatpush.msra.mxu0 %v293
    %1875 = vmatpush.msra.mxu0 %v292
    %1876 = vmatmul.f32.gmra.mxu0 %v1858
    %v1877 = vpop.f32.mrf.mxu0
    %v1878 = vadd.f32 %v1853, %v1877
    %1879 = vdwg.mxu0
    %v1880 = vadd.f32 %v1878, %v231
    %v1881 = vmul.f32 %v1880, 0.5
    %v1882 = vtanh.pop %v1881
    %v1883 = vmul.f32 %v1882, 0.5
    %v1884 = vadd.f32 %v1883, 0.5
    %v1885 = vtanh.pop %v1880
    %v1886 = vmul.f32 %v1884, %v1642
    %1888 = vrot.lane.b32.xlu0 %v1885, 64
    %v1889 = vpop.permute.xlu0 %1888
    %v1891 = vmul.f32 %v1884, %v1889
    %1893 = vrot.lane.b32.xlu0 %v1891, 32
    %v1894 = vpop.permute.xlu0 %1893
    %v1896 = vadd.f32 %v1886, %v1894
    %v1897 = vtanh.pop %v1896
    %1899 = vrot.lane.b32.xlu0 %v1897, 64
    %v1900 = vpop.permute.xlu0 %1899
    %v1902 = vmul.f32 %v1884, %v1900
    %1903 = vmatpush.msra.mxu0 0.0
    %1904 = vmatpush.msra.mxu0 0.0
    %1905 = vmatpush.msra.mxu0 0.0
    %1906 = vmatpush.msra.mxu0 0.0
    %1907 = vmatpush.msra.mxu0 0.0
    %1908 = vmatpush.msra.mxu0 0.0
    %1909 = vmatpush.msra.mxu0 0.0
    %1910 = vmatpush.msra.mxu0 0.0
    %1911 = vmatpush.msra.mxu0 0.0
    %1912 = vmatpush.msra.mxu0 0.0
    %1913 = vmatpush.msra.mxu0 0.0
    %1914 = vmatpush.msra.mxu0 0.0
    %1915 = vmatpush.msra.mxu0 %v375
    %1916 = vmatpush.msra.mxu0 %v374
    %1917 = vmatpush.msra.mxu0 %v373
    %1918 = vmatpush.msra.mxu0 %v372
    %1919 = vmatmul.f32.gmra.mxu0 %v1746
    %v1920 = vpop.f32.mrf.mxu0
    %v1921 = vadd.f32 0.0, %v1920
    %1922 = vdwg.mxu0
    %1924 = vrot.lane.b32.xlu0 %v1902, 32
    %v1925 = vpop.permute.xlu0 %1924
    %v1926 = vsel %vm245, %v1925, 0
    %1928 = vmatpush.msra.mxu0 0.0
    %1929 = vmatpush.msra.mxu0 0.0
    %1930 = vmatpush.msra.mxu0 0.0
    %1931 = vmatpush.msra.mxu0 0.0
    %1932 = vmatpush.msra.mxu0 0.0
    %1933 = vmatpush.msra.mxu0 0.0
    %1934 = vmatpush.msra.mxu0 0.0
    %1935 = vmatpush.msra.mxu0 0.0
    %1936 = vmatpush.msra.mxu0 0.0
    %1937 = vmatpush.msra.mxu0 0.0
    %1938 = vmatpush.msra.mxu0 0.0
    %1939 = vmatpush.msra.mxu0 0.0
    %1940 = vmatpush.msra.mxu0 %v371
    %1941 = vmatpush.msra.mxu0 %v370
    %1942 = vmatpush.msra.mxu0 %v369
    %1943 = vmatpush.msra.mxu0 %v368
    %1944 = vmatmul.f32.gmra.mxu0 %v1926
    %v1945 = vpop.f32.mrf.mxu0
    %v1946 = vadd.f32 %v1921, %v1945
    %1947 = vdwg.mxu0
    %v1948 = vadd.f32 %v1946, %v235
    %v1949 = vmul.f32 %v1948, 0.5
    %v1950 = vtanh.pop %v1949
    %v1951 = vmul.f32 %v1950, 0.5
    %v1952 = vadd.f32 %v1951, 0.5
    %1954 = vrot.lane.b32.xlu0 %v1948, 32
    %v1955 = vpop.permute.xlu0 %1954
    %v1957 = vmul.f32 %v1952, %v1955
    %1959 = vrot.lane.b32.xlu0 %v1957, 64
    %v1960 = vpop.permute.xlu0 %1959
    %v1962 = vadd.f32 %v1948, %v1960
    %v1963 = vtanh.pop %v1962
    %v1964 = vsub.f32 1.0, %v1952
    %1966 = vrot.lane.b32.xlu0 %v1963, 96
    %v1967 = vpop.permute.xlu0 %1966
    %v1969 = vmul.f32 %v1964, %v1967
    %v1970 = vmul.f32 %v1952, %v1717
    %v1971 = vadd.f32 %v1969, %v1970
    %1973 = vrot.lane.b32.xlu0 %v1791, 96
    %v1974 = vpop.permute.xlu0 %1973
    %v1975 = vsel %vm245, %v1974, 0
    %1977 = vmatpush.msra.mxu0 0.0
    %1978 = vmatpush.msra.mxu0 0.0
    %1979 = vmatpush.msra.mxu0 0.0
    %1980 = vmatpush.msra.mxu0 0.0
    %1981 = vmatpush.msra.mxu0 0.0
    %1982 = vmatpush.msra.mxu0 0.0
    %1983 = vmatpush.msra.mxu0 0.0
    %1984 = vmatpush.msra.mxu0 0.0
    %1985 = vmatpush.msra.mxu0 0.0
    %1986 = vmatpush.msra.mxu0 0.0
    %1987 = vmatpush.msra.mxu0 0.0
    %1988 = vmatpush.msra.mxu0 0.0
    %1989 = vmatpush.msra.mxu0 %v452
    %1990 = vmatpush.msra.mxu0 %v451
    %1991 = vmatpush.msra.mxu0 %v450
    %1992 = vmatpush.msra.mxu0 %v449
    %1993 = vmatmul.f32.gmra.mxu0 %v1975
    %v1994 = vpop.f32.mrf.mxu0
    %v1995 = vadd.f32 0.0, %v1994
    %1996 = vdwg.mxu0
    %1998 = vrot.lane.b32.xlu0 %v1971, 96
    %v1999 = vpop.permute.xlu0 %1998
    %v2000 = vsel %vm245, %v1999, 0
    %2002 = vmatpush.msra.mxu0 0.0
    %2003 = vmatpush.msra.mxu0 0.0
    %2004 = vmatpush.msra.mxu0 0.0
    %2005 = vmatpush.msra.mxu0 0.0
    %2006 = vmatpush.msra.mxu0 0.0
    %2007 = vmatpush.msra.mxu0 0.0
    %2008 = vmatpush.msra.mxu0 0.0
    %2009 = vmatpush.msra.mxu0 0.0
    %2010 = vmatpush.msra.mxu0 0.0
    %2011 = vmatpush.msra.mxu0 0.0
    %2012 = vmatpush.msra.mxu0 0.0
    %2013 = vmatpush.msra.mxu0 0.0
    %2014 = vmatpush.msra.mxu0 %v448
    %2015 = vmatpush.msra.mxu0 %v447
    %2016 = vmatpush.msra.mxu0 %v446
    %2017 = vmatpush.msra.mxu0 %v445
    %2018 = vmatmul.f32.gmra.mxu0 %v2000
    %v2019 = vpop.f32.mrf.mxu0
    %v2020 = vadd.f32 %v1995, %v2019
    %2021 = vdwg.mxu0
    %v2022 = vadd.f32 %v2020, %v239
    %v2023 = vmul.f32 %v2022, 0.5
    %v2024 = vtanh.pop %v2023
    %v2025 = vmul.f32 %v2024, 0.5
    %v2026 = vadd.f32 %v2025, 0.5
    %2028 = vrot.lane.b32.xlu0 %v2022, 32
    %v2029 = vpop.permute.xlu0 %2028
    %v2031 = vmul.f32 %v2026, %v2029
    %2033 = vrot.lane.b32.xlu0 %v2031, 64
    %v2034 = vpop.permute.xlu0 %2033
    %v2036 = vadd.f32 %v2022, %v2034
    %v2037 = vtanh.pop %v2036
    %v2038 = vsub.f32 1.0, %v2026
    %2040 = vrot.lane.b32.xlu0 %v2037, 96
    %v2041 = vpop.permute.xlu0 %2040
    %v2043 = vmul.f32 %v2038, %v2041
    %v2044 = vmul.f32 %v2026, %v1791
    %v2045 = vadd.f32 %v2043, %v2044
    %2046 = vmatpush.msra.mxu0 0.0
    %2047 = vmatpush.msra.mxu0 0.0
    %2048 = vmatpush.msra.mxu0 0.0
    %2049 = vmatpush.msra.mxu0 0.0
    %2050 = vmatpush.msra.mxu0 0.0
    %2051 = vmatpush.msra.mxu0 0.0
    %2052 = vmatpush.msra.mxu0 0.0
    %2053 = vmatpush.msra.mxu0 0.0
    %2054 = vmatpush.msra.mxu0 0.0
    %2055 = vmatpush.msra.mxu0 0.0
    %2056 = vmatpush.msra.mxu0 0.0
    %2057 = vmatpush.msra.mxu0 0.0
    %2058 = vmatpush.msra.mxu0 %v244
    %2059 = vmatpush.msra.mxu0 %v243
    %2060 = vmatpush.msra.mxu0 %v242
    %2061 = vmatpush.msra.mxu0 %v241
    %2062 = vmatmul.f32.gmra.mxu0 %v1858
    %v2063 = vpop.f32.mrf.mxu0
    %v2064 = vadd.f32 0.0, %v2063
    %2065 = vdwg.mxu0
    %v2066 = vadd.f32 %v227, %v2064
    %v2067 = vmul.f32 %v2066, 0.5
    %v2068 = vtanh.pop %v2067
    %v2069 = vmul.f32 %v2068, 0.5
    %v2070 = vadd.f32 %v2069, 0.5
    %v2071 = vtanh.pop %v2066
    %v2072 = vmul.f32 %v2070, %v1828
    %2074 = vrot.lane.b32.xlu0 %v2071, 64
    %v2075 = vpop.permute.xlu0 %2074
    %v2077 = vmul.f32 %v2070, %v2075
    %2079 = vrot.lane.b32.xlu0 %v2077, 32
    %v2080 = vpop.permute.xlu0 %2079
    %v2082 = vadd.f32 %v2072, %v2080
    %v2083 = vtanh.pop %v2082
    %2085 = vrot.lane.b32.xlu0 %v2083, 64
    %v2086 = vpop.permute.xlu0 %2085
    %v2088 = vmul.f32 %v2070, %v2086
    %2089 = vmatpush.msra.mxu0 0.0
    %2090 = vmatpush.msra.mxu0 0.0
    %2091 = vmatpush.msra.mxu0 0.0
    %2092 = vmatpush.msra.mxu0 0.0
    %2093 = vmatpush.msra.mxu0 0.0
    %2094 = vmatpush.msra.mxu0 0.0
    %2095 = vmatpush.msra.mxu0 0.0
    %2096 = vmatpush.msra.mxu0 0.0
    %2097 = vmatpush.msra.mxu0 0.0
    %2098 = vmatpush.msra.mxu0 0.0
    %2099 = vmatpush.msra.mxu0 0.0
    %2100 = vmatpush.msra.mxu0 0.0
    %2101 = vmatpush.msra.mxu0 %v299
    %2102 = vmatpush.msra.mxu0 %v298
    %2103 = vmatpush.msra.mxu0 %v297
    %2104 = vmatpush.msra.mxu0 %v296
    %2105 = vmatmul.f32.gmra.mxu0 %v1926
    %v2106 = vpop.f32.mrf.mxu0
    %v2107 = vadd.f32 0.0, %v2106
    %2108 = vdwg.mxu0
    %2110 = vrot.lane.b32.xlu0 %v2088, 32
    %v2111 = vpop.permute.xlu0 %2110
    %v2112 = vsel %vm245, %v2111, 0
    %2114 = vmatpush.msra.mxu0 0.0
    %2115 = vmatpush.msra.mxu0 0.0
    %2116 = vmatpush.msra.mxu0 0.0
    %2117 = vmatpush.msra.mxu0 0.0
    %2118 = vmatpush.msra.mxu0 0.0
    %2119 = vmatpush.msra.mxu0 0.0
    %2120 = vmatpush.msra.mxu0 0.0
    %2121 = vmatpush.msra.mxu0 0.0
    %2122 = vmatpush.msra.mxu0 0.0
    %2123 = vmatpush.msra.mxu0 0.0
    %2124 = vmatpush.msra.mxu0 0.0
    %2125 = vmatpush.msra.mxu0 0.0
    %2126 = vmatpush.msra.mxu0 %v295
    %2127 = vmatpush.msra.mxu0 %v294
    %2128 = vmatpush.msra.mxu0 %v293
    %2129 = vmatpush.msra.mxu0 %v292
    %2130 = vmatmul.f32.gmra.mxu0 %v2112
    %v2131 = vpop.f32.mrf.mxu0
    %v2132 = vadd.f32 %v2107, %v2131
    %2133 = vdwg.mxu0
    %v2134 = vadd.f32 %v2132, %v231
    %v2135 = vmul.f32 %v2134, 0.5
    %v2136 = vtanh.pop %v2135
    %v2137 = vmul.f32 %v2136, 0.5
    %v2138 = vadd.f32 %v2137, 0.5
    %v2139 = vtanh.pop %v2134
    %v2140 = vmul.f32 %v2138, %v1896
    %2142 = vrot.lane.b32.xlu0 %v2139, 64
    %v2143 = vpop.permute.xlu0 %2142
    %v2145 = vmul.f32 %v2138, %v2143
    %2147 = vrot.lane.b32.xlu0 %v2145, 32
    %v2148 = vpop.permute.xlu0 %2147
    %v2150 = vadd.f32 %v2140, %v2148
    %v2151 = vtanh.pop %v2150
    %2153 = vrot.lane.b32.xlu0 %v2151, 64
    %v2154 = vpop.permute.xlu0 %2153
    %v2156 = vmul.f32 %v2138, %v2154
    %2157 = vmatpush.msra.mxu0 0.0
    %2158 = vmatpush.msra.mxu0 0.0
    %2159 = vmatpush.msra.mxu0 0.0
    %2160 = vmatpush.msra.mxu0 0.0
    %2161 = vmatpush.msra.mxu0 0.0
    %2162 = vmatpush.msra.mxu0 0.0
    %2163 = vmatpush.msra.mxu0 0.0
    %2164 = vmatpush.msra.mxu0 0.0
    %2165 = vmatpush.msra.mxu0 0.0
    %2166 = vmatpush.msra.mxu0 0.0
    %2167 = vmatpush.msra.mxu0 0.0
    %2168 = vmatpush.msra.mxu0 0.0
    %2169 = vmatpush.msra.mxu0 %v375
    %2170 = vmatpush.msra.mxu0 %v374
    %2171 = vmatpush.msra.mxu0 %v373
    %2172 = vmatpush.msra.mxu0 %v372
    %2173 = vmatmul.f32.gmra.mxu0 %v2000
    %v2174 = vpop.f32.mrf.mxu0
    %v2175 = vadd.f32 0.0, %v2174
    %2176 = vdwg.mxu0
    %2178 = vrot.lane.b32.xlu0 %v2156, 32
    %v2179 = vpop.permute.xlu0 %2178
    %v2180 = vsel %vm245, %v2179, 0
    %2182 = vmatpush.msra.mxu0 0.0
    %2183 = vmatpush.msra.mxu0 0.0
    %2184 = vmatpush.msra.mxu0 0.0
    %2185 = vmatpush.msra.mxu0 0.0
    %2186 = vmatpush.msra.mxu0 0.0
    %2187 = vmatpush.msra.mxu0 0.0
    %2188 = vmatpush.msra.mxu0 0.0
    %2189 = vmatpush.msra.mxu0 0.0
    %2190 = vmatpush.msra.mxu0 0.0
    %2191 = vmatpush.msra.mxu0 0.0
    %2192 = vmatpush.msra.mxu0 0.0
    %2193 = vmatpush.msra.mxu0 0.0
    %2194 = vmatpush.msra.mxu0 %v371
    %2195 = vmatpush.msra.mxu0 %v370
    %2196 = vmatpush.msra.mxu0 %v369
    %2197 = vmatpush.msra.mxu0 %v368
    %2198 = vmatmul.f32.gmra.mxu0 %v2180
    %v2199 = vpop.f32.mrf.mxu0
    %v2200 = vadd.f32 %v2175, %v2199
    %2201 = vdwg.mxu0
    %v2202 = vadd.f32 %v2200, %v235
    %v2203 = vmul.f32 %v2202, 0.5
    %v2204 = vtanh.pop %v2203
    %v2205 = vmul.f32 %v2204, 0.5
    %v2206 = vadd.f32 %v2205, 0.5
    %2208 = vrot.lane.b32.xlu0 %v2202, 32
    %v2209 = vpop.permute.xlu0 %2208
    %v2211 = vmul.f32 %v2206, %v2209
    %2213 = vrot.lane.b32.xlu0 %v2211, 64
    %v2214 = vpop.permute.xlu0 %2213
    %v2216 = vadd.f32 %v2202, %v2214
    %v2217 = vtanh.pop %v2216
    %v2218 = vsub.f32 1.0, %v2206
    %2220 = vrot.lane.b32.xlu0 %v2217, 96
    %v2221 = vpop.permute.xlu0 %2220
    %v2223 = vmul.f32 %v2218, %v2221
    %v2224 = vmul.f32 %v2206, %v1971
    %v2225 = vadd.f32 %v2223, %v2224
    %2227 = vrot.lane.b32.xlu0 %v2045, 96
    %v2228 = vpop.permute.xlu0 %2227
    %v2229 = vsel %vm245, %v2228, 0
    %2231 = vmatpush.msra.mxu0 0.0
    %2232 = vmatpush.msra.mxu0 0.0
    %2233 = vmatpush.msra.mxu0 0.0
    %2234 = vmatpush.msra.mxu0 0.0
    %2235 = vmatpush.msra.mxu0 0.0
    %2236 = vmatpush.msra.mxu0 0.0
    %2237 = vmatpush.msra.mxu0 0.0
    %2238 = vmatpush.msra.mxu0 0.0
    %2239 = vmatpush.msra.mxu0 0.0
    %2240 = vmatpush.msra.mxu0 0.0
    %2241 = vmatpush.msra.mxu0 0.0
    %2242 = vmatpush.msra.mxu0 0.0
    %2243 = vmatpush.msra.mxu0 %v452
    %2244 = vmatpush.msra.mxu0 %v451
    %2245 = vmatpush.msra.mxu0 %v450
    %2246 = vmatpush.msra.mxu0 %v449
    %2247 = vmatmul.f32.gmra.mxu0 %v2229
    %v2248 = vpop.f32.mrf.mxu0
    %v2249 = vadd.f32 0.0, %v2248
    %2250 = vdwg.mxu0
    %2252 = vrot.lane.b32.xlu0 %v2225, 96
    %v2253 = vpop.permute.xlu0 %2252
    %v2254 = vsel %vm245, %v2253, 0
    %2256 = vmatpush.msra.mxu0 0.0
    %2257 = vmatpush.msra.mxu0 0.0
    %2258 = vmatpush.msra.mxu0 0.0
    %2259 = vmatpush.msra.mxu0 0.0
    %2260 = vmatpush.msra.mxu0 0.0
    %2261 = vmatpush.msra.mxu0 0.0
    %2262 = vmatpush.msra.mxu0 0.0
    %2263 = vmatpush.msra.mxu0 0.0
    %2264 = vmatpush.msra.mxu0 0.0
    %2265 = vmatpush.msra.mxu0 0.0
    %2266 = vmatpush.msra.mxu0 0.0
    %2267 = vmatpush.msra.mxu0 0.0
    %2268 = vmatpush.msra.mxu0 %v448
    %2269 = vmatpush.msra.mxu0 %v447
    %2270 = vmatpush.msra.mxu0 %v446
    %2271 = vmatpush.msra.mxu0 %v445
    %2272 = vmatmul.f32.gmra.mxu0 %v2254
    %v2273 = vpop.f32.mrf.mxu0
    %v2274 = vadd.f32 %v2249, %v2273
    %2275 = vdwg.mxu0
    %v2276 = vadd.f32 %v2274, %v239
    %v2277 = vmul.f32 %v2276, 0.5
    %v2278 = vtanh.pop %v2277
    %v2279 = vmul.f32 %v2278, 0.5
    %v2280 = vadd.f32 %v2279, 0.5
    %2282 = vrot.lane.b32.xlu0 %v2276, 32
    %v2283 = vpop.permute.xlu0 %2282
    %v2285 = vmul.f32 %v2280, %v2283
    %2287 = vrot.lane.b32.xlu0 %v2285, 64
    %v2288 = vpop.permute.xlu0 %2287
    %v2290 = vadd.f32 %v2276, %v2288
    %v2291 = vtanh.pop %v2290
    %v2292 = vsub.f32 1.0, %v2280
    %2294 = vrot.lane.b32.xlu0 %v2291, 96
    %v2295 = vpop.permute.xlu0 %2294
    %v2297 = vmul.f32 %v2292, %v2295
    %v2298 = vmul.f32 %v2280, %v2045
    %v2299 = vadd.f32 %v2297, %v2298
    %v2300 = vld [vmem:[%s13] sm:$0xff]
    %v2301 = vld [vmem:[%s13 + $0x8] sm:$0xff]
    %v2302 = vld [vmem:[%s13 + $0x10] sm:$0xff]
    %v2303 = vld [vmem:[%s13 + $0x18] sm:$0xff]
    %v2304 = vld [vmem:[%s14] sm:$0x1]
    %v2306 = vperm.slane %v2304, 0
    %2309 = vrot.lane.b32.xlu0 %v2299, 96
    %v2310 = vpop.permute.xlu0 %2309
    %v2311 = vsel %vm245, %v2310, 0
    %2313 = vmatpush.msra.mxu0 0.0
    %2314 = vmatpush.msra.mxu0 0.0
    %2315 = vmatpush.msra.mxu0 0.0
    %2316 = vmatpush.msra.mxu0 0.0
    %2317 = vmatpush.msra.mxu0 0.0
    %2318 = vmatpush.msra.mxu0 0.0
    %2319 = vmatpush.msra.mxu0 0.0
    %2320 = vmatpush.msra.mxu0 0.0
    %2321 = vmatpush.msra.mxu0 0.0
    %2322 = vmatpush.msra.mxu0 0.0
    %2323 = vmatpush.msra.mxu0 0.0
    %2324 = vmatpush.msra.mxu0 0.0
    %2325 = vmatpush.msra.mxu0 %v2303
    %2326 = vmatpush.msra.mxu0 %v2302
    %2327 = vmatpush.msra.mxu0 %v2301
    %2328 = vmatpush.msra.mxu0 %v2300
    %2329 = vmatmul.f32.gmra.mxu0 %v2311
    %v2330 = vpop.f32.mrf.mxu0
    %v2331 = vadd.f32 %v2306, %v2330
    %2332 = vdwg.mxu0
    %v2333 = vmax.f32 %v2331, 0.0
    %v2334 = vld [vmem:[#allocation10] sm:$0xff]
    %v2335 = vld [vmem:[#allocation10 + $0x8] sm:$0xff]
    %v2336 = vld [vmem:[#allocation10 + $0x10] sm:$0xff]
    %v2337 = vld [vmem:[#allocation10 + $0x18] sm:$0xff]
    %v2338 = vld [vmem:[#allocation10 + $0x20] sm:$0xff]
    %v2339 = vld [vmem:[#allocation10 + $0x28] sm:$0xff]
    %v2340 = vld [vmem:[#allocation10 + $0x30] sm:$0xff]
    %v2341 = vld [vmem:[#allocation10 + $0x38] sm:$0xff]
    %v2342 = vld [vmem:[#allocation10 + $0x40] sm:$0xff]
    %v2343 = vld [vmem:[#allocation10 + $0x48] sm:$0xff]
    %v2344 = vld [vmem:[#allocation10 + $0x50] sm:$0xff]
    %v2345 = vld [vmem:[#allocation10 + $0x58] sm:$0xff]
    %v2346 = vld [vmem:[#allocation10 + $0x60] sm:$0xff]
    %v2347 = vld [vmem:[#allocation10 + $0x68] sm:$0xff]
    %v2348 = vld [vmem:[#allocation10 + $0x70] sm:$0xff]
    %v2349 = vld [vmem:[#allocation10 + $0x78] sm:$0xff]
    %v2350 = vld [vmem:[%s16] sm:$0x1]
    %v2352 = vperm.slane %v2350, 0
    %2354 = vmatpush.msra.mxu0 %v2349
    %2355 = vmatpush.msra.mxu0 %v2348
    %2356 = vmatpush.msra.mxu0 %v2347
    %2357 = vmatpush.msra.mxu0 %v2346
    %2358 = vmatpush.msra.mxu0 %v2345
    %2359 = vmatpush.msra.mxu0 %v2344
    %2360 = vmatpush.msra.mxu0 %v2343
    %2361 = vmatpush.msra.mxu0 %v2342
    %2362 = vmatpush.msra.mxu0 %v2341
    %2363 = vmatpush.msra.mxu0 %v2340
    %2364 = vmatpush.msra.mxu0 %v2339
    %2365 = vmatpush.msra.mxu0 %v2338
    %2366 = vmatpush.msra.mxu0 %v2337
    %2367 = vmatpush.msra.mxu0 %v2336
    %2368 = vmatpush.msra.mxu0 %v2335
    %2369 = vmatpush.msra.mxu0 %v2334
    %2370 = vmatmul.f32.gmra.mxu0 %v2333
    %v2371 = vpop.f32.mrf.mxu0
    %v2372 = vadd.f32 %v2352, %v2371
    %2373 = vdwg.mxu0
    %2374 = vst [vmem:[%s17] sm:$0xff] %v2372
    // Predicated region
    $region94: #{_lambda_.1} parent=1 // pred_check
      _
    $region95: #{_lambda_.1} parent=1 // pred_check_branch
      %2376 = sbr.rel (0) target = $region97
    $region96: #{_lambda_.1} parent=1 // pred_region
      _
    $region97: #{_lambda_.1} parent=1 // pred_fallthru
      _
    // Predicated region
    $region98: #{_lambda_.1} parent=1 // pred_check
      _
    $region99: #{_lambda_.1} parent=1 // pred_check_branch
      %2378 = sbr.rel (0) target = $region101
    $region100: #{_lambda_.1} parent=1 // pred_region
      _
    $region101: #{_lambda_.1} parent=1 // pred_fallthru
      _
    %2379 = vsyncpa [#allocation3], 1
    %2380 = vsyncpa [#allocation5], 1
    %2381 = vsyncpa [#allocation8], 1
    %2382 = vsyncpa [#allocation11], 1

</llo_original>
